<compile_context>
chip_gen: v6e
topology: v6e:2x2x1
jax: 0.10.0
libtpu: 0.0.40
codegen_flags: <defaults>
</compile_context>

<pallas_src>
import functools
import math

import jax
import jax.numpy as jnp
from jax.experimental import pallas as pl
from jax.experimental.pallas import tpu as pltpu

Z_DIM = 32
HIDDEN_DIMS = [128, 256, 512, 1024]
OUTPUT_SHAPE = (1, 28, 28)
LEAKY_SLOPE = 0.2
LANE = 128
TILE_B_MAX = 512          # batch-tile ceiling; per-tile VMEM stays well under all limits
_STEP_OVERHEAD_ROWS = 64  # ~0.35us per grid step expressed in "rows of work" equivalents

# TODO(synk): dropout (p=0.1) is implemented as identity (inference / eval-mode semantics).


def _device_kind():
    try:
        return jax.devices()[0].device_kind.lower()
    except Exception:
        return ""


_KIND = _device_kind()
_IS_V7 = "v7" in _KIND
# v5e has no bf16 VALU -> keep the elementwise chain in f32 there; v6e/v7x use bf16.
HIDDEN_DTYPE = jnp.bfloat16 if ("v6" in _KIND or _IS_V7) else jnp.float32
# v7x: 64 MiB physical VMEM (leave headroom); v5e/v6e: 128 MiB physical.
VMEM_LIMIT_BYTES = (48 if (_IS_V7 or not _KIND) else 96) * 1024 * 1024


def _round_up(x, m):
    return ((x + m - 1) // m) * m


def _choose_tile_b(B):
    """Pick batch tile minimizing padded rows + per-grid-step overhead.

    Prefers >= 2 grid steps when B >= 16 so the "parallel" grid axis can shard across
    both TensorCores on v7x (costs at most one extra cheap step on single-TC chips).
    """
    candidates = [c for c in (8, 16, 32, 64, 128, 256, 512) if c <= TILE_B_MAX]
    min_tiles = 2 if B >= 16 else 1
    best = None
    for tile in candidates:
        n_tiles = max(-(-B // tile), min_tiles)
        b_pad = n_tiles * tile
        cost = b_pad + n_tiles * _STEP_OVERHEAD_ROWS
        if best is None or cost < best[1]:
            best = (tile, cost, b_pad)
    return best[0], best[2]


def generator_mlp_kernel(z_ref,
                         w0_ref, b0_ref,
                         w1_ref, b1_ref,
                         w2_ref, b2_ref,
                         w3_ref, b3_ref,
                         wf_ref, bf_ref,
                         out_ref, *, hidden_dtype):
    """Fused MLP forward: 4 x (Linear + LeakyReLU [+ Dropout=id]) + Linear + Tanh.

    Weights arrive as bf16 VMEM tiles (resident across batch-grid steps). MXU inputs are
    bf16 with f32 accumulation; the hidden elementwise chain runs in `hidden_dtype`
    (bf16 on v6e/v7x, f32 on v5e); the final bias-add + tanh stays f32, stored as bf16.
    """
    x = z_ref[...]  # bf16, pre-cast in the wrapper

    hidden = ((w0_ref, b0_ref), (w1_ref, b1_ref), (w2_ref, b2_ref), (w3_ref, b3_ref))
    for w_ref, b_ref in hidden:  # static Python loop -> unrolled at trace time
        y = jnp.dot(x, w_ref[...], preferred_element_type=jnp.float32)
        y = y.astype(hidden_dtype) + b_ref[...]
        y = jnp.where(y > 0, y, LEAKY_SLOPE * y)  # LeakyReLU(0.2); dropout = identity
        x = y.astype(jnp.bfloat16)

    y = jnp.dot(x, wf_ref[...], preferred_element_type=jnp.float32) + bf_ref[...]  # f32
    out_ref[...] = jnp.tanh(y).astype(out_ref.dtype)


def init_params(key, z_dim=Z_DIM, hidden_dims=HIDDEN_DIMS, output_shape=OUTPUT_SHAPE,
                dtype=jnp.float32):
    """Deterministic PyTorch-nn.Linear-style init: U(-1/sqrt(fan_in), 1/sqrt(fan_in))."""
    dims = [z_dim] + list(hidden_dims) + [output_shape[1] * output_shape[2]]
    params = []
    for fan_in, fan_out in zip(dims[:-1], dims[1:]):
        key, kw, kb = jax.random.split(key, 3)
        bound = 1.0 / math.sqrt(fan_in)
        w = jax.random.uniform(kw, (fan_in, fan_out), dtype=dtype, minval=-bound, maxval=bound)
        b = jax.random.uniform(kb, (1, fan_out), dtype=dtype, minval=-bound, maxval=bound)
        params.append((w, b))
    return params


def prepare_params(params, hidden_dtype=HIDDEN_DTYPE):
    """One-time packing: weights -> bf16; hidden biases -> hidden_dtype; final bias f32;
    final layer lane-padded 784 -> 896 for dense output stores."""
    prepared = []
    n = len(params)
    for i, (w, b) in enumerate(params):
        w = w.astype(jnp.bfloat16)
        if i == n - 1:
            b = b.astype(jnp.float32)
            out_dim = w.shape[1]
            out_pad = _round_up(out_dim, LANE)
            if out_pad != out_dim:
                w = jnp.pad(w, ((0, 0), (0, out_pad - out_dim)))
                b = jnp.pad(b, ((0, 0), (0, out_pad - out_dim)))
        else:
            b = b.astype(hidden_dtype)
        prepared.append((w, b))
    return prepared


@functools.partial(jax.jit, static_argnames=("output_shape",))
def generator_mlp_forward(z, prepared_params, output_shape=OUTPUT_SHAPE):
    """z: [B, z_dim] -> image [B, C, H, W] (NCHW, matching the PyTorch module)."""
    B, z_dim = z.shape
    out_dim = output_shape[1] * output_shape[2]
    out_dim_pad = prepared_params[-1][0].shape[1]

    tile_b, B_pad = _choose_tile_b(B)
    z_p = z.astype(jnp.bfloat16)
    if B_pad != B:
        z_p = jnp.pad(z_p, ((0, B_pad - B), (0, 0)))

    flat_inputs = [z_p]
    in_specs = [pl.BlockSpec((tile_b, z_dim), lambda i: (i, 0))]
    for w, b in prepared_params:
        flat_inputs.extend([w, b])
        # Constant block index -> weights/biases DMA'd once, VMEM-resident across tiles.
        in_specs.append(pl.BlockSpec(w.shape, lambda i: (0, 0)))
        in_specs.append(pl.BlockSpec(b.shape, lambda i: (0, 0)))

    dims = [z_dim] + [w.shape[1] for w, _ in prepared_params]
    flops = 2 * B_pad * sum(a * b for a, b in zip(dims[:-1], dims[1:]))
    bytes_accessed = (
        z_p.size * z_p.dtype.itemsize
        + sum(w.size * w.dtype.itemsize + b.size * b.dtype.itemsize
              for w, b in prepared_params)
        + B_pad * out_dim_pad * 2  # bf16 output
    )

    out_flat = pl.pallas_call(
        functools.partial(generator_mlp_kernel, hidden_dtype=HIDDEN_DTYPE),
        out_shape=jax.ShapeDtypeStruct((B_pad, out_dim_pad), jnp.bfloat16),
        grid=(B_pad // tile_b,),
        in_specs=in_specs,
        out_specs=pl.BlockSpec((tile_b, out_dim_pad), lambda i: (i, 0)),
        compiler_params=pltpu.CompilerParams(
            dimension_semantics=("parallel",),
            vmem_limit_bytes=VMEM_LIMIT_BYTES,
        ),
        cost_estimate=pl.CostEstimate(
            flops=flops,
            transcendentals=B_pad * out_dim_pad,
            bytes_accessed=bytes_accessed,
        ),
    )(*flat_inputs)

    return out_flat[:B, :out_dim].astype(jnp.float32).reshape(B, *output_shape)


def reference_forward(z, prepared_params, output_shape=OUTPUT_SHAPE,
                      hidden_dtype=HIDDEN_DTYPE):
    """Pure-JAX reference with matching numerics (bf16 MXU inputs, f32 accumulation,
    hidden_dtype elementwise chain, f32 tanh, bf16 output)."""
    out_dim = output_shape[1] * output_shape[2]
    n = len(prepared_params)
    x = z.astype(jnp.bfloat16)
    for i, (w, b) in enumerate(prepared_params):
        y = jnp.dot(x, w, preferred_element_type=jnp.float32)
        if i < n - 1:
            y = y.astype(hidden_dtype) + b
            y = jnp.where(y > 0, y, LEAKY_SLOPE * y)
            x = y.astype(jnp.bfloat16)
        else:
            x = jnp.tanh(y + b).astype(jnp.bfloat16)
    return x[:, :out_dim].astype(jnp.float32).reshape(z.shape[0], *output_shape)


if __name__ == "__main__":
    key = jax.random.PRNGKey(0)
    key_params, key_z = jax.random.split(key)

    B = 8
    params_f32 = init_params(key_params)
    params = prepare_params(params_f32)
    z = jax.random.normal(key_z, (B, Z_DIM), dtype=jnp.float32)

    out = generator_mlp_forward(z, params)
    out = jax.block_until_ready(out)

    assert out.shape == (B, *OUTPUT_SHAPE), out.shape

    ref = reference_forward(z, params)
    err = float(jnp.max(jnp.abs(out - ref)))
    # bf16 output: 1 ulp near |x|=1 is ~7.8e-3, so allow 2e-2.
    assert err < 2e-2, f"max abs err {err}"

    print("KERNEL_OK")
</pallas_src>

<mosaic_0001>
module attributes {stable_mosaic.version = 11 : i64} {
  func.func @generator_mlp_kernel(%arg0: i32, %arg1: memref<8x32xbf16, #tpu.memory_space<vmem>>, %arg2: memref<32x128xbf16, #tpu.memory_space<vmem>>, %arg3: memref<1x128xf32, #tpu.memory_space<vmem>>, %arg4: memref<128x256xbf16, #tpu.memory_space<vmem>>, %arg5: memref<1x256xf32, #tpu.memory_space<vmem>>, %arg6: memref<256x512xbf16, #tpu.memory_space<vmem>>, %arg7: memref<1x512xf32, #tpu.memory_space<vmem>>, %arg8: memref<512x1024xbf16, #tpu.memory_space<vmem>>, %arg9: memref<1x1024xf32, #tpu.memory_space<vmem>>, %arg10: memref<1024x896xbf16, #tpu.memory_space<vmem>>, %arg11: memref<1x896xf32, #tpu.memory_space<vmem>>, %arg12: memref<8x896xbf16, #tpu.memory_space<vmem>>) attributes {dimension_semantics = [#tpu.dimension_semantics<parallel>], iteration_bounds = array<i64: 1>, scalar_prefetch = 0 : i64, scratch_operands = 0 : i64, tpu.core_type = #tpu.core_type<tc>, window_params = [{transform_indices = @transform_0, window_bounds = array<i64: 8, 32>}, {pipeline_mode = #tpu.pipeline_mode<synchronous>, transform_indices = @transform_1, window_bounds = array<i64: 32, 128>}, {pipeline_mode = #tpu.pipeline_mode<synchronous>, transform_indices = @transform_2, window_bounds = array<i64: 1, 128>}, {pipeline_mode = #tpu.pipeline_mode<synchronous>, transform_indices = @transform_3, window_bounds = array<i64: 128, 256>}, {pipeline_mode = #tpu.pipeline_mode<synchronous>, transform_indices = @transform_4, window_bounds = array<i64: 1, 256>}, {pipeline_mode = #tpu.pipeline_mode<synchronous>, transform_indices = @transform_5, window_bounds = array<i64: 256, 512>}, {pipeline_mode = #tpu.pipeline_mode<synchronous>, transform_indices = @transform_6, window_bounds = array<i64: 1, 512>}, {pipeline_mode = #tpu.pipeline_mode<synchronous>, transform_indices = @transform_7, window_bounds = array<i64: 512, 1024>}, {pipeline_mode = #tpu.pipeline_mode<synchronous>, transform_indices = @transform_8, window_bounds = array<i64: 1, 1024>}, {pipeline_mode = #tpu.pipeline_mode<synchronous>, transform_indices = @transform_9, window_bounds = array<i64: 1024, 896>}, {pipeline_mode = #tpu.pipeline_mode<synchronous>, transform_indices = @transform_10, window_bounds = array<i64: 1, 896>}, {transform_indices = @transform_11, window_bounds = array<i64: 8, 896>}]} {
    %c0 = arith.constant 0 : index
    %c0_0 = arith.constant 0 : index
    %0 = vector.load %arg1[%c0, %c0_0] : memref<8x32xbf16, #tpu.memory_space<vmem>>, vector<8x32xbf16>
    %c0_1 = arith.constant 0 : index
    %c0_2 = arith.constant 0 : index
    %1 = vector.load %arg2[%c0_1, %c0_2] : memref<32x128xbf16, #tpu.memory_space<vmem>>, vector<32x128xbf16>
    %cst = arith.constant dense<0.000000e+00> : vector<8x128xf32>
    %2 = tpu.matmul %0, %1, %cst {dimension_numbers = #tpu.dot_dimension_numbers<[1], [0], [0], [1], [0, 0, 1, 1], [], []>} : vector<8x32xbf16>, vector<32x128xbf16>, vector<8x128xf32> -> vector<8x128xf32>
    %c0_3 = arith.constant 0 : index
    %c0_4 = arith.constant 0 : index
    %3 = vector.load %arg3[%c0_3, %c0_4] : memref<1x128xf32, #tpu.memory_space<vmem>>, vector<1x128xf32>
    %4 = vector.broadcast %3 : vector<1x128xf32> to vector<8x128xf32>
    %5 = arith.addf %2, %4 : vector<8x128xf32>
    %cst_5 = arith.constant 0.000000e+00 : f32
    %6 = vector.broadcast %cst_5 : f32 to vector<8x128xf32>
    %7 = arith.cmpf ogt, %5, %6 : vector<8x128xf32>
    %cst_6 = arith.constant 2.000000e-01 : f32
    %8 = vector.broadcast %cst_6 : f32 to vector<8x128xf32>
    %9 = arith.mulf %8, %5 : vector<8x128xf32>
    %10 = arith.select %7, %5, %9 : vector<8x128xi1>, vector<8x128xf32>
    %11 = arith.truncf %10 : vector<8x128xf32> to vector<8x128xbf16>
    %c0_7 = arith.constant 0 : index
    %c0_8 = arith.constant 0 : index
    %12 = vector.load %arg4[%c0_7, %c0_8] : memref<128x256xbf16, #tpu.memory_space<vmem>>, vector<128x256xbf16>
    %cst_9 = arith.constant dense<0.000000e+00> : vector<8x256xf32>
    %13 = tpu.matmul %11, %12, %cst_9 {dimension_numbers = #tpu.dot_dimension_numbers<[1], [0], [0], [1], [0, 0, 1, 1], [], []>} : vector<8x128xbf16>, vector<128x256xbf16>, vector<8x256xf32> -> vector<8x256xf32>
    %c0_10 = arith.constant 0 : index
    %c0_11 = arith.constant 0 : index
    %14 = vector.load %arg5[%c0_10, %c0_11] : memref<1x256xf32, #tpu.memory_space<vmem>>, vector<1x256xf32>
    %15 = vector.broadcast %14 : vector<1x256xf32> to vector<8x256xf32>
    %16 = arith.addf %13, %15 : vector<8x256xf32>
    %cst_12 = arith.constant 0.000000e+00 : f32
    %17 = vector.broadcast %cst_12 : f32 to vector<8x256xf32>
    %18 = arith.cmpf ogt, %16, %17 : vector<8x256xf32>
    %cst_13 = arith.constant 2.000000e-01 : f32
    %19 = vector.broadcast %cst_13 : f32 to vector<8x256xf32>
    %20 = arith.mulf %19, %16 : vector<8x256xf32>
    %21 = arith.select %18, %16, %20 : vector<8x256xi1>, vector<8x256xf32>
    %22 = arith.truncf %21 : vector<8x256xf32> to vector<8x256xbf16>
    %c0_14 = arith.constant 0 : index
    %c0_15 = arith.constant 0 : index
    %23 = vector.load %arg6[%c0_14, %c0_15] : memref<256x512xbf16, #tpu.memory_space<vmem>>, vector<256x512xbf16>
    %cst_16 = arith.constant dense<0.000000e+00> : vector<8x512xf32>
    %24 = tpu.matmul %22, %23, %cst_16 {dimension_numbers = #tpu.dot_dimension_numbers<[1], [0], [0], [1], [0, 0, 1, 1], [], []>} : vector<8x256xbf16>, vector<256x512xbf16>, vector<8x512xf32> -> vector<8x512xf32>
    %c0_17 = arith.constant 0 : index
    %c0_18 = arith.constant 0 : index
    %25 = vector.load %arg7[%c0_17, %c0_18] : memref<1x512xf32, #tpu.memory_space<vmem>>, vector<1x512xf32>
    %26 = vector.broadcast %25 : vector<1x512xf32> to vector<8x512xf32>
    %27 = arith.addf %24, %26 : vector<8x512xf32>
    %cst_19 = arith.constant 0.000000e+00 : f32
    %28 = vector.broadcast %cst_19 : f32 to vector<8x512xf32>
    %29 = arith.cmpf ogt, %27, %28 : vector<8x512xf32>
    %cst_20 = arith.constant 2.000000e-01 : f32
    %30 = vector.broadcast %cst_20 : f32 to vector<8x512xf32>
    %31 = arith.mulf %30, %27 : vector<8x512xf32>
    %32 = arith.select %29, %27, %31 : vector<8x512xi1>, vector<8x512xf32>
    %33 = arith.truncf %32 : vector<8x512xf32> to vector<8x512xbf16>
    %c0_21 = arith.constant 0 : index
    %c0_22 = arith.constant 0 : index
    %34 = vector.load %arg8[%c0_21, %c0_22] : memref<512x1024xbf16, #tpu.memory_space<vmem>>, vector<512x1024xbf16>
    %cst_23 = arith.constant dense<0.000000e+00> : vector<8x1024xf32>
    %35 = tpu.matmul %33, %34, %cst_23 {dimension_numbers = #tpu.dot_dimension_numbers<[1], [0], [0], [1], [0, 0, 1, 1], [], []>} : vector<8x512xbf16>, vector<512x1024xbf16>, vector<8x1024xf32> -> vector<8x1024xf32>
    %c0_24 = arith.constant 0 : index
    %c0_25 = arith.constant 0 : index
    %36 = vector.load %arg9[%c0_24, %c0_25] : memref<1x1024xf32, #tpu.memory_space<vmem>>, vector<1x1024xf32>
    %37 = vector.broadcast %36 : vector<1x1024xf32> to vector<8x1024xf32>
    %38 = arith.addf %35, %37 : vector<8x1024xf32>
    %cst_26 = arith.constant 0.000000e+00 : f32
    %39 = vector.broadcast %cst_26 : f32 to vector<8x1024xf32>
    %40 = arith.cmpf ogt, %38, %39 : vector<8x1024xf32>
    %cst_27 = arith.constant 2.000000e-01 : f32
    %41 = vector.broadcast %cst_27 : f32 to vector<8x1024xf32>
    %42 = arith.mulf %41, %38 : vector<8x1024xf32>
    %43 = arith.select %40, %38, %42 : vector<8x1024xi1>, vector<8x1024xf32>
    %44 = arith.truncf %43 : vector<8x1024xf32> to vector<8x1024xbf16>
    %c0_28 = arith.constant 0 : index
    %c0_29 = arith.constant 0 : index
    %45 = vector.load %arg10[%c0_28, %c0_29] : memref<1024x896xbf16, #tpu.memory_space<vmem>>, vector<1024x896xbf16>
    %cst_30 = arith.constant dense<0.000000e+00> : vector<8x896xf32>
    %46 = tpu.matmul %44, %45, %cst_30 {dimension_numbers = #tpu.dot_dimension_numbers<[1], [0], [0], [1], [0, 0, 1, 1], [], []>} : vector<8x1024xbf16>, vector<1024x896xbf16>, vector<8x896xf32> -> vector<8x896xf32>
    %c0_31 = arith.constant 0 : index
    %c0_32 = arith.constant 0 : index
    %47 = vector.load %arg11[%c0_31, %c0_32] : memref<1x896xf32, #tpu.memory_space<vmem>>, vector<1x896xf32>
    %48 = vector.broadcast %47 : vector<1x896xf32> to vector<8x896xf32>
    %49 = arith.addf %46, %48 : vector<8x896xf32>
    %50 = math.tanh %49 : vector<8x896xf32>
    %51 = arith.truncf %50 : vector<8x896xf32> to vector<8x896xbf16>
    %c0_33 = arith.constant 0 : index
    %c0_34 = arith.constant 0 : index
    %52 = vector.load %arg12[%c0_33, %c0_34] : memref<8x896xbf16, #tpu.memory_space<vmem>>, vector<8x896xbf16>
    tpu.vector_store %arg12[%c0_33, %c0_34], %51 {strides = array<i32>} : memref<8x896xbf16, #tpu.memory_space<vmem>>, vector<8x896xbf16>,
    return
  }
  func.func @transform_0(%arg0: i32) -> (i32, i32) {
    %c0_i32 = arith.constant 0 : i32
    %c0_i32_0 = arith.constant 0 : i32
    return %arg0, %c0_i32 : i32, i32
  }
  func.func @transform_1(%arg0: i32) -> (i32, i32) {
    %c0_i32 = arith.constant 0 : i32
    %c0_i32_0 = arith.constant 0 : i32
    %c0_i32_1 = arith.constant 0 : i32
    return %c0_i32, %c0_i32_0 : i32, i32
  }
  func.func @transform_2(%arg0: i32) -> (i32, i32) {
    %c0_i32 = arith.constant 0 : i32
    %c0_i32_0 = arith.constant 0 : i32
    %c0_i32_1 = arith.constant 0 : i32
    return %c0_i32, %c0_i32_0 : i32, i32
  }
  func.func @transform_3(%arg0: i32) -> (i32, i32) {
    %c0_i32 = arith.constant 0 : i32
    %c0_i32_0 = arith.constant 0 : i32
    %c0_i32_1 = arith.constant 0 : i32
    return %c0_i32, %c0_i32_0 : i32, i32
  }
  func.func @transform_4(%arg0: i32) -> (i32, i32) {
    %c0_i32 = arith.constant 0 : i32
    %c0_i32_0 = arith.constant 0 : i32
    %c0_i32_1 = arith.constant 0 : i32
    return %c0_i32, %c0_i32_0 : i32, i32
  }
  func.func @transform_5(%arg0: i32) -> (i32, i32) {
    %c0_i32 = arith.constant 0 : i32
    %c0_i32_0 = arith.constant 0 : i32
    %c0_i32_1 = arith.constant 0 : i32
    return %c0_i32, %c0_i32_0 : i32, i32
  }
  func.func @transform_6(%arg0: i32) -> (i32, i32) {
    %c0_i32 = arith.constant 0 : i32
    %c0_i32_0 = arith.constant 0 : i32
    %c0_i32_1 = arith.constant 0 : i32
    return %c0_i32, %c0_i32_0 : i32, i32
  }
  func.func @transform_7(%arg0: i32) -> (i32, i32) {
    %c0_i32 = arith.constant 0 : i32
    %c0_i32_0 = arith.constant 0 : i32
    %c0_i32_1 = arith.constant 0 : i32
    return %c0_i32, %c0_i32_0 : i32, i32
  }
  func.func @transform_8(%arg0: i32) -> (i32, i32) {
    %c0_i32 = arith.constant 0 : i32
    %c0_i32_0 = arith.constant 0 : i32
    %c0_i32_1 = arith.constant 0 : i32
    return %c0_i32, %c0_i32_0 : i32, i32
  }
  func.func @transform_9(%arg0: i32) -> (i32, i32) {
    %c0_i32 = arith.constant 0 : i32
    %c0_i32_0 = arith.constant 0 : i32
    %c0_i32_1 = arith.constant 0 : i32
    return %c0_i32, %c0_i32_0 : i32, i32
  }
  func.func @transform_10(%arg0: i32) -> (i32, i32) {
    %c0_i32 = arith.constant 0 : i32
    %c0_i32_0 = arith.constant 0 : i32
    %c0_i32_1 = arith.constant 0 : i32
    return %c0_i32, %c0_i32_0 : i32, i32
  }
  func.func @transform_11(%arg0: i32) -> (i32, i32) {
    %c0_i32 = arith.constant 0 : i32
    %c0_i32_0 = arith.constant 0 : i32
    return %arg0, %c0_i32 : i32, i32
  }
}

</mosaic_0001>

<llo_original>
// kernel: generator_mlp_forward.1
$region0: #{generator_mlp_forward.1}
  #allocation0 [shape = 'u32[]', space=smem, size = 0x4, offset = 0x4, fixed_abs, tag = 'smem constant byte address 0x4 - core index']
  #allocation1 [shape = 'u32[144,128]{1,0:T(1,128)}', space=vmem, size = 0x12000, scoped, tag = 'internal scratch']
  %s0 = inlined_call_operand.vmem [shape: bf16[8,32], index: 0, kind: input, shape index: {}]
  %s1 = inlined_call_operand.hbm [shape: bf16[32,128], index: 1, kind: input, shape index: {}]
  %s2 = inlined_call_operand.hbm [shape: f32[1,128], index: 2, kind: input, shape index: {}]
  %s3 = inlined_call_operand.hbm [shape: bf16[128,256], index: 3, kind: input, shape index: {}]
  %s4 = inlined_call_operand.hbm [shape: f32[1,256], index: 4, kind: input, shape index: {}]
  %s5 = inlined_call_operand.hbm [shape: bf16[256,512], index: 5, kind: input, shape index: {}]
  %s6 = inlined_call_operand.hbm [shape: f32[1,512], index: 6, kind: input, shape index: {}]
  %s7 = inlined_call_operand.hbm [shape: bf16[512,1024], index: 7, kind: input, shape index: {}]
  %s8 = inlined_call_operand.hbm [shape: f32[1,1024], index: 8, kind: input, shape index: {}]
  %s9 = inlined_call_operand.hbm [shape: bf16[1024,896], index: 9, kind: input, shape index: {}]
  %s10 = inlined_call_operand.hbm [shape: f32[1,896], index: 10, kind: input, shape index: {}]
  %s11 = inlined_call_operand.vmem [shape: bf16[8,896], index: 11, kind: output, shape index: {}]
  %s12 = sld [smem:[#allocation0]]
  $region94: #{generator_mlp_forward.1} parent=0
    _
  %s14 = ssub.s32 1, %s12
  %s15 = scalar_select 0, %s14, %s12
  $region1: #{generator_mlp_forward.1} parent=0
    #allocation2 [shape = 'u8[8192]{0}', space=vmem, size = 0x2000, scoped, tag = 'input window, operand 1, single buffered']
    #allocation3 [shape = 's32[1]{0}', space=sflag, size = 0x4, scoped, tag = 'scoped memory for generator_mlp_forward.1']
    #allocation4 [shape = 'u8[512]{0}', space=vmem, size = 0x400, scoped, tag = 'input window, operand 2, single buffered']
    #allocation5 [shape = 's32[1]{0}', space=sflag, size = 0x4, scoped, tag = 'scoped memory for generator_mlp_forward.1']
    #allocation6 [shape = 'u8[65536]{0}', space=vmem, size = 0x10000, scoped, tag = 'input window, operand 3, single buffered']
    #allocation7 [shape = 'u8[1024]{0}', space=vmem, size = 0x400, scoped, tag = 'input window, operand 4, single buffered']
    #allocation8 [shape = 's32[1]{0}', space=sflag, size = 0x4, scoped, tag = 'scoped memory for generator_mlp_forward.1']
    #allocation9 [shape = 'u8[262144]{0}', space=vmem, size = 0x40000, scoped, tag = 'input window, operand 5, single buffered']
    #allocation10 [shape = 'u8[2048]{0}', space=vmem, size = 0x800, scoped, tag = 'input window, operand 6, single buffered']
    #allocation11 [shape = 's32[1]{0}', space=sflag, size = 0x4, scoped, tag = 'scoped memory for generator_mlp_forward.1']
    #allocation12 [shape = 'u8[1048576]{0}', space=vmem, size = 0x100000, scoped, tag = 'input window, operand 7, single buffered']
    #allocation13 [shape = 'u8[4096]{0}', space=vmem, size = 0x1000, scoped, tag = 'input window, operand 8, single buffered']
    #allocation14 [shape = 's32[1]{0}', space=sflag, size = 0x4, scoped, tag = 'scoped memory for generator_mlp_forward.1']
    #allocation15 [shape = 'u8[1835008]{0}', space=vmem, size = 0x1c0000, scoped, tag = 'input window, operand 9, single buffered']
    #allocation16 [shape = 'u8[3584]{0}', space=vmem, size = 0x1000, scoped, tag = 'input window, operand 10, single buffered']
    #allocation17 [shape = 's32[1]{0}', space=sflag, size = 0x4, scoped, tag = 'scoped memory for generator_mlp_forward.1']
    %16 = vsyncpa [#allocation3], 0
    %17 = vsyncpa [#allocation5], 0
    %18 = vsyncpa [#allocation8], 0
    %19 = vsyncpa [#allocation11], 0
    %20 = vsyncpa [#allocation14], 0
    %21 = vsyncpa [#allocation17], 0
    // Predicated region
    $region2: #{generator_mlp_forward.1} parent=1 // pred_check
      _
    $region3: #{generator_mlp_forward.1} parent=1 // pred_check_branch
      %23 = sbr.rel (0) target = $region5
    $region4: #{generator_mlp_forward.1} parent=1 // pred_region
      _
    $region5: #{generator_mlp_forward.1} parent=1 // pred_fallthru
      _
    // Predicated region
    $region6: #{generator_mlp_forward.1} parent=1 // pred_check
      _
    $region7: #{generator_mlp_forward.1} parent=1 // pred_check_branch
      %25 = sbr.rel (0) target = $region9
    $region8: #{generator_mlp_forward.1} parent=1 // pred_region
      %s27 = ssub.s32 256, 256
      %28 = vsyncadd [#allocation3], %s27
      %s29 = sshll.u32 [#allocation2], 4
      %s30 = int_to_ptr.vmem [resolvable:$true] %s29
      %35 = dma.hbm_to_vmem [thread:$0]  %s1, 256, %s30, [#allocation3], 64, 64, 4
    $region9: #{generator_mlp_forward.1} parent=1 // pred_fallthru
      _
    // Predicated region
    $region10: #{generator_mlp_forward.1} parent=1 // pred_check
      _
    $region11: #{generator_mlp_forward.1} parent=1 // pred_check_branch
      %37 = sbr.rel (0) target = $region13
    $region12: #{generator_mlp_forward.1} parent=1 // pred_region
      %s39 = ssub.s32 16, 16
      %40 = vsyncadd [#allocation5], %s39
      %s42 = sshll.u32 [#allocation4], 4
      %s43 = int_to_ptr.vmem [resolvable:$true] %s42
      %45 = dma.hbm_to_vmem [thread:$0]  %s2, 16, %s43, [#allocation5]
    $region13: #{generator_mlp_forward.1} parent=1 // pred_fallthru
      _
    // Predicated region
    $region14: #{generator_mlp_forward.1} parent=1 // pred_check
      _
    $region15: #{generator_mlp_forward.1} parent=1 // pred_check_branch
      %47 = sbr.rel (0) target = $region17
    $region16: #{generator_mlp_forward.1} parent=1 // pred_region
      %s49 = ssub.s32 2048, 2048
      %50 = vsyncadd [#allocation5], %s49
      %s51 = sshll.u32 [#allocation6], 4
      %s52 = int_to_ptr.vmem [resolvable:$true] %s51
      %57 = dma.hbm_to_vmem [thread:$0]  %s3, 2048, %s52, [#allocation5], 128, 128, 8
    $region17: #{generator_mlp_forward.1} parent=1 // pred_fallthru
      _
    // Predicated region
    $region18: #{generator_mlp_forward.1} parent=1 // pred_check
      _
    $region19: #{generator_mlp_forward.1} parent=1 // pred_check_branch
      %59 = sbr.rel (0) target = $region21
    $region20: #{generator_mlp_forward.1} parent=1 // pred_region
      %s61 = ssub.s32 32, 32
      %62 = vsyncadd [#allocation8], %s61
      %s64 = sshll.u32 [#allocation7], 4
      %s65 = int_to_ptr.vmem [resolvable:$true] %s64
      %67 = dma.hbm_to_vmem [thread:$0]  %s4, 32, %s65, [#allocation8]
    $region21: #{generator_mlp_forward.1} parent=1 // pred_fallthru
      _
    // Predicated region
    $region22: #{generator_mlp_forward.1} parent=1 // pred_check
      _
    $region23: #{generator_mlp_forward.1} parent=1 // pred_check_branch
      %69 = sbr.rel (0) target = $region25
    $region24: #{generator_mlp_forward.1} parent=1 // pred_region
      %s71 = ssub.s32 8192, 8192
      %72 = vsyncadd [#allocation8], %s71
      %s73 = sshll.u32 [#allocation9], 4
      %s74 = int_to_ptr.vmem [resolvable:$true] %s73
      %79 = dma.hbm_to_vmem [thread:$0]  %s5, 8192, %s74, [#allocation8], 256, 256, 16
    $region25: #{generator_mlp_forward.1} parent=1 // pred_fallthru
      _
    // Predicated region
    $region26: #{generator_mlp_forward.1} parent=1 // pred_check
      _
    $region27: #{generator_mlp_forward.1} parent=1 // pred_check_branch
      %81 = sbr.rel (0) target = $region29
    $region28: #{generator_mlp_forward.1} parent=1 // pred_region
      %s83 = ssub.s32 64, 64
      %84 = vsyncadd [#allocation11], %s83
      %s86 = sshll.u32 [#allocation10], 4
      %s87 = int_to_ptr.vmem [resolvable:$true] %s86
      %89 = dma.hbm_to_vmem [thread:$0]  %s6, 64, %s87, [#allocation11]
    $region29: #{generator_mlp_forward.1} parent=1 // pred_fallthru
      _
    // Predicated region
    $region30: #{generator_mlp_forward.1} parent=1 // pred_check
      _
    $region31: #{generator_mlp_forward.1} parent=1 // pred_check_branch
      %91 = sbr.rel (0) target = $region33
    $region32: #{generator_mlp_forward.1} parent=1 // pred_region
      %s93 = ssub.s32 32768, 32768
      %94 = vsyncadd [#allocation11], %s93
      %s95 = sshll.u32 [#allocation12], 4
      %s96 = int_to_ptr.vmem [resolvable:$true] %s95
      %101 = dma.hbm_to_vmem [thread:$0]  %s7, 32768, %s96, [#allocation11], 512, 512, 32
    $region33: #{generator_mlp_forward.1} parent=1 // pred_fallthru
      _
    // Predicated region
    $region34: #{generator_mlp_forward.1} parent=1 // pred_check
      _
    $region35: #{generator_mlp_forward.1} parent=1 // pred_check_branch
      %103 = sbr.rel (0) target = $region37
    $region36: #{generator_mlp_forward.1} parent=1 // pred_region
      %s105 = ssub.s32 128, 128
      %106 = vsyncadd [#allocation14], %s105
      %s108 = sshll.u32 [#allocation13], 4
      %s109 = int_to_ptr.vmem [resolvable:$true] %s108
      %111 = dma.hbm_to_vmem [thread:$0]  %s8, 128, %s109, [#allocation14]
    $region37: #{generator_mlp_forward.1} parent=1 // pred_fallthru
      _
    // Predicated region
    $region38: #{generator_mlp_forward.1} parent=1 // pred_check
      _
    $region39: #{generator_mlp_forward.1} parent=1 // pred_check_branch
      %113 = sbr.rel (0) target = $region41
    $region40: #{generator_mlp_forward.1} parent=1 // pred_region
      %s115 = ssub.s32 57344, 57344
      %116 = vsyncadd [#allocation14], %s115
      %s117 = sshll.u32 [#allocation15], 4
      %s118 = int_to_ptr.vmem [resolvable:$true] %s117
      %123 = dma.hbm_to_vmem [thread:$0]  %s9, 57344, %s118, [#allocation14], 448, 448, 28
    $region41: #{generator_mlp_forward.1} parent=1 // pred_fallthru
      _
    // Predicated region
    $region42: #{generator_mlp_forward.1} parent=1 // pred_check
      _
    $region43: #{generator_mlp_forward.1} parent=1 // pred_check_branch
      %125 = sbr.rel (0) target = $region45
    $region44: #{generator_mlp_forward.1} parent=1 // pred_region
      %s127 = ssub.s32 112, 112
      %128 = vsyncadd [#allocation17], %s127
      %s130 = sshll.u32 [#allocation16], 4
      %s131 = int_to_ptr.vmem [resolvable:$true] %s130
      %133 = dma.hbm_to_vmem [thread:$0]  %s10, 112, %s131, [#allocation17]
    $region45: #{generator_mlp_forward.1} parent=1 // pred_fallthru
      _
    // Predicated region
    $region46: #{generator_mlp_forward.1} parent=1 // pred_check
      _
    $region47: #{generator_mlp_forward.1} parent=1 // pred_check_branch
      %135 = sbr.rel (0) target = $region49
    $region48: #{generator_mlp_forward.1} parent=1 // pred_region
      %136 = dma.done [#allocation3], 256
    $region49: #{generator_mlp_forward.1} parent=1 // pred_fallthru
      _
    // Predicated region
    $region50: #{generator_mlp_forward.1} parent=1 // pred_check
      _
    $region51: #{generator_mlp_forward.1} parent=1 // pred_check_branch
      %138 = sbr.rel (0) target = $region53
    $region52: #{generator_mlp_forward.1} parent=1 // pred_region
      %139 = dma.done [#allocation5], 16
    $region53: #{generator_mlp_forward.1} parent=1 // pred_fallthru
      _
    // Predicated region
    $region54: #{generator_mlp_forward.1} parent=1 // pred_check
      _
    $region55: #{generator_mlp_forward.1} parent=1 // pred_check_branch
      %141 = sbr.rel (0) target = $region57
    $region56: #{generator_mlp_forward.1} parent=1 // pred_region
      %142 = dma.done [#allocation5], 2048
    $region57: #{generator_mlp_forward.1} parent=1 // pred_fallthru
      _
    // Predicated region
    $region58: #{generator_mlp_forward.1} parent=1 // pred_check
      _
    $region59: #{generator_mlp_forward.1} parent=1 // pred_check_branch
      %144 = sbr.rel (0) target = $region61
    $region60: #{generator_mlp_forward.1} parent=1 // pred_region
      %145 = dma.done [#allocation8], 32
    $region61: #{generator_mlp_forward.1} parent=1 // pred_fallthru
      _
    // Predicated region
    $region62: #{generator_mlp_forward.1} parent=1 // pred_check
      _
    $region63: #{generator_mlp_forward.1} parent=1 // pred_check_branch
      %147 = sbr.rel (0) target = $region65
    $region64: #{generator_mlp_forward.1} parent=1 // pred_region
      %148 = dma.done [#allocation8], 8192
    $region65: #{generator_mlp_forward.1} parent=1 // pred_fallthru
      _
    // Predicated region
    $region66: #{generator_mlp_forward.1} parent=1 // pred_check
      _
    $region67: #{generator_mlp_forward.1} parent=1 // pred_check_branch
      %150 = sbr.rel (0) target = $region69
    $region68: #{generator_mlp_forward.1} parent=1 // pred_region
      %151 = dma.done [#allocation11], 64
    $region69: #{generator_mlp_forward.1} parent=1 // pred_fallthru
      _
    // Predicated region
    $region70: #{generator_mlp_forward.1} parent=1 // pred_check
      _
    $region71: #{generator_mlp_forward.1} parent=1 // pred_check_branch
      %153 = sbr.rel (0) target = $region73
    $region72: #{generator_mlp_forward.1} parent=1 // pred_region
      %154 = dma.done [#allocation11], 32768
    $region73: #{generator_mlp_forward.1} parent=1 // pred_fallthru
      _
    // Predicated region
    $region74: #{generator_mlp_forward.1} parent=1 // pred_check
      _
    $region75: #{generator_mlp_forward.1} parent=1 // pred_check_branch
      %156 = sbr.rel (0) target = $region77
    $region76: #{generator_mlp_forward.1} parent=1 // pred_region
      %157 = dma.done [#allocation14], 128
    $region77: #{generator_mlp_forward.1} parent=1 // pred_fallthru
      _
    // Predicated region
    $region78: #{generator_mlp_forward.1} parent=1 // pred_check
      _
    $region79: #{generator_mlp_forward.1} parent=1 // pred_check_branch
      %159 = sbr.rel (0) target = $region81
    $region80: #{generator_mlp_forward.1} parent=1 // pred_region
      %160 = dma.done [#allocation14], 57344
    $region81: #{generator_mlp_forward.1} parent=1 // pred_fallthru
      _
    // Predicated region
    $region82: #{generator_mlp_forward.1} parent=1 // pred_check
      _
    $region83: #{generator_mlp_forward.1} parent=1 // pred_check_branch
      %162 = sbr.rel (0) target = $region85
    $region84: #{generator_mlp_forward.1} parent=1 // pred_region
      %163 = dma.done [#allocation17], 112
    $region85: #{generator_mlp_forward.1} parent=1 // pred_fallthru
      _
    %v165 = vld [vmem:[%s0] sm:$0xf]
    %v166 = vld [vmem:[#allocation2] sm:$0xf]
    %v167 = vld [vmem:[#allocation2 + $0x4] sm:$0xf]
    %v168 = vld [vmem:[#allocation2 + $0x8] sm:$0xf]
    %v169 = vld [vmem:[#allocation2 + $0xc] sm:$0xf]
    %v170 = vld [vmem:[#allocation4] sm:$0x1]
    %v172 = vlaneseq
    %v173 = vshrl.u32 %v172, 7
    %v174 = vsub.s32 0, %v173
    %v175 = vrot.slane %v170, %v174
    %v181 = vunpack.c.l.b16 %v166
    %v182 = vunpack.c.l.b16 %v167
    %v183 = vunpack.c.l.b16 %v168
    %v184 = vunpack.c.l.b16 %v169
    %v185 = vpack.c.b16 %v182, %v181
    %v186 = vpack.c.b16 %v184, %v183
    %vm189 = vcmask 261120
    %v191 = vsel %vm189, %v165, 0
    %193 = vmatprep.subr.bf16.mxu0 0
    %194 = vmatpush1.bf16.msra.mxu0 0
    %195 = vmatprep.subr.bf16.mxu0 0
    %196 = vmatpush1.bf16.msra.mxu0 0
    %197 = vmatprep.subr.bf16.mxu0 0
    %198 = vmatpush1.bf16.msra.mxu0 0
    %199 = vmatprep.subr.bf16.mxu0 0
    %200 = vmatpush1.bf16.msra.mxu0 0
    %201 = vmatprep.subr.bf16.mxu0 0
    %202 = vmatpush1.bf16.msra.mxu0 0
    %203 = vmatprep.subr.bf16.mxu0 0
    %204 = vmatpush1.bf16.msra.mxu0 0
    %205 = vmatprep.subr.bf16.mxu0 0
    %206 = vmatpush1.bf16.msra.mxu0 %v186
    %207 = vmatprep.subr.bf16.mxu0 0
    %208 = vmatpush1.bf16.msra.mxu0 %v185
    %209 = vmatprep.subr.bf16.mxu0 0
    %210 = vmatpush2.bf16.msra.mxu0 0
    %211 = vmatprep.subr.bf16.mxu0 0
    %212 = vmatpush2.bf16.msra.mxu0 0
    %213 = vmatprep.subr.bf16.mxu0 0
    %214 = vmatpush2.bf16.msra.mxu0 0
    %215 = vmatprep.subr.bf16.mxu0 0
    %216 = vmatpush2.bf16.msra.mxu0 0
    %217 = vmatprep.subr.bf16.mxu0 0
    %218 = vmatpush2.bf16.msra.mxu0 0
    %219 = vmatprep.subr.bf16.mxu0 0
    %220 = vmatpush2.bf16.msra.mxu0 0
    %221 = vmatprep.subr.bf16.mxu0 0
    %222 = vmatpush2.bf16.msra.mxu0 0
    %223 = vmatprep.subr.bf16.mxu0 0
    %224 = vmatpush2.bf16.msra.mxu0 0
    %225 = vmatprep.mubr.bf16.mxu0 0
    %226 = vmatmul.mubr.bf16.gmra.mxu0 %v191
    %v227 = vpop.f32.mrf.mxu0
    %v228 = vadd.f32 %v175, %v227
    %v229 = vpop.f32.mrf.mxu0
    %v230 = vpop.f32.mrf.mxu0
    %v231 = vpop.f32.mrf.mxu0
    %232 = vdwg.mxu0
    %vm233 = vcmp.gt.f32.partialorder %v228, 0.0
    %v234 = vmul.f32 %v228, 0.2
    %v235 = vsel %vm233, %v228, %v234
    %v236 = vpack.c.bf16 %v235, %v235
    %v237 = vld [vmem:[#allocation6] sm:$0xff]
    %v238 = vld [vmem:[#allocation6 + $0x8] sm:$0xff]
    %v239 = vld [vmem:[#allocation6 + $0x10] sm:$0xff]
    %v240 = vld [vmem:[#allocation6 + $0x18] sm:$0xff]
    %v241 = vld [vmem:[#allocation6 + $0x20] sm:$0xff]
    %v242 = vld [vmem:[#allocation6 + $0x28] sm:$0xff]
    %v243 = vld [vmem:[#allocation6 + $0x30] sm:$0xff]
    %v244 = vld [vmem:[#allocation6 + $0x38] sm:$0xff]
    %v245 = vld [vmem:[#allocation6 + $0x40] sm:$0xff]
    %v246 = vld [vmem:[#allocation6 + $0x48] sm:$0xff]
    %v247 = vld [vmem:[#allocation6 + $0x50] sm:$0xff]
    %v248 = vld [vmem:[#allocation6 + $0x58] sm:$0xff]
    %v249 = vld [vmem:[#allocation6 + $0x60] sm:$0xff]
    %v250 = vld [vmem:[#allocation6 + $0x68] sm:$0xff]
    %v251 = vld [vmem:[#allocation6 + $0x70] sm:$0xff]
    %v252 = vld [vmem:[#allocation6 + $0x78] sm:$0xff]
    %v253 = vld [vmem:[#allocation7] sm:$0x3]
    %v255 = vlaneseq
    %v256 = vshrl.u32 %v255, 7
    %v257 = vsub.s32 0, %v256
    %v258 = vrot.slane %v253, %v257
    %v259 = vlaneseq
    %v260 = vshrl.u32 %v259, 7
    %v261 = vsub.s32 1, %v260
    %v262 = vrot.slane %v253, %v261
    %v281 = vunpack.c.l.b16 %v237
    %v282 = vunpack.c.h.b16 %v237
    %v283 = vunpack.c.l.b16 %v238
    %v284 = vunpack.c.h.b16 %v238
    %v285 = vunpack.c.l.b16 %v239
    %v286 = vunpack.c.h.b16 %v239
    %v287 = vunpack.c.l.b16 %v240
    %v288 = vunpack.c.h.b16 %v240
    %v289 = vunpack.c.l.b16 %v241
    %v290 = vunpack.c.h.b16 %v241
    %v291 = vunpack.c.l.b16 %v242
    %v292 = vunpack.c.h.b16 %v242
    %v293 = vunpack.c.l.b16 %v243
    %v294 = vunpack.c.h.b16 %v243
    %v295 = vunpack.c.l.b16 %v244
    %v296 = vunpack.c.h.b16 %v244
    %v297 = vunpack.c.l.b16 %v245
    %v298 = vunpack.c.h.b16 %v245
    %v299 = vunpack.c.l.b16 %v246
    %v300 = vunpack.c.h.b16 %v246
    %v301 = vunpack.c.l.b16 %v247
    %v302 = vunpack.c.h.b16 %v247
    %v303 = vunpack.c.l.b16 %v248
    %v304 = vunpack.c.h.b16 %v248
    %v305 = vunpack.c.l.b16 %v249
    %v306 = vunpack.c.h.b16 %v249
    %v307 = vunpack.c.l.b16 %v250
    %v308 = vunpack.c.h.b16 %v250
    %v309 = vunpack.c.l.b16 %v251
    %v310 = vunpack.c.h.b16 %v251
    %v311 = vunpack.c.l.b16 %v252
    %v312 = vunpack.c.h.b16 %v252
    %v313 = vpack.c.b16 %v283, %v281
    %v314 = vpack.c.b16 %v284, %v282
    %v315 = vpack.c.b16 %v287, %v285
    %v316 = vpack.c.b16 %v288, %v286
    %v317 = vpack.c.b16 %v291, %v289
    %v318 = vpack.c.b16 %v292, %v290
    %v319 = vpack.c.b16 %v295, %v293
    %v320 = vpack.c.b16 %v296, %v294
    %v321 = vpack.c.b16 %v299, %v297
    %v322 = vpack.c.b16 %v300, %v298
    %v323 = vpack.c.b16 %v303, %v301
    %v324 = vpack.c.b16 %v304, %v302
    %v325 = vpack.c.b16 %v307, %v305
    %v326 = vpack.c.b16 %v308, %v306
    %v327 = vpack.c.b16 %v311, %v309
    %v328 = vpack.c.b16 %v312, %v310
    %345 = vmatprep.subr.bf16.mxu0 %v328
    %346 = vmatpush1.bf16.msra.mxu0 %v327
    %347 = vmatprep.subr.bf16.mxu0 %v326
    %348 = vmatpush1.bf16.msra.mxu0 %v325
    %349 = vmatprep.subr.bf16.mxu0 %v324
    %350 = vmatpush1.bf16.msra.mxu0 %v323
    %351 = vmatprep.subr.bf16.mxu0 %v322
    %352 = vmatpush1.bf16.msra.mxu0 %v321
    %353 = vmatprep.subr.bf16.mxu0 %v320
    %354 = vmatpush1.bf16.msra.mxu0 %v319
    %355 = vmatprep.subr.bf16.mxu0 %v318
    %356 = vmatpush1.bf16.msra.mxu0 %v317
    %357 = vmatprep.subr.bf16.mxu0 %v316
    %358 = vmatpush1.bf16.msra.mxu0 %v315
    %359 = vmatprep.subr.bf16.mxu0 %v314
    %360 = vmatpush1.bf16.msra.mxu0 %v313
    %361 = vmatprep.subr.bf16.mxu0 0
    %362 = vmatpush2.bf16.msra.mxu0 0
    %363 = vmatprep.subr.bf16.mxu0 0
    %364 = vmatpush2.bf16.msra.mxu0 0
    %365 = vmatprep.subr.bf16.mxu0 0
    %366 = vmatpush2.bf16.msra.mxu0 0
    %367 = vmatprep.subr.bf16.mxu0 0
    %368 = vmatpush2.bf16.msra.mxu0 0
    %369 = vmatprep.subr.bf16.mxu0 0
    %370 = vmatpush2.bf16.msra.mxu0 0
    %371 = vmatprep.subr.bf16.mxu0 0
    %372 = vmatpush2.bf16.msra.mxu0 0
    %373 = vmatprep.subr.bf16.mxu0 0
    %374 = vmatpush2.bf16.msra.mxu0 0
    %375 = vmatprep.subr.bf16.mxu0 0
    %376 = vmatpush2.bf16.msra.mxu0 0
    %377 = vmatprep.mubr.bf16.mxu0 0
    %378 = vmatmul.mubr.bf16.gmra.mxu0 %v236
    %v379 = vpop.f32.mrf.mxu0
    %v380 = vadd.f32 %v258, %v379
    %v381 = vpop.f32.mrf.mxu0
    %v382 = vadd.f32 %v262, %v381
    %v383 = vpop.f32.mrf.mxu0
    %v384 = vpop.f32.mrf.mxu0
    %385 = vdwg.mxu0
    %vm386 = vcmp.gt.f32.partialorder %v380, 0.0
    %vm387 = vcmp.gt.f32.partialorder %v382, 0.0
    %v388 = vmul.f32 %v380, 0.2
    %v389 = vmul.f32 %v382, 0.2
    %v390 = vsel %vm386, %v380, %v388
    %v391 = vsel %vm387, %v382, %v389
    %v392 = vpack.c.bf16 %v390, %v390
    %v393 = vpack.c.bf16 %v391, %v391
    %v394 = vld [vmem:[#allocation9] sm:$0xff]
    %v395 = vld [vmem:[#allocation9 + $0x8] sm:$0xff]
    %v396 = vld [vmem:[#allocation9 + $0x10] sm:$0xff]
    %v397 = vld [vmem:[#allocation9 + $0x18] sm:$0xff]
    %v398 = vld [vmem:[#allocation9 + $0x20] sm:$0xff]
    %v399 = vld [vmem:[#allocation9 + $0x28] sm:$0xff]
    %v400 = vld [vmem:[#allocation9 + $0x30] sm:$0xff]
    %v401 = vld [vmem:[#allocation9 + $0x38] sm:$0xff]
    %v402 = vld [vmem:[#allocation9 + $0x40] sm:$0xff]
    %v403 = vld [vmem:[#allocation9 + $0x48] sm:$0xff]
    %v404 = vld [vmem:[#allocation9 + $0x50] sm:$0xff]
    %v405 = vld [vmem:[#allocation9 + $0x58] sm:$0xff]
    %v406 = vld [vmem:[#allocation9 + $0x60] sm:$0xff]
    %v407 = vld [vmem:[#allocation9 + $0x68] sm:$0xff]
    %v408 = vld [vmem:[#allocation9 + $0x70] sm:$0xff]
    %v409 = vld [vmem:[#allocation9 + $0x78] sm:$0xff]
    %v410 = vld [vmem:[#allocation9 + $0x80] sm:$0xff]
    %v411 = vld [vmem:[#allocation9 + $0x88] sm:$0xff]
    %v412 = vld [vmem:[#allocation9 + $0x90] sm:$0xff]
    %v413 = vld [vmem:[#allocation9 + $0x98] sm:$0xff]
    %v414 = vld [vmem:[#allocation9 + $0xa0] sm:$0xff]
    %v415 = vld [vmem:[#allocation9 + $0xa8] sm:$0xff]
    %v416 = vld [vmem:[#allocation9 + $0xb0] sm:$0xff]
    %v417 = vld [vmem:[#allocation9 + $0xb8] sm:$0xff]
    %v418 = vld [vmem:[#allocation9 + $0xc0] sm:$0xff]
    %v419 = vld [vmem:[#allocation9 + $0xc8] sm:$0xff]
    %v420 = vld [vmem:[#allocation9 + $0xd0] sm:$0xff]
    %v421 = vld [vmem:[#allocation9 + $0xd8] sm:$0xff]
    %v422 = vld [vmem:[#allocation9 + $0xe0] sm:$0xff]
    %v423 = vld [vmem:[#allocation9 + $0xe8] sm:$0xff]
    %v424 = vld [vmem:[#allocation9 + $0xf0] sm:$0xff]
    %v425 = vld [vmem:[#allocation9 + $0xf8] sm:$0xff]
    %v426 = vld [vmem:[#allocation9 + $0x100] sm:$0xff]
    %v427 = vld [vmem:[#allocation9 + $0x108] sm:$0xff]
    %v428 = vld [vmem:[#allocation9 + $0x110] sm:$0xff]
    %v429 = vld [vmem:[#allocation9 + $0x118] sm:$0xff]
    %v430 = vld [vmem:[#allocation9 + $0x120] sm:$0xff]
    %v431 = vld [vmem:[#allocation9 + $0x128] sm:$0xff]
    %v432 = vld [vmem:[#allocation9 + $0x130] sm:$0xff]
    %v433 = vld [vmem:[#allocation9 + $0x138] sm:$0xff]
    %v434 = vld [vmem:[#allocation9 + $0x140] sm:$0xff]
    %v435 = vld [vmem:[#allocation9 + $0x148] sm:$0xff]
    %v436 = vld [vmem:[#allocation9 + $0x150] sm:$0xff]
    %v437 = vld [vmem:[#allocation9 + $0x158] sm:$0xff]
    %v438 = vld [vmem:[#allocation9 + $0x160] sm:$0xff]
    %v439 = vld [vmem:[#allocation9 + $0x168] sm:$0xff]
    %v440 = vld [vmem:[#allocation9 + $0x170] sm:$0xff]
    %v441 = vld [vmem:[#allocation9 + $0x178] sm:$0xff]
    %v442 = vld [vmem:[#allocation9 + $0x180] sm:$0xff]
    %v443 = vld [vmem:[#allocation9 + $0x188] sm:$0xff]
    %v444 = vld [vmem:[#allocation9 + $0x190] sm:$0xff]
    %v445 = vld [vmem:[#allocation9 + $0x198] sm:$0xff]
    %v446 = vld [vmem:[#allocation9 + $0x1a0] sm:$0xff]
    %v447 = vld [vmem:[#allocation9 + $0x1a8] sm:$0xff]
    %v448 = vld [vmem:[#allocation9 + $0x1b0] sm:$0xff]
    %v449 = vld [vmem:[#allocation9 + $0x1b8] sm:$0xff]
    %v450 = vld [vmem:[#allocation9 + $0x1c0] sm:$0xff]
    %v451 = vld [vmem:[#allocation9 + $0x1c8] sm:$0xff]
    %v452 = vld [vmem:[#allocation9 + $0x1d0] sm:$0xff]
    %v453 = vld [vmem:[#allocation9 + $0x1d8] sm:$0xff]
    %v454 = vld [vmem:[#allocation9 + $0x1e0] sm:$0xff]
    %v455 = vld [vmem:[#allocation9 + $0x1e8] sm:$0xff]
    %v456 = vld [vmem:[#allocation9 + $0x1f0] sm:$0xff]
    %v457 = vld [vmem:[#allocation9 + $0x1f8] sm:$0xff]
    %v458 = vld [vmem:[#allocation10] sm:$0xf]
    %v460 = vlaneseq
    %v461 = vshrl.u32 %v460, 7
    %v462 = vsub.s32 0, %v461
    %v463 = vrot.slane %v458, %v462
    %v464 = vlaneseq
    %v465 = vshrl.u32 %v464, 7
    %v466 = vsub.s32 1, %v465
    %v467 = vrot.slane %v458, %v466
    %v468 = vlaneseq
    %v469 = vshrl.u32 %v468, 7
    %v470 = vsub.s32 2, %v469
    %v471 = vrot.slane %v458, %v470
    %v472 = vlaneseq
    %v473 = vshrl.u32 %v472, 7
    %v474 = vsub.s32 3, %v473
    %v475 = vrot.slane %v458, %v474
    %v544 = vunpack.c.l.b16 %v394
    %v545 = vunpack.c.h.b16 %v394
    %v546 = vunpack.c.l.b16 %v395
    %v547 = vunpack.c.h.b16 %v395
    %v548 = vunpack.c.l.b16 %v396
    %v549 = vunpack.c.h.b16 %v396
    %v550 = vunpack.c.l.b16 %v397
    %v551 = vunpack.c.h.b16 %v397
    %v552 = vunpack.c.l.b16 %v398
    %v553 = vunpack.c.h.b16 %v398
    %v554 = vunpack.c.l.b16 %v399
    %v555 = vunpack.c.h.b16 %v399
    %v556 = vunpack.c.l.b16 %v400
    %v557 = vunpack.c.h.b16 %v400
    %v558 = vunpack.c.l.b16 %v401
    %v559 = vunpack.c.h.b16 %v401
    %v560 = vunpack.c.l.b16 %v402
    %v561 = vunpack.c.h.b16 %v402
    %v562 = vunpack.c.l.b16 %v403
    %v563 = vunpack.c.h.b16 %v403
    %v564 = vunpack.c.l.b16 %v404
    %v565 = vunpack.c.h.b16 %v404
    %v566 = vunpack.c.l.b16 %v405
    %v567 = vunpack.c.h.b16 %v405
    %v568 = vunpack.c.l.b16 %v406
    %v569 = vunpack.c.h.b16 %v406
    %v570 = vunpack.c.l.b16 %v407
    %v571 = vunpack.c.h.b16 %v407
    %v572 = vunpack.c.l.b16 %v408
    %v573 = vunpack.c.h.b16 %v408
    %v574 = vunpack.c.l.b16 %v409
    %v575 = vunpack.c.h.b16 %v409
    %v576 = vunpack.c.l.b16 %v410
    %v577 = vunpack.c.h.b16 %v410
    %v578 = vunpack.c.l.b16 %v411
    %v579 = vunpack.c.h.b16 %v411
    %v580 = vunpack.c.l.b16 %v412
    %v581 = vunpack.c.h.b16 %v412
    %v582 = vunpack.c.l.b16 %v413
    %v583 = vunpack.c.h.b16 %v413
    %v584 = vunpack.c.l.b16 %v414
    %v585 = vunpack.c.h.b16 %v414
    %v586 = vunpack.c.l.b16 %v415
    %v587 = vunpack.c.h.b16 %v415
    %v588 = vunpack.c.l.b16 %v416
    %v589 = vunpack.c.h.b16 %v416
    %v590 = vunpack.c.l.b16 %v417
    %v591 = vunpack.c.h.b16 %v417
    %v592 = vunpack.c.l.b16 %v418
    %v593 = vunpack.c.h.b16 %v418
    %v594 = vunpack.c.l.b16 %v419
    %v595 = vunpack.c.h.b16 %v419
    %v596 = vunpack.c.l.b16 %v420
    %v597 = vunpack.c.h.b16 %v420
    %v598 = vunpack.c.l.b16 %v421
    %v599 = vunpack.c.h.b16 %v421
    %v600 = vunpack.c.l.b16 %v422
    %v601 = vunpack.c.h.b16 %v422
    %v602 = vunpack.c.l.b16 %v423
    %v603 = vunpack.c.h.b16 %v423
    %v604 = vunpack.c.l.b16 %v424
    %v605 = vunpack.c.h.b16 %v424
    %v606 = vunpack.c.l.b16 %v425
    %v607 = vunpack.c.h.b16 %v425
    %v608 = vunpack.c.l.b16 %v426
    %v609 = vunpack.c.h.b16 %v426
    %v610 = vunpack.c.l.b16 %v427
    %v611 = vunpack.c.h.b16 %v427
    %v612 = vunpack.c.l.b16 %v428
    %v613 = vunpack.c.h.b16 %v428
    %v614 = vunpack.c.l.b16 %v429
    %v615 = vunpack.c.h.b16 %v429
    %v616 = vunpack.c.l.b16 %v430
    %v617 = vunpack.c.h.b16 %v430
    %v618 = vunpack.c.l.b16 %v431
    %v619 = vunpack.c.h.b16 %v431
    %v620 = vunpack.c.l.b16 %v432
    %v621 = vunpack.c.h.b16 %v432
    %v622 = vunpack.c.l.b16 %v433
    %v623 = vunpack.c.h.b16 %v433
    %v624 = vunpack.c.l.b16 %v434
    %v625 = vunpack.c.h.b16 %v434
    %v626 = vunpack.c.l.b16 %v435
    %v627 = vunpack.c.h.b16 %v435
    %v628 = vunpack.c.l.b16 %v436
    %v629 = vunpack.c.h.b16 %v436
    %v630 = vunpack.c.l.b16 %v437
    %v631 = vunpack.c.h.b16 %v437
    %v632 = vunpack.c.l.b16 %v438
    %v633 = vunpack.c.h.b16 %v438
    %v634 = vunpack.c.l.b16 %v439
    %v635 = vunpack.c.h.b16 %v439
    %v636 = vunpack.c.l.b16 %v440
    %v637 = vunpack.c.h.b16 %v440
    %v638 = vunpack.c.l.b16 %v441
    %v639 = vunpack.c.h.b16 %v441
    %v640 = vunpack.c.l.b16 %v442
    %v641 = vunpack.c.h.b16 %v442
    %v642 = vunpack.c.l.b16 %v443
    %v643 = vunpack.c.h.b16 %v443
    %v644 = vunpack.c.l.b16 %v444
    %v645 = vunpack.c.h.b16 %v444
    %v646 = vunpack.c.l.b16 %v445
    %v647 = vunpack.c.h.b16 %v445
    %v648 = vunpack.c.l.b16 %v446
    %v649 = vunpack.c.h.b16 %v446
    %v650 = vunpack.c.l.b16 %v447
    %v651 = vunpack.c.h.b16 %v447
    %v652 = vunpack.c.l.b16 %v448
    %v653 = vunpack.c.h.b16 %v448
    %v654 = vunpack.c.l.b16 %v449
    %v655 = vunpack.c.h.b16 %v449
    %v656 = vunpack.c.l.b16 %v450
    %v657 = vunpack.c.h.b16 %v450
    %v658 = vunpack.c.l.b16 %v451
    %v659 = vunpack.c.h.b16 %v451
    %v660 = vunpack.c.l.b16 %v452
    %v661 = vunpack.c.h.b16 %v452
    %v662 = vunpack.c.l.b16 %v453
    %v663 = vunpack.c.h.b16 %v453
    %v664 = vunpack.c.l.b16 %v454
    %v665 = vunpack.c.h.b16 %v454
    %v666 = vunpack.c.l.b16 %v455
    %v667 = vunpack.c.h.b16 %v455
    %v668 = vunpack.c.l.b16 %v456
    %v669 = vunpack.c.h.b16 %v456
    %v670 = vunpack.c.l.b16 %v457
    %v671 = vunpack.c.h.b16 %v457
    %v672 = vpack.c.b16 %v548, %v544
    %v673 = vpack.c.b16 %v549, %v545
    %v674 = vpack.c.b16 %v550, %v546
    %v675 = vpack.c.b16 %v551, %v547
    %v676 = vpack.c.b16 %v556, %v552
    %v677 = vpack.c.b16 %v557, %v553
    %v678 = vpack.c.b16 %v558, %v554
    %v679 = vpack.c.b16 %v559, %v555
    %v680 = vpack.c.b16 %v564, %v560
    %v681 = vpack.c.b16 %v565, %v561
    %v682 = vpack.c.b16 %v566, %v562
    %v683 = vpack.c.b16 %v567, %v563
    %v684 = vpack.c.b16 %v572, %v568
    %v685 = vpack.c.b16 %v573, %v569
    %v686 = vpack.c.b16 %v574, %v570
    %v687 = vpack.c.b16 %v575, %v571
    %v688 = vpack.c.b16 %v580, %v576
    %v689 = vpack.c.b16 %v581, %v577
    %v690 = vpack.c.b16 %v582, %v578
    %v691 = vpack.c.b16 %v583, %v579
    %v692 = vpack.c.b16 %v588, %v584
    %v693 = vpack.c.b16 %v589, %v585
    %v694 = vpack.c.b16 %v590, %v586
    %v695 = vpack.c.b16 %v591, %v587
    %v696 = vpack.c.b16 %v596, %v592
    %v697 = vpack.c.b16 %v597, %v593
    %v698 = vpack.c.b16 %v598, %v594
    %v699 = vpack.c.b16 %v599, %v595
    %v700 = vpack.c.b16 %v604, %v600
    %v701 = vpack.c.b16 %v605, %v601
    %v702 = vpack.c.b16 %v606, %v602
    %v703 = vpack.c.b16 %v607, %v603
    %v704 = vpack.c.b16 %v612, %v608
    %v705 = vpack.c.b16 %v613, %v609
    %v706 = vpack.c.b16 %v614, %v610
    %v707 = vpack.c.b16 %v615, %v611
    %v708 = vpack.c.b16 %v620, %v616
    %v709 = vpack.c.b16 %v621, %v617
    %v710 = vpack.c.b16 %v622, %v618
    %v711 = vpack.c.b16 %v623, %v619
    %v712 = vpack.c.b16 %v628, %v624
    %v713 = vpack.c.b16 %v629, %v625
    %v714 = vpack.c.b16 %v630, %v626
    %v715 = vpack.c.b16 %v631, %v627
    %v716 = vpack.c.b16 %v636, %v632
    %v717 = vpack.c.b16 %v637, %v633
    %v718 = vpack.c.b16 %v638, %v634
    %v719 = vpack.c.b16 %v639, %v635
    %v720 = vpack.c.b16 %v644, %v640
    %v721 = vpack.c.b16 %v645, %v641
    %v722 = vpack.c.b16 %v646, %v642
    %v723 = vpack.c.b16 %v647, %v643
    %v724 = vpack.c.b16 %v652, %v648
    %v725 = vpack.c.b16 %v653, %v649
    %v726 = vpack.c.b16 %v654, %v650
    %v727 = vpack.c.b16 %v655, %v651
    %v728 = vpack.c.b16 %v660, %v656
    %v729 = vpack.c.b16 %v661, %v657
    %v730 = vpack.c.b16 %v662, %v658
    %v731 = vpack.c.b16 %v663, %v659
    %v732 = vpack.c.b16 %v668, %v664
    %v733 = vpack.c.b16 %v669, %v665
    %v734 = vpack.c.b16 %v670, %v666
    %v735 = vpack.c.b16 %v671, %v667
    %800 = vmatprep.subr.bf16.mxu0 %v701
    %801 = vmatpush1.bf16.msra.mxu0 %v700
    %802 = vmatprep.subr.bf16.mxu0 %v697
    %803 = vmatpush1.bf16.msra.mxu0 %v696
    %804 = vmatprep.subr.bf16.mxu0 %v693
    %805 = vmatpush1.bf16.msra.mxu0 %v692
    %806 = vmatprep.subr.bf16.mxu0 %v689
    %807 = vmatpush1.bf16.msra.mxu0 %v688
    %808 = vmatprep.subr.bf16.mxu0 %v685
    %809 = vmatpush1.bf16.msra.mxu0 %v684
    %810 = vmatprep.subr.bf16.mxu0 %v681
    %811 = vmatpush1.bf16.msra.mxu0 %v680
    %812 = vmatprep.subr.bf16.mxu0 %v677
    %813 = vmatpush1.bf16.msra.mxu0 %v676
    %814 = vmatprep.subr.bf16.mxu0 %v673
    %815 = vmatpush1.bf16.msra.mxu0 %v672
    %816 = vmatprep.subr.bf16.mxu0 %v733
    %817 = vmatpush2.bf16.msra.mxu0 %v732
    %818 = vmatprep.subr.bf16.mxu0 %v729
    %819 = vmatpush2.bf16.msra.mxu0 %v728
    %820 = vmatprep.subr.bf16.mxu0 %v725
    %821 = vmatpush2.bf16.msra.mxu0 %v724
    %822 = vmatprep.subr.bf16.mxu0 %v721
    %823 = vmatpush2.bf16.msra.mxu0 %v720
    %824 = vmatprep.subr.bf16.mxu0 %v717
    %825 = vmatpush2.bf16.msra.mxu0 %v716
    %826 = vmatprep.subr.bf16.mxu0 %v713
    %827 = vmatpush2.bf16.msra.mxu0 %v712
    %828 = vmatprep.subr.bf16.mxu0 %v709
    %829 = vmatpush2.bf16.msra.mxu0 %v708
    %830 = vmatprep.subr.bf16.mxu0 %v705
    %831 = vmatpush2.bf16.msra.mxu0 %v704
    %832 = vmatprep.mubr.bf16.mxu0 %v393
    %833 = vmatmul.mubr.bf16.gmra.mxu0 %v392
    %v834 = vpop.f32.mrf.mxu0
    %v835 = vadd.f32 %v463, %v834
    %v836 = vpop.f32.mrf.mxu0
    %v837 = vadd.f32 %v467, %v836
    %v838 = vpop.f32.mrf.mxu0
    %v839 = vpop.f32.mrf.mxu0
    %840 = vdwg.mxu0
    %841 = vmatprep.subr.bf16.mxu0 %v703
    %842 = vmatpush1.bf16.msra.mxu0 %v702
    %843 = vmatprep.subr.bf16.mxu0 %v699
    %844 = vmatpush1.bf16.msra.mxu0 %v698
    %845 = vmatprep.subr.bf16.mxu0 %v695
    %846 = vmatpush1.bf16.msra.mxu0 %v694
    %847 = vmatprep.subr.bf16.mxu0 %v691
    %848 = vmatpush1.bf16.msra.mxu0 %v690
    %849 = vmatprep.subr.bf16.mxu0 %v687
    %850 = vmatpush1.bf16.msra.mxu0 %v686
    %851 = vmatprep.subr.bf16.mxu0 %v683
    %852 = vmatpush1.bf16.msra.mxu0 %v682
    %853 = vmatprep.subr.bf16.mxu0 %v679
    %854 = vmatpush1.bf16.msra.mxu0 %v678
    %855 = vmatprep.subr.bf16.mxu0 %v675
    %856 = vmatpush1.bf16.msra.mxu0 %v674
    %857 = vmatprep.subr.bf16.mxu0 %v735
    %858 = vmatpush2.bf16.msra.mxu0 %v734
    %859 = vmatprep.subr.bf16.mxu0 %v731
    %860 = vmatpush2.bf16.msra.mxu0 %v730
    %861 = vmatprep.subr.bf16.mxu0 %v727
    %862 = vmatpush2.bf16.msra.mxu0 %v726
    %863 = vmatprep.subr.bf16.mxu0 %v723
    %864 = vmatpush2.bf16.msra.mxu0 %v722
    %865 = vmatprep.subr.bf16.mxu0 %v719
    %866 = vmatpush2.bf16.msra.mxu0 %v718
    %867 = vmatprep.subr.bf16.mxu0 %v715
    %868 = vmatpush2.bf16.msra.mxu0 %v714
    %869 = vmatprep.subr.bf16.mxu0 %v711
    %870 = vmatpush2.bf16.msra.mxu0 %v710
    %871 = vmatprep.subr.bf16.mxu0 %v707
    %872 = vmatpush2.bf16.msra.mxu0 %v706
    %873 = vmatprep.mubr.bf16.mxu0 %v393
    %874 = vmatmul.mubr.bf16.gmra.mxu0 %v392
    %v875 = vpop.f32.mrf.mxu0
    %v876 = vadd.f32 %v471, %v875
    %v877 = vpop.f32.mrf.mxu0
    %v878 = vadd.f32 %v475, %v877
    %v879 = vpop.f32.mrf.mxu0
    %v880 = vpop.f32.mrf.mxu0
    %881 = vdwg.mxu0
    %vm882 = vcmp.gt.f32.partialorder %v835, 0.0
    %vm883 = vcmp.gt.f32.partialorder %v837, 0.0
    %vm884 = vcmp.gt.f32.partialorder %v876, 0.0
    %vm885 = vcmp.gt.f32.partialorder %v878, 0.0
    %v886 = vmul.f32 %v835, 0.2
    %v887 = vmul.f32 %v837, 0.2
    %v888 = vmul.f32 %v876, 0.2
    %v889 = vmul.f32 %v878, 0.2
    %v890 = vsel %vm882, %v835, %v886
    %v891 = vsel %vm883, %v837, %v887
    %v892 = vsel %vm884, %v876, %v888
    %v893 = vsel %vm885, %v878, %v889
    %v894 = vpack.c.bf16 %v890, %v890
    %v895 = vpack.c.bf16 %v891, %v891
    %v896 = vpack.c.bf16 %v892, %v892
    %v897 = vpack.c.bf16 %v893, %v893
    %v898 = vld [vmem:[#allocation12] sm:$0xff]
    %v899 = vld [vmem:[#allocation12 + $0x8] sm:$0xff]
    %v900 = vld [vmem:[#allocation12 + $0x10] sm:$0xff]
    %v901 = vld [vmem:[#allocation12 + $0x18] sm:$0xff]
    %v902 = vld [vmem:[#allocation12 + $0x20] sm:$0xff]
    %v903 = vld [vmem:[#allocation12 + $0x28] sm:$0xff]
    %v904 = vld [vmem:[#allocation12 + $0x30] sm:$0xff]
    %v905 = vld [vmem:[#allocation12 + $0x38] sm:$0xff]
    %v906 = vld [vmem:[#allocation12 + $0x40] sm:$0xff]
    %v907 = vld [vmem:[#allocation12 + $0x48] sm:$0xff]
    %v908 = vld [vmem:[#allocation12 + $0x50] sm:$0xff]
    %v909 = vld [vmem:[#allocation12 + $0x58] sm:$0xff]
    %v910 = vld [vmem:[#allocation12 + $0x60] sm:$0xff]
    %v911 = vld [vmem:[#allocation12 + $0x68] sm:$0xff]
    %v912 = vld [vmem:[#allocation12 + $0x70] sm:$0xff]
    %v913 = vld [vmem:[#allocation12 + $0x78] sm:$0xff]
    %v914 = vld [vmem:[#allocation12 + $0x80] sm:$0xff]
    %v915 = vld [vmem:[#allocation12 + $0x88] sm:$0xff]
    %v916 = vld [vmem:[#allocation12 + $0x90] sm:$0xff]
    %v917 = vld [vmem:[#allocation12 + $0x98] sm:$0xff]
    %v918 = vld [vmem:[#allocation12 + $0xa0] sm:$0xff]
    %v919 = vld [vmem:[#allocation12 + $0xa8] sm:$0xff]
    %v920 = vld [vmem:[#allocation12 + $0xb0] sm:$0xff]
    %v921 = vld [vmem:[#allocation12 + $0xb8] sm:$0xff]
    %v922 = vld [vmem:[#allocation12 + $0xc0] sm:$0xff]
    %v923 = vld [vmem:[#allocation12 + $0xc8] sm:$0xff]
    %v924 = vld [vmem:[#allocation12 + $0xd0] sm:$0xff]
    %v925 = vld [vmem:[#allocation12 + $0xd8] sm:$0xff]
    %v926 = vld [vmem:[#allocation12 + $0xe0] sm:$0xff]
    %v927 = vld [vmem:[#allocation12 + $0xe8] sm:$0xff]
    %v928 = vld [vmem:[#allocation12 + $0xf0] sm:$0xff]
    %v929 = vld [vmem:[#allocation12 + $0xf8] sm:$0xff]
    %v930 = vld [vmem:[#allocation12 + $0x100] sm:$0xff]
    %v931 = vld [vmem:[#allocation12 + $0x108] sm:$0xff]
    %v932 = vld [vmem:[#allocation12 + $0x110] sm:$0xff]
    %v933 = vld [vmem:[#allocation12 + $0x118] sm:$0xff]
    %v934 = vld [vmem:[#allocation12 + $0x120] sm:$0xff]
    %v935 = vld [vmem:[#allocation12 + $0x128] sm:$0xff]
    %v936 = vld [vmem:[#allocation12 + $0x130] sm:$0xff]
    %v937 = vld [vmem:[#allocation12 + $0x138] sm:$0xff]
    %v938 = vld [vmem:[#allocation12 + $0x140] sm:$0xff]
    %v939 = vld [vmem:[#allocation12 + $0x148] sm:$0xff]
    %v940 = vld [vmem:[#allocation12 + $0x150] sm:$0xff]
    %v941 = vld [vmem:[#allocation12 + $0x158] sm:$0xff]
    %v942 = vld [vmem:[#allocation12 + $0x160] sm:$0xff]
    %v943 = vld [vmem:[#allocation12 + $0x168] sm:$0xff]
    %v944 = vld [vmem:[#allocation12 + $0x170] sm:$0xff]
    %v945 = vld [vmem:[#allocation12 + $0x178] sm:$0xff]
    %v946 = vld [vmem:[#allocation12 + $0x180] sm:$0xff]
    %v947 = vld [vmem:[#allocation12 + $0x188] sm:$0xff]
    %v948 = vld [vmem:[#allocation12 + $0x190] sm:$0xff]
    %v949 = vld [vmem:[#allocation12 + $0x198] sm:$0xff]
    %v950 = vld [vmem:[#allocation12 + $0x1a0] sm:$0xff]
    %v951 = vld [vmem:[#allocation12 + $0x1a8] sm:$0xff]
    %v952 = vld [vmem:[#allocation12 + $0x1b0] sm:$0xff]
    %v953 = vld [vmem:[#allocation12 + $0x1b8] sm:$0xff]
    %v954 = vld [vmem:[#allocation12 + $0x1c0] sm:$0xff]
    %v955 = vld [vmem:[#allocation12 + $0x1c8] sm:$0xff]
    %v956 = vld [vmem:[#allocation12 + $0x1d0] sm:$0xff]
    %v957 = vld [vmem:[#allocation12 + $0x1d8] sm:$0xff]
    %v958 = vld [vmem:[#allocation12 + $0x1e0] sm:$0xff]
    %v959 = vld [vmem:[#allocation12 + $0x1e8] sm:$0xff]
    %v960 = vld [vmem:[#allocation12 + $0x1f0] sm:$0xff]
    %v961 = vld [vmem:[#allocation12 + $0x1f8] sm:$0xff]
    %v962 = vld [vmem:[#allocation12 + $0x200] sm:$0xff]
    %v963 = vld [vmem:[#allocation12 + $0x208] sm:$0xff]
    %v964 = vld [vmem:[#allocation12 + $0x210] sm:$0xff]
    %v965 = vld [vmem:[#allocation12 + $0x218] sm:$0xff]
    %v966 = vld [vmem:[#allocation12 + $0x220] sm:$0xff]
    %v967 = vld [vmem:[#allocation12 + $0x228] sm:$0xff]
    %v968 = vld [vmem:[#allocation12 + $0x230] sm:$0xff]
    %v969 = vld [vmem:[#allocation12 + $0x238] sm:$0xff]
    %v970 = vld [vmem:[#allocation12 + $0x240] sm:$0xff]
    %v971 = vld [vmem:[#allocation12 + $0x248] sm:$0xff]
    %v972 = vld [vmem:[#allocation12 + $0x250] sm:$0xff]
    %v973 = vld [vmem:[#allocation12 + $0x258] sm:$0xff]
    %v974 = vld [vmem:[#allocation12 + $0x260] sm:$0xff]
    %v975 = vld [vmem:[#allocation12 + $0x268] sm:$0xff]
    %v976 = vld [vmem:[#allocation12 + $0x270] sm:$0xff]
    %v977 = vld [vmem:[#allocation12 + $0x278] sm:$0xff]
    %v978 = vld [vmem:[#allocation12 + $0x280] sm:$0xff]
    %v979 = vld [vmem:[#allocation12 + $0x288] sm:$0xff]
    %v980 = vld [vmem:[#allocation12 + $0x290] sm:$0xff]
    %v981 = vld [vmem:[#allocation12 + $0x298] sm:$0xff]
    %v982 = vld [vmem:[#allocation12 + $0x2a0] sm:$0xff]
    %v983 = vld [vmem:[#allocation12 + $0x2a8] sm:$0xff]
    %v984 = vld [vmem:[#allocation12 + $0x2b0] sm:$0xff]
    %v985 = vld [vmem:[#allocation12 + $0x2b8] sm:$0xff]
    %v986 = vld [vmem:[#allocation12 + $0x2c0] sm:$0xff]
    %v987 = vld [vmem:[#allocation12 + $0x2c8] sm:$0xff]
    %v988 = vld [vmem:[#allocation12 + $0x2d0] sm:$0xff]
    %v989 = vld [vmem:[#allocation12 + $0x2d8] sm:$0xff]
    %v990 = vld [vmem:[#allocation12 + $0x2e0] sm:$0xff]
    %v991 = vld [vmem:[#allocation12 + $0x2e8] sm:$0xff]
    %v992 = vld [vmem:[#allocation12 + $0x2f0] sm:$0xff]
    %v993 = vld [vmem:[#allocation12 + $0x2f8] sm:$0xff]
    %v994 = vld [vmem:[#allocation12 + $0x300] sm:$0xff]
    %v995 = vld [vmem:[#allocation12 + $0x308] sm:$0xff]
    %v996 = vld [vmem:[#allocation12 + $0x310] sm:$0xff]
    %v997 = vld [vmem:[#allocation12 + $0x318] sm:$0xff]
    %v998 = vld [vmem:[#allocation12 + $0x320] sm:$0xff]
    %v999 = vld [vmem:[#allocation12 + $0x328] sm:$0xff]
    %v1000 = vld [vmem:[#allocation12 + $0x330] sm:$0xff]
    %v1001 = vld [vmem:[#allocation12 + $0x338] sm:$0xff]
    %v1002 = vld [vmem:[#allocation12 + $0x340] sm:$0xff]
    %v1003 = vld [vmem:[#allocation12 + $0x348] sm:$0xff]
    %v1004 = vld [vmem:[#allocation12 + $0x350] sm:$0xff]
    %v1005 = vld [vmem:[#allocation12 + $0x358] sm:$0xff]
    %v1006 = vld [vmem:[#allocation12 + $0x360] sm:$0xff]
    %v1007 = vld [vmem:[#allocation12 + $0x368] sm:$0xff]
    %v1008 = vld [vmem:[#allocation12 + $0x370] sm:$0xff]
    %v1009 = vld [vmem:[#allocation12 + $0x378] sm:$0xff]
    %v1010 = vld [vmem:[#allocation12 + $0x380] sm:$0xff]
    %v1011 = vld [vmem:[#allocation12 + $0x388] sm:$0xff]
    %v1012 = vld [vmem:[#allocation12 + $0x390] sm:$0xff]
    %v1013 = vld [vmem:[#allocation12 + $0x398] sm:$0xff]
    %v1014 = vld [vmem:[#allocation12 + $0x3a0] sm:$0xff]
    %v1015 = vld [vmem:[#allocation12 + $0x3a8] sm:$0xff]
    %v1016 = vld [vmem:[#allocation12 + $0x3b0] sm:$0xff]
    %v1017 = vld [vmem:[#allocation12 + $0x3b8] sm:$0xff]
    %v1018 = vld [vmem:[#allocation12 + $0x3c0] sm:$0xff]
    %v1019 = vld [vmem:[#allocation12 + $0x3c8] sm:$0xff]
    %v1020 = vld [vmem:[#allocation12 + $0x3d0] sm:$0xff]
    %v1021 = vld [vmem:[#allocation12 + $0x3d8] sm:$0xff]
    %v1022 = vld [vmem:[#allocation12 + $0x3e0] sm:$0xff]
    %v1023 = vld [vmem:[#allocation12 + $0x3e8] sm:$0xff]
    %v1024 = vld [vmem:[#allocation12 + $0x3f0] sm:$0xff]
    %v1025 = vld [vmem:[#allocation12 + $0x3f8] sm:$0xff]
    %v1026 = vld [vmem:[#allocation12 + $0x400] sm:$0xff]
    %v1027 = vld [vmem:[#allocation12 + $0x408] sm:$0xff]
    %v1028 = vld [vmem:[#allocation12 + $0x410] sm:$0xff]
    %v1029 = vld [vmem:[#allocation12 + $0x418] sm:$0xff]
    %v1030 = vld [vmem:[#allocation12 + $0x420] sm:$0xff]
    %v1031 = vld [vmem:[#allocation12 + $0x428] sm:$0xff]
    %v1032 = vld [vmem:[#allocation12 + $0x430] sm:$0xff]
    %v1033 = vld [vmem:[#allocation12 + $0x438] sm:$0xff]
    %v1034 = vld [vmem:[#allocation12 + $0x440] sm:$0xff]
    %v1035 = vld [vmem:[#allocation12 + $0x448] sm:$0xff]
    %v1036 = vld [vmem:[#allocation12 + $0x450] sm:$0xff]
    %v1037 = vld [vmem:[#allocation12 + $0x458] sm:$0xff]
    %v1038 = vld [vmem:[#allocation12 + $0x460] sm:$0xff]
    %v1039 = vld [vmem:[#allocation12 + $0x468] sm:$0xff]
    %v1040 = vld [vmem:[#allocation12 + $0x470] sm:$0xff]
    %v1041 = vld [vmem:[#allocation12 + $0x478] sm:$0xff]
    %v1042 = vld [vmem:[#allocation12 + $0x480] sm:$0xff]
    %v1043 = vld [vmem:[#allocation12 + $0x488] sm:$0xff]
    %v1044 = vld [vmem:[#allocation12 + $0x490] sm:$0xff]
    %v1045 = vld [vmem:[#allocation12 + $0x498] sm:$0xff]
    %v1046 = vld [vmem:[#allocation12 + $0x4a0] sm:$0xff]
    %v1047 = vld [vmem:[#allocation12 + $0x4a8] sm:$0xff]
    %v1048 = vld [vmem:[#allocation12 + $0x4b0] sm:$0xff]
    %v1049 = vld [vmem:[#allocation12 + $0x4b8] sm:$0xff]
    %v1050 = vld [vmem:[#allocation12 + $0x4c0] sm:$0xff]
    %v1051 = vld [vmem:[#allocation12 + $0x4c8] sm:$0xff]
    %v1052 = vld [vmem:[#allocation12 + $0x4d0] sm:$0xff]
    %v1053 = vld [vmem:[#allocation12 + $0x4d8] sm:$0xff]
    %v1054 = vld [vmem:[#allocation12 + $0x4e0] sm:$0xff]
    %v1055 = vld [vmem:[#allocation12 + $0x4e8] sm:$0xff]
    %v1056 = vld [vmem:[#allocation12 + $0x4f0] sm:$0xff]
    %v1057 = vld [vmem:[#allocation12 + $0x4f8] sm:$0xff]
    %v1058 = vld [vmem:[#allocation12 + $0x500] sm:$0xff]
    %v1059 = vld [vmem:[#allocation12 + $0x508] sm:$0xff]
    %v1060 = vld [vmem:[#allocation12 + $0x510] sm:$0xff]
    %v1061 = vld [vmem:[#allocation12 + $0x518] sm:$0xff]
    %v1062 = vld [vmem:[#allocation12 + $0x520] sm:$0xff]
    %v1063 = vld [vmem:[#allocation12 + $0x528] sm:$0xff]
    %v1064 = vld [vmem:[#allocation12 + $0x530] sm:$0xff]
    %v1065 = vld [vmem:[#allocation12 + $0x538] sm:$0xff]
    %v1066 = vld [vmem:[#allocation12 + $0x540] sm:$0xff]
    %v1067 = vld [vmem:[#allocation12 + $0x548] sm:$0xff]
    %v1068 = vld [vmem:[#allocation12 + $0x550] sm:$0xff]
    %v1069 = vld [vmem:[#allocation12 + $0x558] sm:$0xff]
    %v1070 = vld [vmem:[#allocation12 + $0x560] sm:$0xff]
    %v1071 = vld [vmem:[#allocation12 + $0x568] sm:$0xff]
    %v1072 = vld [vmem:[#allocation12 + $0x570] sm:$0xff]
    %v1073 = vld [vmem:[#allocation12 + $0x578] sm:$0xff]
    %v1074 = vld [vmem:[#allocation12 + $0x580] sm:$0xff]
    %v1075 = vld [vmem:[#allocation12 + $0x588] sm:$0xff]
    %v1076 = vld [vmem:[#allocation12 + $0x590] sm:$0xff]
    %v1077 = vld [vmem:[#allocation12 + $0x598] sm:$0xff]
    %v1078 = vld [vmem:[#allocation12 + $0x5a0] sm:$0xff]
    %v1079 = vld [vmem:[#allocation12 + $0x5a8] sm:$0xff]
    %v1080 = vld [vmem:[#allocation12 + $0x5b0] sm:$0xff]
    %v1081 = vld [vmem:[#allocation12 + $0x5b8] sm:$0xff]
    %v1082 = vld [vmem:[#allocation12 + $0x5c0] sm:$0xff]
    %v1083 = vld [vmem:[#allocation12 + $0x5c8] sm:$0xff]
    %v1084 = vld [vmem:[#allocation12 + $0x5d0] sm:$0xff]
    %v1085 = vld [vmem:[#allocation12 + $0x5d8] sm:$0xff]
    %v1086 = vld [vmem:[#allocation12 + $0x5e0] sm:$0xff]
    %v1087 = vld [vmem:[#allocation12 + $0x5e8] sm:$0xff]
    %v1088 = vld [vmem:[#allocation12 + $0x5f0] sm:$0xff]
    %v1089 = vld [vmem:[#allocation12 + $0x5f8] sm:$0xff]
    %v1090 = vld [vmem:[#allocation12 + $0x600] sm:$0xff]
    %v1091 = vld [vmem:[#allocation12 + $0x608] sm:$0xff]
    %v1092 = vld [vmem:[#allocation12 + $0x610] sm:$0xff]
    %v1093 = vld [vmem:[#allocation12 + $0x618] sm:$0xff]
    %v1094 = vld [vmem:[#allocation12 + $0x620] sm:$0xff]
    %v1095 = vld [vmem:[#allocation12 + $0x628] sm:$0xff]
    %v1096 = vld [vmem:[#allocation12 + $0x630] sm:$0xff]
    %v1097 = vld [vmem:[#allocation12 + $0x638] sm:$0xff]
    %v1098 = vld [vmem:[#allocation12 + $0x640] sm:$0xff]
    %v1099 = vld [vmem:[#allocation12 + $0x648] sm:$0xff]
    %v1100 = vld [vmem:[#allocation12 + $0x650] sm:$0xff]
    %v1101 = vld [vmem:[#allocation12 + $0x658] sm:$0xff]
    %v1102 = vld [vmem:[#allocation12 + $0x660] sm:$0xff]
    %v1103 = vld [vmem:[#allocation12 + $0x668] sm:$0xff]
    %v1104 = vld [vmem:[#allocation12 + $0x670] sm:$0xff]
    %v1105 = vld [vmem:[#allocation12 + $0x678] sm:$0xff]
    %v1106 = vld [vmem:[#allocation12 + $0x680] sm:$0xff]
    %v1107 = vld [vmem:[#allocation12 + $0x688] sm:$0xff]
    %v1108 = vld [vmem:[#allocation12 + $0x690] sm:$0xff]
    %v1109 = vld [vmem:[#allocation12 + $0x698] sm:$0xff]
    %v1110 = vld [vmem:[#allocation12 + $0x6a0] sm:$0xff]
    %v1111 = vld [vmem:[#allocation12 + $0x6a8] sm:$0xff]
    %v1112 = vld [vmem:[#allocation12 + $0x6b0] sm:$0xff]
    %v1113 = vld [vmem:[#allocation12 + $0x6b8] sm:$0xff]
    %v1114 = vld [vmem:[#allocation12 + $0x6c0] sm:$0xff]
    %v1115 = vld [vmem:[#allocation12 + $0x6c8] sm:$0xff]
    %v1116 = vld [vmem:[#allocation12 + $0x6d0] sm:$0xff]
    %v1117 = vld [vmem:[#allocation12 + $0x6d8] sm:$0xff]
    %v1118 = vld [vmem:[#allocation12 + $0x6e0] sm:$0xff]
    %v1119 = vld [vmem:[#allocation12 + $0x6e8] sm:$0xff]
    %v1120 = vld [vmem:[#allocation12 + $0x6f0] sm:$0xff]
    %v1121 = vld [vmem:[#allocation12 + $0x6f8] sm:$0xff]
    %v1122 = vld [vmem:[#allocation12 + $0x700] sm:$0xff]
    %v1123 = vld [vmem:[#allocation12 + $0x708] sm:$0xff]
    %v1124 = vld [vmem:[#allocation12 + $0x710] sm:$0xff]
    %v1125 = vld [vmem:[#allocation12 + $0x718] sm:$0xff]
    %v1126 = vld [vmem:[#allocation12 + $0x720] sm:$0xff]
    %v1127 = vld [vmem:[#allocation12 + $0x728] sm:$0xff]
    %v1128 = vld [vmem:[#allocation12 + $0x730] sm:$0xff]
    %v1129 = vld [vmem:[#allocation12 + $0x738] sm:$0xff]
    %v1130 = vld [vmem:[#allocation12 + $0x740] sm:$0xff]
    %v1131 = vld [vmem:[#allocation12 + $0x748] sm:$0xff]
    %v1132 = vld [vmem:[#allocation12 + $0x750] sm:$0xff]
    %v1133 = vld [vmem:[#allocation12 + $0x758] sm:$0xff]
    %v1134 = vld [vmem:[#allocation12 + $0x760] sm:$0xff]
    %v1135 = vld [vmem:[#allocation12 + $0x768] sm:$0xff]
    %v1136 = vld [vmem:[#allocation12 + $0x770] sm:$0xff]
    %v1137 = vld [vmem:[#allocation12 + $0x778] sm:$0xff]
    %v1138 = vld [vmem:[#allocation12 + $0x780] sm:$0xff]
    %v1139 = vld [vmem:[#allocation12 + $0x788] sm:$0xff]
    %v1140 = vld [vmem:[#allocation12 + $0x790] sm:$0xff]
    %v1141 = vld [vmem:[#allocation12 + $0x798] sm:$0xff]
    %v1142 = vld [vmem:[#allocation12 + $0x7a0] sm:$0xff]
    %v1143 = vld [vmem:[#allocation12 + $0x7a8] sm:$0xff]
    %v1144 = vld [vmem:[#allocation12 + $0x7b0] sm:$0xff]
    %v1145 = vld [vmem:[#allocation12 + $0x7b8] sm:$0xff]
    %v1146 = vld [vmem:[#allocation12 + $0x7c0] sm:$0xff]
    %v1147 = vld [vmem:[#allocation12 + $0x7c8] sm:$0xff]
    %v1148 = vld [vmem:[#allocation12 + $0x7d0] sm:$0xff]
    %v1149 = vld [vmem:[#allocation12 + $0x7d8] sm:$0xff]
    %v1150 = vld [vmem:[#allocation12 + $0x7e0] sm:$0xff]
    %v1151 = vld [vmem:[#allocation12 + $0x7e8] sm:$0xff]
    %v1152 = vld [vmem:[#allocation12 + $0x7f0] sm:$0xff]
    %v1153 = vld [vmem:[#allocation12 + $0x7f8] sm:$0xff]
    %v1154 = vld [vmem:[#allocation13] sm:$0xff]
    %v1156 = vlaneseq
    %v1157 = vshrl.u32 %v1156, 7
    %v1158 = vsub.s32 0, %v1157
    %v1159 = vrot.slane %v1154, %v1158
    %v1160 = vlaneseq
    %v1161 = vshrl.u32 %v1160, 7
    %v1162 = vsub.s32 1, %v1161
    %v1163 = vrot.slane %v1154, %v1162
    %v1164 = vlaneseq
    %v1165 = vshrl.u32 %v1164, 7
    %v1166 = vsub.s32 2, %v1165
    %v1167 = vrot.slane %v1154, %v1166
    %v1168 = vlaneseq
    %v1169 = vshrl.u32 %v1168, 7
    %v1170 = vsub.s32 3, %v1169
    %v1171 = vrot.slane %v1154, %v1170
    %v1172 = vlaneseq
    %v1173 = vshrl.u32 %v1172, 7
    %v1174 = vsub.s32 4, %v1173
    %v1175 = vrot.slane %v1154, %v1174
    %v1176 = vlaneseq
    %v1177 = vshrl.u32 %v1176, 7
    %v1178 = vsub.s32 5, %v1177
    %v1179 = vrot.slane %v1154, %v1178
    %v1180 = vlaneseq
    %v1181 = vshrl.u32 %v1180, 7
    %v1182 = vsub.s32 6, %v1181
    %v1183 = vrot.slane %v1154, %v1182
    %v1184 = vlaneseq
    %v1185 = vshrl.u32 %v1184, 7
    %v1186 = vsub.s32 7, %v1185
    %v1187 = vrot.slane %v1154, %v1186
    %v1452 = vunpack.c.l.b16 %v898
    %v1453 = vunpack.c.h.b16 %v898
    %v1454 = vunpack.c.l.b16 %v899
    %v1455 = vunpack.c.h.b16 %v899
    %v1456 = vunpack.c.l.b16 %v900
    %v1457 = vunpack.c.h.b16 %v900
    %v1458 = vunpack.c.l.b16 %v901
    %v1459 = vunpack.c.h.b16 %v901
    %v1460 = vunpack.c.l.b16 %v902
    %v1461 = vunpack.c.h.b16 %v902
    %v1462 = vunpack.c.l.b16 %v903
    %v1463 = vunpack.c.h.b16 %v903
    %v1464 = vunpack.c.l.b16 %v904
    %v1465 = vunpack.c.h.b16 %v904
    %v1466 = vunpack.c.l.b16 %v905
    %v1467 = vunpack.c.h.b16 %v905
    %v1468 = vunpack.c.l.b16 %v906
    %v1469 = vunpack.c.h.b16 %v906
    %v1470 = vunpack.c.l.b16 %v907
    %v1471 = vunpack.c.h.b16 %v907
    %v1472 = vunpack.c.l.b16 %v908
    %v1473 = vunpack.c.h.b16 %v908
    %v1474 = vunpack.c.l.b16 %v909
    %v1475 = vunpack.c.h.b16 %v909
    %v1476 = vunpack.c.l.b16 %v910
    %v1477 = vunpack.c.h.b16 %v910
    %v1478 = vunpack.c.l.b16 %v911
    %v1479 = vunpack.c.h.b16 %v911
    %v1480 = vunpack.c.l.b16 %v912
    %v1481 = vunpack.c.h.b16 %v912
    %v1482 = vunpack.c.l.b16 %v913
    %v1483 = vunpack.c.h.b16 %v913
    %v1484 = vunpack.c.l.b16 %v914
    %v1485 = vunpack.c.h.b16 %v914
    %v1486 = vunpack.c.l.b16 %v915
    %v1487 = vunpack.c.h.b16 %v915
    %v1488 = vunpack.c.l.b16 %v916
    %v1489 = vunpack.c.h.b16 %v916
    %v1490 = vunpack.c.l.b16 %v917
    %v1491 = vunpack.c.h.b16 %v917
    %v1492 = vunpack.c.l.b16 %v918
    %v1493 = vunpack.c.h.b16 %v918
    %v1494 = vunpack.c.l.b16 %v919
    %v1495 = vunpack.c.h.b16 %v919
    %v1496 = vunpack.c.l.b16 %v920
    %v1497 = vunpack.c.h.b16 %v920
    %v1498 = vunpack.c.l.b16 %v921
    %v1499 = vunpack.c.h.b16 %v921
    %v1500 = vunpack.c.l.b16 %v922
    %v1501 = vunpack.c.h.b16 %v922
    %v1502 = vunpack.c.l.b16 %v923
    %v1503 = vunpack.c.h.b16 %v923
    %v1504 = vunpack.c.l.b16 %v924
    %v1505 = vunpack.c.h.b16 %v924
    %v1506 = vunpack.c.l.b16 %v925
    %v1507 = vunpack.c.h.b16 %v925
    %v1508 = vunpack.c.l.b16 %v926
    %v1509 = vunpack.c.h.b16 %v926
    %v1510 = vunpack.c.l.b16 %v927
    %v1511 = vunpack.c.h.b16 %v927
    %v1512 = vunpack.c.l.b16 %v928
    %v1513 = vunpack.c.h.b16 %v928
    %v1514 = vunpack.c.l.b16 %v929
    %v1515 = vunpack.c.h.b16 %v929
    %v1516 = vunpack.c.l.b16 %v930
    %v1517 = vunpack.c.h.b16 %v930
    %v1518 = vunpack.c.l.b16 %v931
    %v1519 = vunpack.c.h.b16 %v931
    %v1520 = vunpack.c.l.b16 %v932
    %v1521 = vunpack.c.h.b16 %v932
    %v1522 = vunpack.c.l.b16 %v933
    %v1523 = vunpack.c.h.b16 %v933
    %v1524 = vunpack.c.l.b16 %v934
    %v1525 = vunpack.c.h.b16 %v934
    %v1526 = vunpack.c.l.b16 %v935
    %v1527 = vunpack.c.h.b16 %v935
    %v1528 = vunpack.c.l.b16 %v936
    %v1529 = vunpack.c.h.b16 %v936
    %v1530 = vunpack.c.l.b16 %v937
    %v1531 = vunpack.c.h.b16 %v937
    %v1532 = vunpack.c.l.b16 %v938
    %v1533 = vunpack.c.h.b16 %v938
    %v1534 = vunpack.c.l.b16 %v939
    %v1535 = vunpack.c.h.b16 %v939
    %v1536 = vunpack.c.l.b16 %v940
    %v1537 = vunpack.c.h.b16 %v940
    %v1538 = vunpack.c.l.b16 %v941
    %v1539 = vunpack.c.h.b16 %v941
    %v1540 = vunpack.c.l.b16 %v942
    %v1541 = vunpack.c.h.b16 %v942
    %v1542 = vunpack.c.l.b16 %v943
    %v1543 = vunpack.c.h.b16 %v943
    %v1544 = vunpack.c.l.b16 %v944
    %v1545 = vunpack.c.h.b16 %v944
    %v1546 = vunpack.c.l.b16 %v945
    %v1547 = vunpack.c.h.b16 %v945
    %v1548 = vunpack.c.l.b16 %v946
    %v1549 = vunpack.c.h.b16 %v946
    %v1550 = vunpack.c.l.b16 %v947
    %v1551 = vunpack.c.h.b16 %v947
    %v1552 = vunpack.c.l.b16 %v948
    %v1553 = vunpack.c.h.b16 %v948
    %v1554 = vunpack.c.l.b16 %v949
    %v1555 = vunpack.c.h.b16 %v949
    %v1556 = vunpack.c.l.b16 %v950
    %v1557 = vunpack.c.h.b16 %v950
    %v1558 = vunpack.c.l.b16 %v951
    %v1559 = vunpack.c.h.b16 %v951
    %v1560 = vunpack.c.l.b16 %v952
    %v1561 = vunpack.c.h.b16 %v952
    %v1562 = vunpack.c.l.b16 %v953
    %v1563 = vunpack.c.h.b16 %v953
    %v1564 = vunpack.c.l.b16 %v954
    %v1565 = vunpack.c.h.b16 %v954
    %v1566 = vunpack.c.l.b16 %v955
    %v1567 = vunpack.c.h.b16 %v955
    %v1568 = vunpack.c.l.b16 %v956
    %v1569 = vunpack.c.h.b16 %v956
    %v1570 = vunpack.c.l.b16 %v957
    %v1571 = vunpack.c.h.b16 %v957
    %v1572 = vunpack.c.l.b16 %v958
    %v1573 = vunpack.c.h.b16 %v958
    %v1574 = vunpack.c.l.b16 %v959
    %v1575 = vunpack.c.h.b16 %v959
    %v1576 = vunpack.c.l.b16 %v960
    %v1577 = vunpack.c.h.b16 %v960
    %v1578 = vunpack.c.l.b16 %v961
    %v1579 = vunpack.c.h.b16 %v961
    %v1580 = vunpack.c.l.b16 %v962
    %v1581 = vunpack.c.h.b16 %v962
    %v1582 = vunpack.c.l.b16 %v963
    %v1583 = vunpack.c.h.b16 %v963
    %v1584 = vunpack.c.l.b16 %v964
    %v1585 = vunpack.c.h.b16 %v964
    %v1586 = vunpack.c.l.b16 %v965
    %v1587 = vunpack.c.h.b16 %v965
    %v1588 = vunpack.c.l.b16 %v966
    %v1589 = vunpack.c.h.b16 %v966
    %v1590 = vunpack.c.l.b16 %v967
    %v1591 = vunpack.c.h.b16 %v967
    %v1592 = vunpack.c.l.b16 %v968
    %v1593 = vunpack.c.h.b16 %v968
    %v1594 = vunpack.c.l.b16 %v969
    %v1595 = vunpack.c.h.b16 %v969
    %v1596 = vunpack.c.l.b16 %v970
    %v1597 = vunpack.c.h.b16 %v970
    %v1598 = vunpack.c.l.b16 %v971
    %v1599 = vunpack.c.h.b16 %v971
    %v1600 = vunpack.c.l.b16 %v972
    %v1601 = vunpack.c.h.b16 %v972
    %v1602 = vunpack.c.l.b16 %v973
    %v1603 = vunpack.c.h.b16 %v973
    %v1604 = vunpack.c.l.b16 %v974
    %v1605 = vunpack.c.h.b16 %v974
    %v1606 = vunpack.c.l.b16 %v975
    %v1607 = vunpack.c.h.b16 %v975
    %v1608 = vunpack.c.l.b16 %v976
    %v1609 = vunpack.c.h.b16 %v976
    %v1610 = vunpack.c.l.b16 %v977
    %v1611 = vunpack.c.h.b16 %v977
    %v1612 = vunpack.c.l.b16 %v978
    %v1613 = vunpack.c.h.b16 %v978
    %v1614 = vunpack.c.l.b16 %v979
    %v1615 = vunpack.c.h.b16 %v979
    %v1616 = vunpack.c.l.b16 %v980
    %v1617 = vunpack.c.h.b16 %v980
    %v1618 = vunpack.c.l.b16 %v981
    %v1619 = vunpack.c.h.b16 %v981
    %v1620 = vunpack.c.l.b16 %v982
    %v1621 = vunpack.c.h.b16 %v982
    %v1622 = vunpack.c.l.b16 %v983
    %v1623 = vunpack.c.h.b16 %v983
    %v1624 = vunpack.c.l.b16 %v984
    %v1625 = vunpack.c.h.b16 %v984
    %v1626 = vunpack.c.l.b16 %v985
    %v1627 = vunpack.c.h.b16 %v985
    %v1628 = vunpack.c.l.b16 %v986
    %v1629 = vunpack.c.h.b16 %v986
    %v1630 = vunpack.c.l.b16 %v987
    %v1631 = vunpack.c.h.b16 %v987
    %v1632 = vunpack.c.l.b16 %v988
    %v1633 = vunpack.c.h.b16 %v988
    %v1634 = vunpack.c.l.b16 %v989
    %v1635 = vunpack.c.h.b16 %v989
    %v1636 = vunpack.c.l.b16 %v990
    %v1637 = vunpack.c.h.b16 %v990
    %v1638 = vunpack.c.l.b16 %v991
    %v1639 = vunpack.c.h.b16 %v991
    %v1640 = vunpack.c.l.b16 %v992
    %v1641 = vunpack.c.h.b16 %v992
    %v1642 = vunpack.c.l.b16 %v993
    %v1643 = vunpack.c.h.b16 %v993
    %v1644 = vunpack.c.l.b16 %v994
    %v1645 = vunpack.c.h.b16 %v994
    %v1646 = vunpack.c.l.b16 %v995
    %v1647 = vunpack.c.h.b16 %v995
    %v1648 = vunpack.c.l.b16 %v996
    %v1649 = vunpack.c.h.b16 %v996
    %v1650 = vunpack.c.l.b16 %v997
    %v1651 = vunpack.c.h.b16 %v997
    %v1652 = vunpack.c.l.b16 %v998
    %v1653 = vunpack.c.h.b16 %v998
    %v1654 = vunpack.c.l.b16 %v999
    %v1655 = vunpack.c.h.b16 %v999
    %v1656 = vunpack.c.l.b16 %v1000
    %v1657 = vunpack.c.h.b16 %v1000
    %v1658 = vunpack.c.l.b16 %v1001
    %v1659 = vunpack.c.h.b16 %v1001
    %v1660 = vunpack.c.l.b16 %v1002
    %v1661 = vunpack.c.h.b16 %v1002
    %v1662 = vunpack.c.l.b16 %v1003
    %v1663 = vunpack.c.h.b16 %v1003
    %v1664 = vunpack.c.l.b16 %v1004
    %v1665 = vunpack.c.h.b16 %v1004
    %v1666 = vunpack.c.l.b16 %v1005
    %v1667 = vunpack.c.h.b16 %v1005
    %v1668 = vunpack.c.l.b16 %v1006
    %v1669 = vunpack.c.h.b16 %v1006
    %v1670 = vunpack.c.l.b16 %v1007
    %v1671 = vunpack.c.h.b16 %v1007
    %v1672 = vunpack.c.l.b16 %v1008
    %v1673 = vunpack.c.h.b16 %v1008
    %v1674 = vunpack.c.l.b16 %v1009
    %v1675 = vunpack.c.h.b16 %v1009
    %v1676 = vunpack.c.l.b16 %v1010
    %v1677 = vunpack.c.h.b16 %v1010
    %v1678 = vunpack.c.l.b16 %v1011
    %v1679 = vunpack.c.h.b16 %v1011
    %v1680 = vunpack.c.l.b16 %v1012
    %v1681 = vunpack.c.h.b16 %v1012
    %v1682 = vunpack.c.l.b16 %v1013
    %v1683 = vunpack.c.h.b16 %v1013
    %v1684 = vunpack.c.l.b16 %v1014
    %v1685 = vunpack.c.h.b16 %v1014
    %v1686 = vunpack.c.l.b16 %v1015
    %v1687 = vunpack.c.h.b16 %v1015
    %v1688 = vunpack.c.l.b16 %v1016
    %v1689 = vunpack.c.h.b16 %v1016
    %v1690 = vunpack.c.l.b16 %v1017
    %v1691 = vunpack.c.h.b16 %v1017
    %v1692 = vunpack.c.l.b16 %v1018
    %v1693 = vunpack.c.h.b16 %v1018
    %v1694 = vunpack.c.l.b16 %v1019
    %v1695 = vunpack.c.h.b16 %v1019
    %v1696 = vunpack.c.l.b16 %v1020
    %v1697 = vunpack.c.h.b16 %v1020
    %v1698 = vunpack.c.l.b16 %v1021
    %v1699 = vunpack.c.h.b16 %v1021
    %v1700 = vunpack.c.l.b16 %v1022
    %v1701 = vunpack.c.h.b16 %v1022
    %v1702 = vunpack.c.l.b16 %v1023
    %v1703 = vunpack.c.h.b16 %v1023
    %v1704 = vunpack.c.l.b16 %v1024
    %v1705 = vunpack.c.h.b16 %v1024
    %v1706 = vunpack.c.l.b16 %v1025
    %v1707 = vunpack.c.h.b16 %v1025
    %v1708 = vunpack.c.l.b16 %v1026
    %v1709 = vunpack.c.h.b16 %v1026
    %v1710 = vunpack.c.l.b16 %v1027
    %v1711 = vunpack.c.h.b16 %v1027
    %v1712 = vunpack.c.l.b16 %v1028
    %v1713 = vunpack.c.h.b16 %v1028
    %v1714 = vunpack.c.l.b16 %v1029
    %v1715 = vunpack.c.h.b16 %v1029
    %v1716 = vunpack.c.l.b16 %v1030
    %v1717 = vunpack.c.h.b16 %v1030
    %v1718 = vunpack.c.l.b16 %v1031
    %v1719 = vunpack.c.h.b16 %v1031
    %v1720 = vunpack.c.l.b16 %v1032
    %v1721 = vunpack.c.h.b16 %v1032
    %v1722 = vunpack.c.l.b16 %v1033
    %v1723 = vunpack.c.h.b16 %v1033
    %v1724 = vunpack.c.l.b16 %v1034
    %v1725 = vunpack.c.h.b16 %v1034
    %v1726 = vunpack.c.l.b16 %v1035
    %v1727 = vunpack.c.h.b16 %v1035
    %v1728 = vunpack.c.l.b16 %v1036
    %v1729 = vunpack.c.h.b16 %v1036
    %v1730 = vunpack.c.l.b16 %v1037
    %v1731 = vunpack.c.h.b16 %v1037
    %v1732 = vunpack.c.l.b16 %v1038
    %v1733 = vunpack.c.h.b16 %v1038
    %v1734 = vunpack.c.l.b16 %v1039
    %v1735 = vunpack.c.h.b16 %v1039
    %v1736 = vunpack.c.l.b16 %v1040
    %v1737 = vunpack.c.h.b16 %v1040
    %v1738 = vunpack.c.l.b16 %v1041
    %v1739 = vunpack.c.h.b16 %v1041
    %v1740 = vunpack.c.l.b16 %v1042
    %v1741 = vunpack.c.h.b16 %v1042
    %v1742 = vunpack.c.l.b16 %v1043
    %v1743 = vunpack.c.h.b16 %v1043
    %v1744 = vunpack.c.l.b16 %v1044
    %v1745 = vunpack.c.h.b16 %v1044
    %v1746 = vunpack.c.l.b16 %v1045
    %v1747 = vunpack.c.h.b16 %v1045
    %v1748 = vunpack.c.l.b16 %v1046
    %v1749 = vunpack.c.h.b16 %v1046
    %v1750 = vunpack.c.l.b16 %v1047
    %v1751 = vunpack.c.h.b16 %v1047
    %v1752 = vunpack.c.l.b16 %v1048
    %v1753 = vunpack.c.h.b16 %v1048
    %v1754 = vunpack.c.l.b16 %v1049
    %v1755 = vunpack.c.h.b16 %v1049
    %v1756 = vunpack.c.l.b16 %v1050
    %v1757 = vunpack.c.h.b16 %v1050
    %v1758 = vunpack.c.l.b16 %v1051
    %v1759 = vunpack.c.h.b16 %v1051
    %v1760 = vunpack.c.l.b16 %v1052
    %v1761 = vunpack.c.h.b16 %v1052
    %v1762 = vunpack.c.l.b16 %v1053
    %v1763 = vunpack.c.h.b16 %v1053
    %v1764 = vunpack.c.l.b16 %v1054
    %v1765 = vunpack.c.h.b16 %v1054
    %v1766 = vunpack.c.l.b16 %v1055
    %v1767 = vunpack.c.h.b16 %v1055
    %v1768 = vunpack.c.l.b16 %v1056
    %v1769 = vunpack.c.h.b16 %v1056
    %v1770 = vunpack.c.l.b16 %v1057
    %v1771 = vunpack.c.h.b16 %v1057
    %v1772 = vunpack.c.l.b16 %v1058
    %v1773 = vunpack.c.h.b16 %v1058
    %v1774 = vunpack.c.l.b16 %v1059
    %v1775 = vunpack.c.h.b16 %v1059
    %v1776 = vunpack.c.l.b16 %v1060
    %v1777 = vunpack.c.h.b16 %v1060
    %v1778 = vunpack.c.l.b16 %v1061
    %v1779 = vunpack.c.h.b16 %v1061
    %v1780 = vunpack.c.l.b16 %v1062
    %v1781 = vunpack.c.h.b16 %v1062
    %v1782 = vunpack.c.l.b16 %v1063
    %v1783 = vunpack.c.h.b16 %v1063
    %v1784 = vunpack.c.l.b16 %v1064
    %v1785 = vunpack.c.h.b16 %v1064
    %v1786 = vunpack.c.l.b16 %v1065
    %v1787 = vunpack.c.h.b16 %v1065
    %v1788 = vunpack.c.l.b16 %v1066
    %v1789 = vunpack.c.h.b16 %v1066
    %v1790 = vunpack.c.l.b16 %v1067
    %v1791 = vunpack.c.h.b16 %v1067
    %v1792 = vunpack.c.l.b16 %v1068
    %v1793 = vunpack.c.h.b16 %v1068
    %v1794 = vunpack.c.l.b16 %v1069
    %v1795 = vunpack.c.h.b16 %v1069
    %v1796 = vunpack.c.l.b16 %v1070
    %v1797 = vunpack.c.h.b16 %v1070
    %v1798 = vunpack.c.l.b16 %v1071
    %v1799 = vunpack.c.h.b16 %v1071
    %v1800 = vunpack.c.l.b16 %v1072
    %v1801 = vunpack.c.h.b16 %v1072
    %v1802 = vunpack.c.l.b16 %v1073
    %v1803 = vunpack.c.h.b16 %v1073
    %v1804 = vunpack.c.l.b16 %v1074
    %v1805 = vunpack.c.h.b16 %v1074
    %v1806 = vunpack.c.l.b16 %v1075
    %v1807 = vunpack.c.h.b16 %v1075
    %v1808 = vunpack.c.l.b16 %v1076
    %v1809 = vunpack.c.h.b16 %v1076
    %v1810 = vunpack.c.l.b16 %v1077
    %v1811 = vunpack.c.h.b16 %v1077
    %v1812 = vunpack.c.l.b16 %v1078
    %v1813 = vunpack.c.h.b16 %v1078
    %v1814 = vunpack.c.l.b16 %v1079
    %v1815 = vunpack.c.h.b16 %v1079
    %v1816 = vunpack.c.l.b16 %v1080
    %v1817 = vunpack.c.h.b16 %v1080
    %v1818 = vunpack.c.l.b16 %v1081
    %v1819 = vunpack.c.h.b16 %v1081
    %v1820 = vunpack.c.l.b16 %v1082
    %v1821 = vunpack.c.h.b16 %v1082
    %v1822 = vunpack.c.l.b16 %v1083
    %v1823 = vunpack.c.h.b16 %v1083
    %v1824 = vunpack.c.l.b16 %v1084
    %v1825 = vunpack.c.h.b16 %v1084
    %v1826 = vunpack.c.l.b16 %v1085
    %v1827 = vunpack.c.h.b16 %v1085
    %v1828 = vunpack.c.l.b16 %v1086
    %v1829 = vunpack.c.h.b16 %v1086
    %v1830 = vunpack.c.l.b16 %v1087
    %v1831 = vunpack.c.h.b16 %v1087
    %v1832 = vunpack.c.l.b16 %v1088
    %v1833 = vunpack.c.h.b16 %v1088
    %v1834 = vunpack.c.l.b16 %v1089
    %v1835 = vunpack.c.h.b16 %v1089
    %v1836 = vunpack.c.l.b16 %v1090
    %v1837 = vunpack.c.h.b16 %v1090
    %v1838 = vunpack.c.l.b16 %v1091
    %v1839 = vunpack.c.h.b16 %v1091
    %v1840 = vunpack.c.l.b16 %v1092
    %v1841 = vunpack.c.h.b16 %v1092
    %v1842 = vunpack.c.l.b16 %v1093
    %v1843 = vunpack.c.h.b16 %v1093
    %v1844 = vunpack.c.l.b16 %v1094
    %v1845 = vunpack.c.h.b16 %v1094
    %v1846 = vunpack.c.l.b16 %v1095
    %v1847 = vunpack.c.h.b16 %v1095
    %v1848 = vunpack.c.l.b16 %v1096
    %v1849 = vunpack.c.h.b16 %v1096
    %v1850 = vunpack.c.l.b16 %v1097
    %v1851 = vunpack.c.h.b16 %v1097
    %v1852 = vunpack.c.l.b16 %v1098
    %v1853 = vunpack.c.h.b16 %v1098
    %v1854 = vunpack.c.l.b16 %v1099
    %v1855 = vunpack.c.h.b16 %v1099
    %v1856 = vunpack.c.l.b16 %v1100
    %v1857 = vunpack.c.h.b16 %v1100
    %v1858 = vunpack.c.l.b16 %v1101
    %v1859 = vunpack.c.h.b16 %v1101
    %v1860 = vunpack.c.l.b16 %v1102
    %v1861 = vunpack.c.h.b16 %v1102
    %v1862 = vunpack.c.l.b16 %v1103
    %v1863 = vunpack.c.h.b16 %v1103
    %v1864 = vunpack.c.l.b16 %v1104
    %v1865 = vunpack.c.h.b16 %v1104
    %v1866 = vunpack.c.l.b16 %v1105
    %v1867 = vunpack.c.h.b16 %v1105
    %v1868 = vunpack.c.l.b16 %v1106
    %v1869 = vunpack.c.h.b16 %v1106
    %v1870 = vunpack.c.l.b16 %v1107
    %v1871 = vunpack.c.h.b16 %v1107
    %v1872 = vunpack.c.l.b16 %v1108
    %v1873 = vunpack.c.h.b16 %v1108
    %v1874 = vunpack.c.l.b16 %v1109
    %v1875 = vunpack.c.h.b16 %v1109
    %v1876 = vunpack.c.l.b16 %v1110
    %v1877 = vunpack.c.h.b16 %v1110
    %v1878 = vunpack.c.l.b16 %v1111
    %v1879 = vunpack.c.h.b16 %v1111
    %v1880 = vunpack.c.l.b16 %v1112
    %v1881 = vunpack.c.h.b16 %v1112
    %v1882 = vunpack.c.l.b16 %v1113
    %v1883 = vunpack.c.h.b16 %v1113
    %v1884 = vunpack.c.l.b16 %v1114
    %v1885 = vunpack.c.h.b16 %v1114
    %v1886 = vunpack.c.l.b16 %v1115
    %v1887 = vunpack.c.h.b16 %v1115
    %v1888 = vunpack.c.l.b16 %v1116
    %v1889 = vunpack.c.h.b16 %v1116
    %v1890 = vunpack.c.l.b16 %v1117
    %v1891 = vunpack.c.h.b16 %v1117
    %v1892 = vunpack.c.l.b16 %v1118
    %v1893 = vunpack.c.h.b16 %v1118
    %v1894 = vunpack.c.l.b16 %v1119
    %v1895 = vunpack.c.h.b16 %v1119
    %v1896 = vunpack.c.l.b16 %v1120
    %v1897 = vunpack.c.h.b16 %v1120
    %v1898 = vunpack.c.l.b16 %v1121
    %v1899 = vunpack.c.h.b16 %v1121
    %v1900 = vunpack.c.l.b16 %v1122
    %v1901 = vunpack.c.h.b16 %v1122
    %v1902 = vunpack.c.l.b16 %v1123
    %v1903 = vunpack.c.h.b16 %v1123
    %v1904 = vunpack.c.l.b16 %v1124
    %v1905 = vunpack.c.h.b16 %v1124
    %v1906 = vunpack.c.l.b16 %v1125
    %v1907 = vunpack.c.h.b16 %v1125
    %v1908 = vunpack.c.l.b16 %v1126
    %v1909 = vunpack.c.h.b16 %v1126
    %v1910 = vunpack.c.l.b16 %v1127
    %v1911 = vunpack.c.h.b16 %v1127
    %v1912 = vunpack.c.l.b16 %v1128
    %v1913 = vunpack.c.h.b16 %v1128
    %v1914 = vunpack.c.l.b16 %v1129
    %v1915 = vunpack.c.h.b16 %v1129
    %v1916 = vunpack.c.l.b16 %v1130
    %v1917 = vunpack.c.h.b16 %v1130
    %v1918 = vunpack.c.l.b16 %v1131
    %v1919 = vunpack.c.h.b16 %v1131
    %v1920 = vunpack.c.l.b16 %v1132
    %v1921 = vunpack.c.h.b16 %v1132
    %v1922 = vunpack.c.l.b16 %v1133
    %v1923 = vunpack.c.h.b16 %v1133
    %v1924 = vunpack.c.l.b16 %v1134
    %v1925 = vunpack.c.h.b16 %v1134
    %v1926 = vunpack.c.l.b16 %v1135
    %v1927 = vunpack.c.h.b16 %v1135
    %v1928 = vunpack.c.l.b16 %v1136
    %v1929 = vunpack.c.h.b16 %v1136
    %v1930 = vunpack.c.l.b16 %v1137
    %v1931 = vunpack.c.h.b16 %v1137
    %v1932 = vunpack.c.l.b16 %v1138
    %v1933 = vunpack.c.h.b16 %v1138
    %v1934 = vunpack.c.l.b16 %v1139
    %v1935 = vunpack.c.h.b16 %v1139
    %v1936 = vunpack.c.l.b16 %v1140
    %v1937 = vunpack.c.h.b16 %v1140
    %v1938 = vunpack.c.l.b16 %v1141
    %v1939 = vunpack.c.h.b16 %v1141
    %v1940 = vunpack.c.l.b16 %v1142
    %v1941 = vunpack.c.h.b16 %v1142
    %v1942 = vunpack.c.l.b16 %v1143
    %v1943 = vunpack.c.h.b16 %v1143
    %v1944 = vunpack.c.l.b16 %v1144
    %v1945 = vunpack.c.h.b16 %v1144
    %v1946 = vunpack.c.l.b16 %v1145
    %v1947 = vunpack.c.h.b16 %v1145
    %v1948 = vunpack.c.l.b16 %v1146
    %v1949 = vunpack.c.h.b16 %v1146
    %v1950 = vunpack.c.l.b16 %v1147
    %v1951 = vunpack.c.h.b16 %v1147
    %v1952 = vunpack.c.l.b16 %v1148
    %v1953 = vunpack.c.h.b16 %v1148
    %v1954 = vunpack.c.l.b16 %v1149
    %v1955 = vunpack.c.h.b16 %v1149
    %v1956 = vunpack.c.l.b16 %v1150
    %v1957 = vunpack.c.h.b16 %v1150
    %v1958 = vunpack.c.l.b16 %v1151
    %v1959 = vunpack.c.h.b16 %v1151
    %v1960 = vunpack.c.l.b16 %v1152
    %v1961 = vunpack.c.h.b16 %v1152
    %v1962 = vunpack.c.l.b16 %v1153
    %v1963 = vunpack.c.h.b16 %v1153
    %v1964 = vpack.c.b16 %v1460, %v1452
    %v1965 = vpack.c.b16 %v1461, %v1453
    %v1966 = vpack.c.b16 %v1462, %v1454
    %v1967 = vpack.c.b16 %v1463, %v1455
    %v1968 = vpack.c.b16 %v1464, %v1456
    %v1969 = vpack.c.b16 %v1465, %v1457
    %v1970 = vpack.c.b16 %v1466, %v1458
    %v1971 = vpack.c.b16 %v1467, %v1459
    %v1972 = vpack.c.b16 %v1476, %v1468
    %v1973 = vpack.c.b16 %v1477, %v1469
    %v1974 = vpack.c.b16 %v1478, %v1470
    %v1975 = vpack.c.b16 %v1479, %v1471
    %v1976 = vpack.c.b16 %v1480, %v1472
    %v1977 = vpack.c.b16 %v1481, %v1473
    %v1978 = vpack.c.b16 %v1482, %v1474
    %v1979 = vpack.c.b16 %v1483, %v1475
    %v1980 = vpack.c.b16 %v1492, %v1484
    %v1981 = vpack.c.b16 %v1493, %v1485
    %v1982 = vpack.c.b16 %v1494, %v1486
    %v1983 = vpack.c.b16 %v1495, %v1487
    %v1984 = vpack.c.b16 %v1496, %v1488
    %v1985 = vpack.c.b16 %v1497, %v1489
    %v1986 = vpack.c.b16 %v1498, %v1490
    %v1987 = vpack.c.b16 %v1499, %v1491
    %v1988 = vpack.c.b16 %v1508, %v1500
    %v1989 = vpack.c.b16 %v1509, %v1501
    %v1990 = vpack.c.b16 %v1510, %v1502
    %v1991 = vpack.c.b16 %v1511, %v1503
    %v1992 = vpack.c.b16 %v1512, %v1504
    %v1993 = vpack.c.b16 %v1513, %v1505
    %v1994 = vpack.c.b16 %v1514, %v1506
    %v1995 = vpack.c.b16 %v1515, %v1507
    %v1996 = vpack.c.b16 %v1524, %v1516
    %v1997 = vpack.c.b16 %v1525, %v1517
    %v1998 = vpack.c.b16 %v1526, %v1518
    %v1999 = vpack.c.b16 %v1527, %v1519
    %v2000 = vpack.c.b16 %v1528, %v1520
    %v2001 = vpack.c.b16 %v1529, %v1521
    %v2002 = vpack.c.b16 %v1530, %v1522
    %v2003 = vpack.c.b16 %v1531, %v1523
    %v2004 = vpack.c.b16 %v1540, %v1532
    %v2005 = vpack.c.b16 %v1541, %v1533
    %v2006 = vpack.c.b16 %v1542, %v1534
    %v2007 = vpack.c.b16 %v1543, %v1535
    %v2008 = vpack.c.b16 %v1544, %v1536
    %v2009 = vpack.c.b16 %v1545, %v1537
    %v2010 = vpack.c.b16 %v1546, %v1538
    %v2011 = vpack.c.b16 %v1547, %v1539
    %v2012 = vpack.c.b16 %v1556, %v1548
    %v2013 = vpack.c.b16 %v1557, %v1549
    %v2014 = vpack.c.b16 %v1558, %v1550
    %v2015 = vpack.c.b16 %v1559, %v1551
    %v2016 = vpack.c.b16 %v1560, %v1552
    %v2017 = vpack.c.b16 %v1561, %v1553
    %v2018 = vpack.c.b16 %v1562, %v1554
    %v2019 = vpack.c.b16 %v1563, %v1555
    %v2020 = vpack.c.b16 %v1572, %v1564
    %v2021 = vpack.c.b16 %v1573, %v1565
    %v2022 = vpack.c.b16 %v1574, %v1566
    %v2023 = vpack.c.b16 %v1575, %v1567
    %v2024 = vpack.c.b16 %v1576, %v1568
    %v2025 = vpack.c.b16 %v1577, %v1569
    %v2026 = vpack.c.b16 %v1578, %v1570
    %v2027 = vpack.c.b16 %v1579, %v1571
    %v2028 = vpack.c.b16 %v1588, %v1580
    %v2029 = vpack.c.b16 %v1589, %v1581
    %v2030 = vpack.c.b16 %v1590, %v1582
    %v2031 = vpack.c.b16 %v1591, %v1583
    %v2032 = vpack.c.b16 %v1592, %v1584
    %v2033 = vpack.c.b16 %v1593, %v1585
    %v2034 = vpack.c.b16 %v1594, %v1586
    %v2035 = vpack.c.b16 %v1595, %v1587
    %v2036 = vpack.c.b16 %v1604, %v1596
    %v2037 = vpack.c.b16 %v1605, %v1597
    %v2038 = vpack.c.b16 %v1606, %v1598
    %v2039 = vpack.c.b16 %v1607, %v1599
    %v2040 = vpack.c.b16 %v1608, %v1600
    %v2041 = vpack.c.b16 %v1609, %v1601
    %v2042 = vpack.c.b16 %v1610, %v1602
    %v2043 = vpack.c.b16 %v1611, %v1603
    %v2044 = vpack.c.b16 %v1620, %v1612
    %v2045 = vpack.c.b16 %v1621, %v1613
    %v2046 = vpack.c.b16 %v1622, %v1614
    %v2047 = vpack.c.b16 %v1623, %v1615
    %v2048 = vpack.c.b16 %v1624, %v1616
    %v2049 = vpack.c.b16 %v1625, %v1617
    %v2050 = vpack.c.b16 %v1626, %v1618
    %v2051 = vpack.c.b16 %v1627, %v1619
    %v2052 = vpack.c.b16 %v1636, %v1628
    %v2053 = vpack.c.b16 %v1637, %v1629
    %v2054 = vpack.c.b16 %v1638, %v1630
    %v2055 = vpack.c.b16 %v1639, %v1631
    %v2056 = vpack.c.b16 %v1640, %v1632
    %v2057 = vpack.c.b16 %v1641, %v1633
    %v2058 = vpack.c.b16 %v1642, %v1634
    %v2059 = vpack.c.b16 %v1643, %v1635
    %v2060 = vpack.c.b16 %v1652, %v1644
    %v2061 = vpack.c.b16 %v1653, %v1645
    %v2062 = vpack.c.b16 %v1654, %v1646
    %v2063 = vpack.c.b16 %v1655, %v1647
    %v2064 = vpack.c.b16 %v1656, %v1648
    %v2065 = vpack.c.b16 %v1657, %v1649
    %v2066 = vpack.c.b16 %v1658, %v1650
    %v2067 = vpack.c.b16 %v1659, %v1651
    %v2068 = vpack.c.b16 %v1668, %v1660
    %v2069 = vpack.c.b16 %v1669, %v1661
    %v2070 = vpack.c.b16 %v1670, %v1662
    %v2071 = vpack.c.b16 %v1671, %v1663
    %v2072 = vpack.c.b16 %v1672, %v1664
    %v2073 = vpack.c.b16 %v1673, %v1665
    %v2074 = vpack.c.b16 %v1674, %v1666
    %v2075 = vpack.c.b16 %v1675, %v1667
    %v2076 = vpack.c.b16 %v1684, %v1676
    %v2077 = vpack.c.b16 %v1685, %v1677
    %v2078 = vpack.c.b16 %v1686, %v1678
    %v2079 = vpack.c.b16 %v1687, %v1679
    %v2080 = vpack.c.b16 %v1688, %v1680
    %v2081 = vpack.c.b16 %v1689, %v1681
    %v2082 = vpack.c.b16 %v1690, %v1682
    %v2083 = vpack.c.b16 %v1691, %v1683
    %v2084 = vpack.c.b16 %v1700, %v1692
    %v2085 = vpack.c.b16 %v1701, %v1693
    %v2086 = vpack.c.b16 %v1702, %v1694
    %v2087 = vpack.c.b16 %v1703, %v1695
    %v2088 = vpack.c.b16 %v1704, %v1696
    %v2089 = vpack.c.b16 %v1705, %v1697
    %v2090 = vpack.c.b16 %v1706, %v1698
    %v2091 = vpack.c.b16 %v1707, %v1699
    %v2092 = vpack.c.b16 %v1716, %v1708
    %v2093 = vpack.c.b16 %v1717, %v1709
    %v2094 = vpack.c.b16 %v1718, %v1710
    %v2095 = vpack.c.b16 %v1719, %v1711
    %v2096 = vpack.c.b16 %v1720, %v1712
    %v2097 = vpack.c.b16 %v1721, %v1713
    %v2098 = vpack.c.b16 %v1722, %v1714
    %v2099 = vpack.c.b16 %v1723, %v1715
    %v2100 = vpack.c.b16 %v1732, %v1724
    %v2101 = vpack.c.b16 %v1733, %v1725
    %v2102 = vpack.c.b16 %v1734, %v1726
    %v2103 = vpack.c.b16 %v1735, %v1727
    %v2104 = vpack.c.b16 %v1736, %v1728
    %v2105 = vpack.c.b16 %v1737, %v1729
    %v2106 = vpack.c.b16 %v1738, %v1730
    %v2107 = vpack.c.b16 %v1739, %v1731
    %v2108 = vpack.c.b16 %v1748, %v1740
    %v2109 = vpack.c.b16 %v1749, %v1741
    %v2110 = vpack.c.b16 %v1750, %v1742
    %v2111 = vpack.c.b16 %v1751, %v1743
    %v2112 = vpack.c.b16 %v1752, %v1744
    %v2113 = vpack.c.b16 %v1753, %v1745
    %v2114 = vpack.c.b16 %v1754, %v1746
    %v2115 = vpack.c.b16 %v1755, %v1747
    %v2116 = vpack.c.b16 %v1764, %v1756
    %v2117 = vpack.c.b16 %v1765, %v1757
    %v2118 = vpack.c.b16 %v1766, %v1758
    %v2119 = vpack.c.b16 %v1767, %v1759
    %v2120 = vpack.c.b16 %v1768, %v1760
    %v2121 = vpack.c.b16 %v1769, %v1761
    %v2122 = vpack.c.b16 %v1770, %v1762
    %v2123 = vpack.c.b16 %v1771, %v1763
    %v2124 = vpack.c.b16 %v1780, %v1772
    %v2125 = vpack.c.b16 %v1781, %v1773
    %v2126 = vpack.c.b16 %v1782, %v1774
    %v2127 = vpack.c.b16 %v1783, %v1775
    %v2128 = vpack.c.b16 %v1784, %v1776
    %v2129 = vpack.c.b16 %v1785, %v1777
    %v2130 = vpack.c.b16 %v1786, %v1778
    %v2131 = vpack.c.b16 %v1787, %v1779
    %v2132 = vpack.c.b16 %v1796, %v1788
    %v2133 = vpack.c.b16 %v1797, %v1789
    %v2134 = vpack.c.b16 %v1798, %v1790
    %v2135 = vpack.c.b16 %v1799, %v1791
    %v2136 = vpack.c.b16 %v1800, %v1792
    %v2137 = vpack.c.b16 %v1801, %v1793
    %v2138 = vpack.c.b16 %v1802, %v1794
    %v2139 = vpack.c.b16 %v1803, %v1795
    %v2140 = vpack.c.b16 %v1812, %v1804
    %v2141 = vpack.c.b16 %v1813, %v1805
    %v2142 = vpack.c.b16 %v1814, %v1806
    %v2143 = vpack.c.b16 %v1815, %v1807
    %v2144 = vpack.c.b16 %v1816, %v1808
    %v2145 = vpack.c.b16 %v1817, %v1809
    %v2146 = vpack.c.b16 %v1818, %v1810
    %v2147 = vpack.c.b16 %v1819, %v1811
    %v2148 = vpack.c.b16 %v1828, %v1820
    %v2149 = vpack.c.b16 %v1829, %v1821
    %v2150 = vpack.c.b16 %v1830, %v1822
    %v2151 = vpack.c.b16 %v1831, %v1823
    %v2152 = vpack.c.b16 %v1832, %v1824
    %v2153 = vpack.c.b16 %v1833, %v1825
    %v2154 = vpack.c.b16 %v1834, %v1826
    %v2155 = vpack.c.b16 %v1835, %v1827
    %v2156 = vpack.c.b16 %v1844, %v1836
    %v2157 = vpack.c.b16 %v1845, %v1837
    %v2158 = vpack.c.b16 %v1846, %v1838
    %v2159 = vpack.c.b16 %v1847, %v1839
    %v2160 = vpack.c.b16 %v1848, %v1840
    %v2161 = vpack.c.b16 %v1849, %v1841
    %v2162 = vpack.c.b16 %v1850, %v1842
    %v2163 = vpack.c.b16 %v1851, %v1843
    %v2164 = vpack.c.b16 %v1860, %v1852
    %v2165 = vpack.c.b16 %v1861, %v1853
    %v2166 = vpack.c.b16 %v1862, %v1854
    %v2167 = vpack.c.b16 %v1863, %v1855
    %v2168 = vpack.c.b16 %v1864, %v1856
    %v2169 = vpack.c.b16 %v1865, %v1857
    %v2170 = vpack.c.b16 %v1866, %v1858
    %v2171 = vpack.c.b16 %v1867, %v1859
    %v2172 = vpack.c.b16 %v1876, %v1868
    %v2173 = vpack.c.b16 %v1877, %v1869
    %v2174 = vpack.c.b16 %v1878, %v1870
    %v2175 = vpack.c.b16 %v1879, %v1871
    %v2176 = vpack.c.b16 %v1880, %v1872
    %v2177 = vpack.c.b16 %v1881, %v1873
    %v2178 = vpack.c.b16 %v1882, %v1874
    %v2179 = vpack.c.b16 %v1883, %v1875
    %v2180 = vpack.c.b16 %v1892, %v1884
    %v2181 = vpack.c.b16 %v1893, %v1885
    %v2182 = vpack.c.b16 %v1894, %v1886
    %v2183 = vpack.c.b16 %v1895, %v1887
    %v2184 = vpack.c.b16 %v1896, %v1888
    %v2185 = vpack.c.b16 %v1897, %v1889
    %v2186 = vpack.c.b16 %v1898, %v1890
    %v2187 = vpack.c.b16 %v1899, %v1891
    %v2188 = vpack.c.b16 %v1908, %v1900
    %v2189 = vpack.c.b16 %v1909, %v1901
    %v2190 = vpack.c.b16 %v1910, %v1902
    %v2191 = vpack.c.b16 %v1911, %v1903
    %v2192 = vpack.c.b16 %v1912, %v1904
    %v2193 = vpack.c.b16 %v1913, %v1905
    %v2194 = vpack.c.b16 %v1914, %v1906
    %v2195 = vpack.c.b16 %v1915, %v1907
    %v2196 = vpack.c.b16 %v1924, %v1916
    %v2197 = vpack.c.b16 %v1925, %v1917
    %v2198 = vpack.c.b16 %v1926, %v1918
    %v2199 = vpack.c.b16 %v1927, %v1919
    %v2200 = vpack.c.b16 %v1928, %v1920
    %v2201 = vpack.c.b16 %v1929, %v1921
    %v2202 = vpack.c.b16 %v1930, %v1922
    %v2203 = vpack.c.b16 %v1931, %v1923
    %v2204 = vpack.c.b16 %v1940, %v1932
    %v2205 = vpack.c.b16 %v1941, %v1933
    %v2206 = vpack.c.b16 %v1942, %v1934
    %v2207 = vpack.c.b16 %v1943, %v1935
    %v2208 = vpack.c.b16 %v1944, %v1936
    %v2209 = vpack.c.b16 %v1945, %v1937
    %v2210 = vpack.c.b16 %v1946, %v1938
    %v2211 = vpack.c.b16 %v1947, %v1939
    %v2212 = vpack.c.b16 %v1956, %v1948
    %v2213 = vpack.c.b16 %v1957, %v1949
    %v2214 = vpack.c.b16 %v1958, %v1950
    %v2215 = vpack.c.b16 %v1959, %v1951
    %v2216 = vpack.c.b16 %v1960, %v1952
    %v2217 = vpack.c.b16 %v1961, %v1953
    %v2218 = vpack.c.b16 %v1962, %v1954
    %v2219 = vpack.c.b16 %v1963, %v1955
    %2476 = vmatprep.subr.bf16.mxu0 %v2021
    %2477 = vmatpush1.bf16.msra.mxu0 %v2020
    %2478 = vmatprep.subr.bf16.mxu0 %v2013
    %2479 = vmatpush1.bf16.msra.mxu0 %v2012
    %2480 = vmatprep.subr.bf16.mxu0 %v2005
    %2481 = vmatpush1.bf16.msra.mxu0 %v2004
    %2482 = vmatprep.subr.bf16.mxu0 %v1997
    %2483 = vmatpush1.bf16.msra.mxu0 %v1996
    %2484 = vmatprep.subr.bf16.mxu0 %v1989
    %2485 = vmatpush1.bf16.msra.mxu0 %v1988
    %2486 = vmatprep.subr.bf16.mxu0 %v1981
    %2487 = vmatpush1.bf16.msra.mxu0 %v1980
    %2488 = vmatprep.subr.bf16.mxu0 %v1973
    %2489 = vmatpush1.bf16.msra.mxu0 %v1972
    %2490 = vmatprep.subr.bf16.mxu0 %v1965
    %2491 = vmatpush1.bf16.msra.mxu0 %v1964
    %2492 = vmatprep.subr.bf16.mxu0 %v2085
    %2493 = vmatpush2.bf16.msra.mxu0 %v2084
    %2494 = vmatprep.subr.bf16.mxu0 %v2077
    %2495 = vmatpush2.bf16.msra.mxu0 %v2076
    %2496 = vmatprep.subr.bf16.mxu0 %v2069
    %2497 = vmatpush2.bf16.msra.mxu0 %v2068
    %2498 = vmatprep.subr.bf16.mxu0 %v2061
    %2499 = vmatpush2.bf16.msra.mxu0 %v2060
    %2500 = vmatprep.subr.bf16.mxu0 %v2053
    %2501 = vmatpush2.bf16.msra.mxu0 %v2052
    %2502 = vmatprep.subr.bf16.mxu0 %v2045
    %2503 = vmatpush2.bf16.msra.mxu0 %v2044
    %2504 = vmatprep.subr.bf16.mxu0 %v2037
    %2505 = vmatpush2.bf16.msra.mxu0 %v2036
    %2506 = vmatprep.subr.bf16.mxu0 %v2029
    %2507 = vmatpush2.bf16.msra.mxu0 %v2028
    %2508 = vmatprep.mubr.bf16.mxu0 %v895
    %2509 = vmatmul.mubr.bf16.gmra.mxu0 %v894
    %v2510 = vpop.f32.mrf.mxu0
    %v2511 = vadd.f32 %v1159, %v2510
    %v2512 = vpop.f32.mrf.mxu0
    %v2513 = vadd.f32 %v1163, %v2512
    %v2514 = vpop.f32.mrf.mxu0
    %v2515 = vpop.f32.mrf.mxu0
    %2516 = vdwg.mxu0
    %2517 = vmatprep.subr.bf16.mxu0 %v2149
    %2518 = vmatpush1.bf16.msra.mxu0 %v2148
    %2519 = vmatprep.subr.bf16.mxu0 %v2141
    %2520 = vmatpush1.bf16.msra.mxu0 %v2140
    %2521 = vmatprep.subr.bf16.mxu0 %v2133
    %2522 = vmatpush1.bf16.msra.mxu0 %v2132
    %2523 = vmatprep.subr.bf16.mxu0 %v2125
    %2524 = vmatpush1.bf16.msra.mxu0 %v2124
    %2525 = vmatprep.subr.bf16.mxu0 %v2117
    %2526 = vmatpush1.bf16.msra.mxu0 %v2116
    %2527 = vmatprep.subr.bf16.mxu0 %v2109
    %2528 = vmatpush1.bf16.msra.mxu0 %v2108
    %2529 = vmatprep.subr.bf16.mxu0 %v2101
    %2530 = vmatpush1.bf16.msra.mxu0 %v2100
    %2531 = vmatprep.subr.bf16.mxu0 %v2093
    %2532 = vmatpush1.bf16.msra.mxu0 %v2092
    %2533 = vmatprep.subr.bf16.mxu0 %v2213
    %2534 = vmatpush2.bf16.msra.mxu0 %v2212
    %2535 = vmatprep.subr.bf16.mxu0 %v2205
    %2536 = vmatpush2.bf16.msra.mxu0 %v2204
    %2537 = vmatprep.subr.bf16.mxu0 %v2197
    %2538 = vmatpush2.bf16.msra.mxu0 %v2196
    %2539 = vmatprep.subr.bf16.mxu0 %v2189
    %2540 = vmatpush2.bf16.msra.mxu0 %v2188
    %2541 = vmatprep.subr.bf16.mxu0 %v2181
    %2542 = vmatpush2.bf16.msra.mxu0 %v2180
    %2543 = vmatprep.subr.bf16.mxu0 %v2173
    %2544 = vmatpush2.bf16.msra.mxu0 %v2172
    %2545 = vmatprep.subr.bf16.mxu0 %v2165
    %2546 = vmatpush2.bf16.msra.mxu0 %v2164
    %2547 = vmatprep.subr.bf16.mxu0 %v2157
    %2548 = vmatpush2.bf16.msra.mxu0 %v2156
    %2549 = vmatprep.mubr.bf16.mxu0 %v897
    %2550 = vmatmul.mubr.bf16.gmra.mxu0 %v896
    %v2551 = vpop.f32.mrf.mxu0
    %v2552 = vadd.f32 %v2511, %v2551
    %v2553 = vpop.f32.mrf.mxu0
    %v2554 = vadd.f32 %v2513, %v2553
    %v2555 = vpop.f32.mrf.mxu0
    %v2556 = vpop.f32.mrf.mxu0
    %2557 = vdwg.mxu0
    %2558 = vmatprep.subr.bf16.mxu0 %v2023
    %2559 = vmatpush1.bf16.msra.mxu0 %v2022
    %2560 = vmatprep.subr.bf16.mxu0 %v2015
    %2561 = vmatpush1.bf16.msra.mxu0 %v2014
    %2562 = vmatprep.subr.bf16.mxu0 %v2007
    %2563 = vmatpush1.bf16.msra.mxu0 %v2006
    %2564 = vmatprep.subr.bf16.mxu0 %v1999
    %2565 = vmatpush1.bf16.msra.mxu0 %v1998
    %2566 = vmatprep.subr.bf16.mxu0 %v1991
    %2567 = vmatpush1.bf16.msra.mxu0 %v1990
    %2568 = vmatprep.subr.bf16.mxu0 %v1983
    %2569 = vmatpush1.bf16.msra.mxu0 %v1982
    %2570 = vmatprep.subr.bf16.mxu0 %v1975
    %2571 = vmatpush1.bf16.msra.mxu0 %v1974
    %2572 = vmatprep.subr.bf16.mxu0 %v1967
    %2573 = vmatpush1.bf16.msra.mxu0 %v1966
    %2574 = vmatprep.subr.bf16.mxu0 %v2087
    %2575 = vmatpush2.bf16.msra.mxu0 %v2086
    %2576 = vmatprep.subr.bf16.mxu0 %v2079
    %2577 = vmatpush2.bf16.msra.mxu0 %v2078
    %2578 = vmatprep.subr.bf16.mxu0 %v2071
    %2579 = vmatpush2.bf16.msra.mxu0 %v2070
    %2580 = vmatprep.subr.bf16.mxu0 %v2063
    %2581 = vmatpush2.bf16.msra.mxu0 %v2062
    %2582 = vmatprep.subr.bf16.mxu0 %v2055
    %2583 = vmatpush2.bf16.msra.mxu0 %v2054
    %2584 = vmatprep.subr.bf16.mxu0 %v2047
    %2585 = vmatpush2.bf16.msra.mxu0 %v2046
    %2586 = vmatprep.subr.bf16.mxu0 %v2039
    %2587 = vmatpush2.bf16.msra.mxu0 %v2038
    %2588 = vmatprep.subr.bf16.mxu0 %v2031
    %2589 = vmatpush2.bf16.msra.mxu0 %v2030
    %2590 = vmatprep.mubr.bf16.mxu0 %v895
    %2591 = vmatmul.mubr.bf16.gmra.mxu0 %v894
    %v2592 = vpop.f32.mrf.mxu0
    %v2593 = vadd.f32 %v1167, %v2592
    %v2594 = vpop.f32.mrf.mxu0
    %v2595 = vadd.f32 %v1171, %v2594
    %v2596 = vpop.f32.mrf.mxu0
    %v2597 = vpop.f32.mrf.mxu0
    %2598 = vdwg.mxu0
    %2599 = vmatprep.subr.bf16.mxu0 %v2151
    %2600 = vmatpush1.bf16.msra.mxu0 %v2150
    %2601 = vmatprep.subr.bf16.mxu0 %v2143
    %2602 = vmatpush1.bf16.msra.mxu0 %v2142
    %2603 = vmatprep.subr.bf16.mxu0 %v2135
    %2604 = vmatpush1.bf16.msra.mxu0 %v2134
    %2605 = vmatprep.subr.bf16.mxu0 %v2127
    %2606 = vmatpush1.bf16.msra.mxu0 %v2126
    %2607 = vmatprep.subr.bf16.mxu0 %v2119
    %2608 = vmatpush1.bf16.msra.mxu0 %v2118
    %2609 = vmatprep.subr.bf16.mxu0 %v2111
    %2610 = vmatpush1.bf16.msra.mxu0 %v2110
    %2611 = vmatprep.subr.bf16.mxu0 %v2103
    %2612 = vmatpush1.bf16.msra.mxu0 %v2102
    %2613 = vmatprep.subr.bf16.mxu0 %v2095
    %2614 = vmatpush1.bf16.msra.mxu0 %v2094
    %2615 = vmatprep.subr.bf16.mxu0 %v2215
    %2616 = vmatpush2.bf16.msra.mxu0 %v2214
    %2617 = vmatprep.subr.bf16.mxu0 %v2207
    %2618 = vmatpush2.bf16.msra.mxu0 %v2206
    %2619 = vmatprep.subr.bf16.mxu0 %v2199
    %2620 = vmatpush2.bf16.msra.mxu0 %v2198
    %2621 = vmatprep.subr.bf16.mxu0 %v2191
    %2622 = vmatpush2.bf16.msra.mxu0 %v2190
    %2623 = vmatprep.subr.bf16.mxu0 %v2183
    %2624 = vmatpush2.bf16.msra.mxu0 %v2182
    %2625 = vmatprep.subr.bf16.mxu0 %v2175
    %2626 = vmatpush2.bf16.msra.mxu0 %v2174
    %2627 = vmatprep.subr.bf16.mxu0 %v2167
    %2628 = vmatpush2.bf16.msra.mxu0 %v2166
    %2629 = vmatprep.subr.bf16.mxu0 %v2159
    %2630 = vmatpush2.bf16.msra.mxu0 %v2158
    %2631 = vmatprep.mubr.bf16.mxu0 %v897
    %2632 = vmatmul.mubr.bf16.gmra.mxu0 %v896
    %v2633 = vpop.f32.mrf.mxu0
    %v2634 = vadd.f32 %v2593, %v2633
    %v2635 = vpop.f32.mrf.mxu0
    %v2636 = vadd.f32 %v2595, %v2635
    %v2637 = vpop.f32.mrf.mxu0
    %v2638 = vpop.f32.mrf.mxu0
    %2639 = vdwg.mxu0
    %2640 = vmatprep.subr.bf16.mxu0 %v2025
    %2641 = vmatpush1.bf16.msra.mxu0 %v2024
    %2642 = vmatprep.subr.bf16.mxu0 %v2017
    %2643 = vmatpush1.bf16.msra.mxu0 %v2016
    %2644 = vmatprep.subr.bf16.mxu0 %v2009
    %2645 = vmatpush1.bf16.msra.mxu0 %v2008
    %2646 = vmatprep.subr.bf16.mxu0 %v2001
    %2647 = vmatpush1.bf16.msra.mxu0 %v2000
    %2648 = vmatprep.subr.bf16.mxu0 %v1993
    %2649 = vmatpush1.bf16.msra.mxu0 %v1992
    %2650 = vmatprep.subr.bf16.mxu0 %v1985
    %2651 = vmatpush1.bf16.msra.mxu0 %v1984
    %2652 = vmatprep.subr.bf16.mxu0 %v1977
    %2653 = vmatpush1.bf16.msra.mxu0 %v1976
    %2654 = vmatprep.subr.bf16.mxu0 %v1969
    %2655 = vmatpush1.bf16.msra.mxu0 %v1968
    %2656 = vmatprep.subr.bf16.mxu0 %v2089
    %2657 = vmatpush2.bf16.msra.mxu0 %v2088
    %2658 = vmatprep.subr.bf16.mxu0 %v2081
    %2659 = vmatpush2.bf16.msra.mxu0 %v2080
    %2660 = vmatprep.subr.bf16.mxu0 %v2073
    %2661 = vmatpush2.bf16.msra.mxu0 %v2072
    %2662 = vmatprep.subr.bf16.mxu0 %v2065
    %2663 = vmatpush2.bf16.msra.mxu0 %v2064
    %2664 = vmatprep.subr.bf16.mxu0 %v2057
    %2665 = vmatpush2.bf16.msra.mxu0 %v2056
    %2666 = vmatprep.subr.bf16.mxu0 %v2049
    %2667 = vmatpush2.bf16.msra.mxu0 %v2048
    %2668 = vmatprep.subr.bf16.mxu0 %v2041
    %2669 = vmatpush2.bf16.msra.mxu0 %v2040
    %2670 = vmatprep.subr.bf16.mxu0 %v2033
    %2671 = vmatpush2.bf16.msra.mxu0 %v2032
    %2672 = vmatprep.mubr.bf16.mxu0 %v895
    %2673 = vmatmul.mubr.bf16.gmra.mxu0 %v894
    %v2674 = vpop.f32.mrf.mxu0
    %v2675 = vadd.f32 %v1175, %v2674
    %v2676 = vpop.f32.mrf.mxu0
    %v2677 = vadd.f32 %v1179, %v2676
    %v2678 = vpop.f32.mrf.mxu0
    %v2679 = vpop.f32.mrf.mxu0
    %2680 = vdwg.mxu0
    %2681 = vmatprep.subr.bf16.mxu0 %v2153
    %2682 = vmatpush1.bf16.msra.mxu0 %v2152
    %2683 = vmatprep.subr.bf16.mxu0 %v2145
    %2684 = vmatpush1.bf16.msra.mxu0 %v2144
    %2685 = vmatprep.subr.bf16.mxu0 %v2137
    %2686 = vmatpush1.bf16.msra.mxu0 %v2136
    %2687 = vmatprep.subr.bf16.mxu0 %v2129
    %2688 = vmatpush1.bf16.msra.mxu0 %v2128
    %2689 = vmatprep.subr.bf16.mxu0 %v2121
    %2690 = vmatpush1.bf16.msra.mxu0 %v2120
    %2691 = vmatprep.subr.bf16.mxu0 %v2113
    %2692 = vmatpush1.bf16.msra.mxu0 %v2112
    %2693 = vmatprep.subr.bf16.mxu0 %v2105
    %2694 = vmatpush1.bf16.msra.mxu0 %v2104
    %2695 = vmatprep.subr.bf16.mxu0 %v2097
    %2696 = vmatpush1.bf16.msra.mxu0 %v2096
    %2697 = vmatprep.subr.bf16.mxu0 %v2217
    %2698 = vmatpush2.bf16.msra.mxu0 %v2216
    %2699 = vmatprep.subr.bf16.mxu0 %v2209
    %2700 = vmatpush2.bf16.msra.mxu0 %v2208
    %2701 = vmatprep.subr.bf16.mxu0 %v2201
    %2702 = vmatpush2.bf16.msra.mxu0 %v2200
    %2703 = vmatprep.subr.bf16.mxu0 %v2193
    %2704 = vmatpush2.bf16.msra.mxu0 %v2192
    %2705 = vmatprep.subr.bf16.mxu0 %v2185
    %2706 = vmatpush2.bf16.msra.mxu0 %v2184
    %2707 = vmatprep.subr.bf16.mxu0 %v2177
    %2708 = vmatpush2.bf16.msra.mxu0 %v2176
    %2709 = vmatprep.subr.bf16.mxu0 %v2169
    %2710 = vmatpush2.bf16.msra.mxu0 %v2168
    %2711 = vmatprep.subr.bf16.mxu0 %v2161
    %2712 = vmatpush2.bf16.msra.mxu0 %v2160
    %2713 = vmatprep.mubr.bf16.mxu0 %v897
    %2714 = vmatmul.mubr.bf16.gmra.mxu0 %v896
    %v2715 = vpop.f32.mrf.mxu0
    %v2716 = vadd.f32 %v2675, %v2715
    %v2717 = vpop.f32.mrf.mxu0
    %v2718 = vadd.f32 %v2677, %v2717
    %v2719 = vpop.f32.mrf.mxu0
    %v2720 = vpop.f32.mrf.mxu0
    %2721 = vdwg.mxu0
    %2722 = vmatprep.subr.bf16.mxu0 %v2027
    %2723 = vmatpush1.bf16.msra.mxu0 %v2026
    %2724 = vmatprep.subr.bf16.mxu0 %v2019
    %2725 = vmatpush1.bf16.msra.mxu0 %v2018
    %2726 = vmatprep.subr.bf16.mxu0 %v2011
    %2727 = vmatpush1.bf16.msra.mxu0 %v2010
    %2728 = vmatprep.subr.bf16.mxu0 %v2003
    %2729 = vmatpush1.bf16.msra.mxu0 %v2002
    %2730 = vmatprep.subr.bf16.mxu0 %v1995
    %2731 = vmatpush1.bf16.msra.mxu0 %v1994
    %2732 = vmatprep.subr.bf16.mxu0 %v1987
    %2733 = vmatpush1.bf16.msra.mxu0 %v1986
    %2734 = vmatprep.subr.bf16.mxu0 %v1979
    %2735 = vmatpush1.bf16.msra.mxu0 %v1978
    %2736 = vmatprep.subr.bf16.mxu0 %v1971
    %2737 = vmatpush1.bf16.msra.mxu0 %v1970
    %2738 = vmatprep.subr.bf16.mxu0 %v2091
    %2739 = vmatpush2.bf16.msra.mxu0 %v2090
    %2740 = vmatprep.subr.bf16.mxu0 %v2083
    %2741 = vmatpush2.bf16.msra.mxu0 %v2082
    %2742 = vmatprep.subr.bf16.mxu0 %v2075
    %2743 = vmatpush2.bf16.msra.mxu0 %v2074
    %2744 = vmatprep.subr.bf16.mxu0 %v2067
    %2745 = vmatpush2.bf16.msra.mxu0 %v2066
    %2746 = vmatprep.subr.bf16.mxu0 %v2059
    %2747 = vmatpush2.bf16.msra.mxu0 %v2058
    %2748 = vmatprep.subr.bf16.mxu0 %v2051
    %2749 = vmatpush2.bf16.msra.mxu0 %v2050
    %2750 = vmatprep.subr.bf16.mxu0 %v2043
    %2751 = vmatpush2.bf16.msra.mxu0 %v2042
    %2752 = vmatprep.subr.bf16.mxu0 %v2035
    %2753 = vmatpush2.bf16.msra.mxu0 %v2034
    %2754 = vmatprep.mubr.bf16.mxu0 %v895
    %2755 = vmatmul.mubr.bf16.gmra.mxu0 %v894
    %v2756 = vpop.f32.mrf.mxu0
    %v2757 = vadd.f32 %v1183, %v2756
    %v2758 = vpop.f32.mrf.mxu0
    %v2759 = vadd.f32 %v1187, %v2758
    %v2760 = vpop.f32.mrf.mxu0
    %v2761 = vpop.f32.mrf.mxu0
    %2762 = vdwg.mxu0
    %2763 = vmatprep.subr.bf16.mxu0 %v2155
    %2764 = vmatpush1.bf16.msra.mxu0 %v2154
    %2765 = vmatprep.subr.bf16.mxu0 %v2147
    %2766 = vmatpush1.bf16.msra.mxu0 %v2146
    %2767 = vmatprep.subr.bf16.mxu0 %v2139
    %2768 = vmatpush1.bf16.msra.mxu0 %v2138
    %2769 = vmatprep.subr.bf16.mxu0 %v2131
    %2770 = vmatpush1.bf16.msra.mxu0 %v2130
    %2771 = vmatprep.subr.bf16.mxu0 %v2123
    %2772 = vmatpush1.bf16.msra.mxu0 %v2122
    %2773 = vmatprep.subr.bf16.mxu0 %v2115
    %2774 = vmatpush1.bf16.msra.mxu0 %v2114
    %2775 = vmatprep.subr.bf16.mxu0 %v2107
    %2776 = vmatpush1.bf16.msra.mxu0 %v2106
    %2777 = vmatprep.subr.bf16.mxu0 %v2099
    %2778 = vmatpush1.bf16.msra.mxu0 %v2098
    %2779 = vmatprep.subr.bf16.mxu0 %v2219
    %2780 = vmatpush2.bf16.msra.mxu0 %v2218
    %2781 = vmatprep.subr.bf16.mxu0 %v2211
    %2782 = vmatpush2.bf16.msra.mxu0 %v2210
    %2783 = vmatprep.subr.bf16.mxu0 %v2203
    %2784 = vmatpush2.bf16.msra.mxu0 %v2202
    %2785 = vmatprep.subr.bf16.mxu0 %v2195
    %2786 = vmatpush2.bf16.msra.mxu0 %v2194
    %2787 = vmatprep.subr.bf16.mxu0 %v2187
    %2788 = vmatpush2.bf16.msra.mxu0 %v2186
    %2789 = vmatprep.subr.bf16.mxu0 %v2179
    %2790 = vmatpush2.bf16.msra.mxu0 %v2178
    %2791 = vmatprep.subr.bf16.mxu0 %v2171
    %2792 = vmatpush2.bf16.msra.mxu0 %v2170
    %2793 = vmatprep.subr.bf16.mxu0 %v2163
    %2794 = vmatpush2.bf16.msra.mxu0 %v2162
    %2795 = vmatprep.mubr.bf16.mxu0 %v897
    %2796 = vmatmul.mubr.bf16.gmra.mxu0 %v896
    %v2797 = vpop.f32.mrf.mxu0
    %v2798 = vadd.f32 %v2757, %v2797
    %v2799 = vpop.f32.mrf.mxu0
    %v2800 = vadd.f32 %v2759, %v2799
    %v2801 = vpop.f32.mrf.mxu0
    %v2802 = vpop.f32.mrf.mxu0
    %2803 = vdwg.mxu0
    %vm2804 = vcmp.gt.f32.partialorder %v2552, 0.0
    %vm2805 = vcmp.gt.f32.partialorder %v2554, 0.0
    %vm2806 = vcmp.gt.f32.partialorder %v2634, 0.0
    %vm2807 = vcmp.gt.f32.partialorder %v2636, 0.0
    %vm2808 = vcmp.gt.f32.partialorder %v2716, 0.0
    %vm2809 = vcmp.gt.f32.partialorder %v2718, 0.0
    %vm2810 = vcmp.gt.f32.partialorder %v2798, 0.0
    %vm2811 = vcmp.gt.f32.partialorder %v2800, 0.0
    %v2812 = vmul.f32 %v2552, 0.2
    %v2813 = vmul.f32 %v2554, 0.2
    %v2814 = vmul.f32 %v2634, 0.2
    %v2815 = vmul.f32 %v2636, 0.2
    %v2816 = vmul.f32 %v2716, 0.2
    %v2817 = vmul.f32 %v2718, 0.2
    %v2818 = vmul.f32 %v2798, 0.2
    %v2819 = vmul.f32 %v2800, 0.2
    %v2820 = vsel %vm2804, %v2552, %v2812
    %v2821 = vsel %vm2805, %v2554, %v2813
    %v2822 = vsel %vm2806, %v2634, %v2814
    %v2823 = vsel %vm2807, %v2636, %v2815
    %v2824 = vsel %vm2808, %v2716, %v2816
    %v2825 = vsel %vm2809, %v2718, %v2817
    %v2826 = vsel %vm2810, %v2798, %v2818
    %v2827 = vsel %vm2811, %v2800, %v2819
    %v2828 = vpack.c.bf16 %v2820, %v2820
    %v2829 = vpack.c.bf16 %v2821, %v2821
    %v2830 = vpack.c.bf16 %v2822, %v2822
    %v2831 = vpack.c.bf16 %v2823, %v2823
    %v2832 = vpack.c.bf16 %v2824, %v2824
    %v2833 = vpack.c.bf16 %v2825, %v2825
    %v2834 = vpack.c.bf16 %v2826, %v2826
    %v2835 = vpack.c.bf16 %v2827, %v2827
    %v2836 = vld [vmem:[#allocation15] sm:$0xff]
    %v2837 = vld [vmem:[#allocation15 + $0x8] sm:$0xff]
    %v2838 = vld [vmem:[#allocation15 + $0x10] sm:$0xff]
    %v2839 = vld [vmem:[#allocation15 + $0x18] sm:$0xf]
    %v2840 = vld [vmem:[#allocation15 + $0x1c] sm:$0xff]
    %v2841 = vld [vmem:[#allocation15 + $0x24] sm:$0xff]
    %v2842 = vld [vmem:[#allocation15 + $0x2c] sm:$0xff]
    %v2843 = vld [vmem:[#allocation15 + $0x34] sm:$0xf]
    %v2844 = vld [vmem:[#allocation15 + $0x38] sm:$0xff]
    %v2845 = vld [vmem:[#allocation15 + $0x40] sm:$0xff]
    %v2846 = vld [vmem:[#allocation15 + $0x48] sm:$0xff]
    %v2847 = vld [vmem:[#allocation15 + $0x50] sm:$0xf]
    %v2848 = vld [vmem:[#allocation15 + $0x54] sm:$0xff]
    %v2849 = vld [vmem:[#allocation15 + $0x5c] sm:$0xff]
    %v2850 = vld [vmem:[#allocation15 + $0x64] sm:$0xff]
    %v2851 = vld [vmem:[#allocation15 + $0x6c] sm:$0xf]
    %v2852 = vld [vmem:[#allocation15 + $0x70] sm:$0xff]
    %v2853 = vld [vmem:[#allocation15 + $0x78] sm:$0xff]
    %v2854 = vld [vmem:[#allocation15 + $0x80] sm:$0xff]
    %v2855 = vld [vmem:[#allocation15 + $0x88] sm:$0xf]
    %v2856 = vld [vmem:[#allocation15 + $0x8c] sm:$0xff]
    %v2857 = vld [vmem:[#allocation15 + $0x94] sm:$0xff]
    %v2858 = vld [vmem:[#allocation15 + $0x9c] sm:$0xff]
    %v2859 = vld [vmem:[#allocation15 + $0xa4] sm:$0xf]
    %v2860 = vld [vmem:[#allocation15 + $0xa8] sm:$0xff]
    %v2861 = vld [vmem:[#allocation15 + $0xb0] sm:$0xff]
    %v2862 = vld [vmem:[#allocation15 + $0xb8] sm:$0xff]
    %v2863 = vld [vmem:[#allocation15 + $0xc0] sm:$0xf]
    %v2864 = vld [vmem:[#allocation15 + $0xc4] sm:$0xff]
    %v2865 = vld [vmem:[#allocation15 + $0xcc] sm:$0xff]
    %v2866 = vld [vmem:[#allocation15 + $0xd4] sm:$0xff]
    %v2867 = vld [vmem:[#allocation15 + $0xdc] sm:$0xf]
    %v2868 = vld [vmem:[#allocation15 + $0xe0] sm:$0xff]
    %v2869 = vld [vmem:[#allocation15 + $0xe8] sm:$0xff]
    %v2870 = vld [vmem:[#allocation15 + $0xf0] sm:$0xff]
    %v2871 = vld [vmem:[#allocation15 + $0xf8] sm:$0xf]
    %v2872 = vld [vmem:[#allocation15 + $0xfc] sm:$0xff]
    %v2873 = vld [vmem:[#allocation15 + $0x104] sm:$0xff]
    %v2874 = vld [vmem:[#allocation15 + $0x10c] sm:$0xff]
    %v2875 = vld [vmem:[#allocation15 + $0x114] sm:$0xf]
    %v2876 = vld [vmem:[#allocation15 + $0x118] sm:$0xff]
    %v2877 = vld [vmem:[#allocation15 + $0x120] sm:$0xff]
    %v2878 = vld [vmem:[#allocation15 + $0x128] sm:$0xff]
    %v2879 = vld [vmem:[#allocation15 + $0x130] sm:$0xf]
    %v2880 = vld [vmem:[#allocation15 + $0x134] sm:$0xff]
    %v2881 = vld [vmem:[#allocation15 + $0x13c] sm:$0xff]
    %v2882 = vld [vmem:[#allocation15 + $0x144] sm:$0xff]
    %v2883 = vld [vmem:[#allocation15 + $0x14c] sm:$0xf]
    %v2884 = vld [vmem:[#allocation15 + $0x150] sm:$0xff]
    %v2885 = vld [vmem:[#allocation15 + $0x158] sm:$0xff]
    %v2886 = vld [vmem:[#allocation15 + $0x160] sm:$0xff]
    %v2887 = vld [vmem:[#allocation15 + $0x168] sm:$0xf]
    %v2888 = vld [vmem:[#allocation15 + $0x16c] sm:$0xff]
    %v2889 = vld [vmem:[#allocation15 + $0x174] sm:$0xff]
    %v2890 = vld [vmem:[#allocation15 + $0x17c] sm:$0xff]
    %v2891 = vld [vmem:[#allocation15 + $0x184] sm:$0xf]
    %v2892 = vld [vmem:[#allocation15 + $0x188] sm:$0xff]
    %v2893 = vld [vmem:[#allocation15 + $0x190] sm:$0xff]
    %v2894 = vld [vmem:[#allocation15 + $0x198] sm:$0xff]
    %v2895 = vld [vmem:[#allocation15 + $0x1a0] sm:$0xf]
    %v2896 = vld [vmem:[#allocation15 + $0x1a4] sm:$0xff]
    %v2897 = vld [vmem:[#allocation15 + $0x1ac] sm:$0xff]
    %v2898 = vld [vmem:[#allocation15 + $0x1b4] sm:$0xff]
    %v2899 = vld [vmem:[#allocation15 + $0x1bc] sm:$0xf]
    %v2900 = vld [vmem:[#allocation15 + $0x1c0] sm:$0xff]
    %v2901 = vld [vmem:[#allocation15 + $0x1c8] sm:$0xff]
    %v2902 = vld [vmem:[#allocation15 + $0x1d0] sm:$0xff]
    %v2903 = vld [vmem:[#allocation15 + $0x1d8] sm:$0xf]
    %v2904 = vld [vmem:[#allocation15 + $0x1dc] sm:$0xff]
    %v2905 = vld [vmem:[#allocation15 + $0x1e4] sm:$0xff]
    %v2906 = vld [vmem:[#allocation15 + $0x1ec] sm:$0xff]
    %v2907 = vld [vmem:[#allocation15 + $0x1f4] sm:$0xf]
    %v2908 = vld [vmem:[#allocation15 + $0x1f8] sm:$0xff]
    %v2909 = vld [vmem:[#allocation15 + $0x200] sm:$0xff]
    %v2910 = vld [vmem:[#allocation15 + $0x208] sm:$0xff]
    %v2911 = vld [vmem:[#allocation15 + $0x210] sm:$0xf]
    %v2912 = vld [vmem:[#allocation15 + $0x214] sm:$0xff]
    %v2913 = vld [vmem:[#allocation15 + $0x21c] sm:$0xff]
    %v2914 = vld [vmem:[#allocation15 + $0x224] sm:$0xff]
    %v2915 = vld [vmem:[#allocation15 + $0x22c] sm:$0xf]
    %v2916 = vld [vmem:[#allocation15 + $0x230] sm:$0xff]
    %v2917 = vld [vmem:[#allocation15 + $0x238] sm:$0xff]
    %v2918 = vld [vmem:[#allocation15 + $0x240] sm:$0xff]
    %v2919 = vld [vmem:[#allocation15 + $0x248] sm:$0xf]
    %v2920 = vld [vmem:[#allocation15 + $0x24c] sm:$0xff]
    %v2921 = vld [vmem:[#allocation15 + $0x254] sm:$0xff]
    %v2922 = vld [vmem:[#allocation15 + $0x25c] sm:$0xff]
    %v2923 = vld [vmem:[#allocation15 + $0x264] sm:$0xf]
    %v2924 = vld [vmem:[#allocation15 + $0x268] sm:$0xff]
    %v2925 = vld [vmem:[#allocation15 + $0x270] sm:$0xff]
    %v2926 = vld [vmem:[#allocation15 + $0x278] sm:$0xff]
    %v2927 = vld [vmem:[#allocation15 + $0x280] sm:$0xf]
    %v2928 = vld [vmem:[#allocation15 + $0x284] sm:$0xff]
    %v2929 = vld [vmem:[#allocation15 + $0x28c] sm:$0xff]
    %v2930 = vld [vmem:[#allocation15 + $0x294] sm:$0xff]
    %v2931 = vld [vmem:[#allocation15 + $0x29c] sm:$0xf]
    %v2932 = vld [vmem:[#allocation15 + $0x2a0] sm:$0xff]
    %v2933 = vld [vmem:[#allocation15 + $0x2a8] sm:$0xff]
    %v2934 = vld [vmem:[#allocation15 + $0x2b0] sm:$0xff]
    %v2935 = vld [vmem:[#allocation15 + $0x2b8] sm:$0xf]
    %v2936 = vld [vmem:[#allocation15 + $0x2bc] sm:$0xff]
    %v2937 = vld [vmem:[#allocation15 + $0x2c4] sm:$0xff]
    %v2938 = vld [vmem:[#allocation15 + $0x2cc] sm:$0xff]
    %v2939 = vld [vmem:[#allocation15 + $0x2d4] sm:$0xf]
    %v2940 = vld [vmem:[#allocation15 + $0x2d8] sm:$0xff]
    %v2941 = vld [vmem:[#allocation15 + $0x2e0] sm:$0xff]
    %v2942 = vld [vmem:[#allocation15 + $0x2e8] sm:$0xff]
    %v2943 = vld [vmem:[#allocation15 + $0x2f0] sm:$0xf]
    %v2944 = vld [vmem:[#allocation15 + $0x2f4] sm:$0xff]
    %v2945 = vld [vmem:[#allocation15 + $0x2fc] sm:$0xff]
    %v2946 = vld [vmem:[#allocation15 + $0x304] sm:$0xff]
    %v2947 = vld [vmem:[#allocation15 + $0x30c] sm:$0xf]
    %v2948 = vld [vmem:[#allocation15 + $0x310] sm:$0xff]
    %v2949 = vld [vmem:[#allocation15 + $0x318] sm:$0xff]
    %v2950 = vld [vmem:[#allocation15 + $0x320] sm:$0xff]
    %v2951 = vld [vmem:[#allocation15 + $0x328] sm:$0xf]
    %v2952 = vld [vmem:[#allocation15 + $0x32c] sm:$0xff]
    %v2953 = vld [vmem:[#allocation15 + $0x334] sm:$0xff]
    %v2954 = vld [vmem:[#allocation15 + $0x33c] sm:$0xff]
    %v2955 = vld [vmem:[#allocation15 + $0x344] sm:$0xf]
    %v2956 = vld [vmem:[#allocation15 + $0x348] sm:$0xff]
    %v2957 = vld [vmem:[#allocation15 + $0x350] sm:$0xff]
    %v2958 = vld [vmem:[#allocation15 + $0x358] sm:$0xff]
    %v2959 = vld [vmem:[#allocation15 + $0x360] sm:$0xf]
    %v2960 = vld [vmem:[#allocation15 + $0x364] sm:$0xff]
    %v2961 = vld [vmem:[#allocation15 + $0x36c] sm:$0xff]
    %v2962 = vld [vmem:[#allocation15 + $0x374] sm:$0xff]
    %v2963 = vld [vmem:[#allocation15 + $0x37c] sm:$0xf]
    %v2964 = vld [vmem:[#allocation15 + $0x380] sm:$0xff]
    %v2965 = vld [vmem:[#allocation15 + $0x388] sm:$0xff]
    %v2966 = vld [vmem:[#allocation15 + $0x390] sm:$0xff]
    %v2967 = vld [vmem:[#allocation15 + $0x398] sm:$0xf]
    %v2968 = vld [vmem:[#allocation15 + $0x39c] sm:$0xff]
    %v2969 = vld [vmem:[#allocation15 + $0x3a4] sm:$0xff]
    %v2970 = vld [vmem:[#allocation15 + $0x3ac] sm:$0xff]
    %v2971 = vld [vmem:[#allocation15 + $0x3b4] sm:$0xf]
    %v2972 = vld [vmem:[#allocation15 + $0x3b8] sm:$0xff]
    %v2973 = vld [vmem:[#allocation15 + $0x3c0] sm:$0xff]
    %v2974 = vld [vmem:[#allocation15 + $0x3c8] sm:$0xff]
    %v2975 = vld [vmem:[#allocation15 + $0x3d0] sm:$0xf]
    %v2976 = vld [vmem:[#allocation15 + $0x3d4] sm:$0xff]
    %v2977 = vld [vmem:[#allocation15 + $0x3dc] sm:$0xff]
    %v2978 = vld [vmem:[#allocation15 + $0x3e4] sm:$0xff]
    %v2979 = vld [vmem:[#allocation15 + $0x3ec] sm:$0xf]
    %v2980 = vld [vmem:[#allocation15 + $0x3f0] sm:$0xff]
    %v2981 = vld [vmem:[#allocation15 + $0x3f8] sm:$0xff]
    %v2982 = vld [vmem:[#allocation15 + $0x400] sm:$0xff]
    %v2983 = vld [vmem:[#allocation15 + $0x408] sm:$0xf]
    %v2984 = vld [vmem:[#allocation15 + $0x40c] sm:$0xff]
    %v2985 = vld [vmem:[#allocation15 + $0x414] sm:$0xff]
    %v2986 = vld [vmem:[#allocation15 + $0x41c] sm:$0xff]
    %v2987 = vld [vmem:[#allocation15 + $0x424] sm:$0xf]
    %v2988 = vld [vmem:[#allocation15 + $0x428] sm:$0xff]
    %v2989 = vld [vmem:[#allocation15 + $0x430] sm:$0xff]
    %v2990 = vld [vmem:[#allocation15 + $0x438] sm:$0xff]
    %v2991 = vld [vmem:[#allocation15 + $0x440] sm:$0xf]
    %v2992 = vld [vmem:[#allocation15 + $0x444] sm:$0xff]
    %v2993 = vld [vmem:[#allocation15 + $0x44c] sm:$0xff]
    %v2994 = vld [vmem:[#allocation15 + $0x454] sm:$0xff]
    %v2995 = vld [vmem:[#allocation15 + $0x45c] sm:$0xf]
    %v2996 = vld [vmem:[#allocation15 + $0x460] sm:$0xff]
    %v2997 = vld [vmem:[#allocation15 + $0x468] sm:$0xff]
    %v2998 = vld [vmem:[#allocation15 + $0x470] sm:$0xff]
    %v2999 = vld [vmem:[#allocation15 + $0x478] sm:$0xf]
    %v3000 = vld [vmem:[#allocation15 + $0x47c] sm:$0xff]
    %v3001 = vld [vmem:[#allocation15 + $0x484] sm:$0xff]
    %v3002 = vld [vmem:[#allocation15 + $0x48c] sm:$0xff]
    %v3003 = vld [vmem:[#allocation15 + $0x494] sm:$0xf]
    %v3004 = vld [vmem:[#allocation15 + $0x498] sm:$0xff]
    %v3005 = vld [vmem:[#allocation15 + $0x4a0] sm:$0xff]
    %v3006 = vld [vmem:[#allocation15 + $0x4a8] sm:$0xff]
    %v3007 = vld [vmem:[#allocation15 + $0x4b0] sm:$0xf]
    %v3008 = vld [vmem:[#allocation15 + $0x4b4] sm:$0xff]
    %v3009 = vld [vmem:[#allocation15 + $0x4bc] sm:$0xff]
    %v3010 = vld [vmem:[#allocation15 + $0x4c4] sm:$0xff]
    %v3011 = vld [vmem:[#allocation15 + $0x4cc] sm:$0xf]
    %v3012 = vld [vmem:[#allocation15 + $0x4d0] sm:$0xff]
    %v3013 = vld [vmem:[#allocation15 + $0x4d8] sm:$0xff]
    %v3014 = vld [vmem:[#allocation15 + $0x4e0] sm:$0xff]
    %v3015 = vld [vmem:[#allocation15 + $0x4e8] sm:$0xf]
    %v3016 = vld [vmem:[#allocation15 + $0x4ec] sm:$0xff]
    %v3017 = vld [vmem:[#allocation15 + $0x4f4] sm:$0xff]
    %v3018 = vld [vmem:[#allocation15 + $0x4fc] sm:$0xff]
    %v3019 = vld [vmem:[#allocation15 + $0x504] sm:$0xf]
    %v3020 = vld [vmem:[#allocation15 + $0x508] sm:$0xff]
    %v3021 = vld [vmem:[#allocation15 + $0x510] sm:$0xff]
    %v3022 = vld [vmem:[#allocation15 + $0x518] sm:$0xff]
    %v3023 = vld [vmem:[#allocation15 + $0x520] sm:$0xf]
    %v3024 = vld [vmem:[#allocation15 + $0x524] sm:$0xff]
    %v3025 = vld [vmem:[#allocation15 + $0x52c] sm:$0xff]
    %v3026 = vld [vmem:[#allocation15 + $0x534] sm:$0xff]
    %v3027 = vld [vmem:[#allocation15 + $0x53c] sm:$0xf]
    %v3028 = vld [vmem:[#allocation15 + $0x540] sm:$0xff]
    %v3029 = vld [vmem:[#allocation15 + $0x548] sm:$0xff]
    %v3030 = vld [vmem:[#allocation15 + $0x550] sm:$0xff]
    %v3031 = vld [vmem:[#allocation15 + $0x558] sm:$0xf]
    %v3032 = vld [vmem:[#allocation15 + $0x55c] sm:$0xff]
    %v3033 = vld [vmem:[#allocation15 + $0x564] sm:$0xff]
    %v3034 = vld [vmem:[#allocation15 + $0x56c] sm:$0xff]
    %v3035 = vld [vmem:[#allocation15 + $0x574] sm:$0xf]
    %v3036 = vld [vmem:[#allocation15 + $0x578] sm:$0xff]
    %v3037 = vld [vmem:[#allocation15 + $0x580] sm:$0xff]
    %v3038 = vld [vmem:[#allocation15 + $0x588] sm:$0xff]
    %v3039 = vld [vmem:[#allocation15 + $0x590] sm:$0xf]
    %v3040 = vld [vmem:[#allocation15 + $0x594] sm:$0xff]
    %v3041 = vld [vmem:[#allocation15 + $0x59c] sm:$0xff]
    %v3042 = vld [vmem:[#allocation15 + $0x5a4] sm:$0xff]
    %v3043 = vld [vmem:[#allocation15 + $0x5ac] sm:$0xf]
    %v3044 = vld [vmem:[#allocation15 + $0x5b0] sm:$0xff]
    %v3045 = vld [vmem:[#allocation15 + $0x5b8] sm:$0xff]
    %v3046 = vld [vmem:[#allocation15 + $0x5c0] sm:$0xff]
    %v3047 = vld [vmem:[#allocation15 + $0x5c8] sm:$0xf]
    %v3048 = vld [vmem:[#allocation15 + $0x5cc] sm:$0xff]
    %v3049 = vld [vmem:[#allocation15 + $0x5d4] sm:$0xff]
    %v3050 = vld [vmem:[#allocation15 + $0x5dc] sm:$0xff]
    %v3051 = vld [vmem:[#allocation15 + $0x5e4] sm:$0xf]
    %v3052 = vld [vmem:[#allocation15 + $0x5e8] sm:$0xff]
    %v3053 = vld [vmem:[#allocation15 + $0x5f0] sm:$0xff]
    %v3054 = vld [vmem:[#allocation15 + $0x5f8] sm:$0xff]
    %v3055 = vld [vmem:[#allocation15 + $0x600] sm:$0xf]
    %v3056 = vld [vmem:[#allocation15 + $0x604] sm:$0xff]
    %v3057 = vld [vmem:[#allocation15 + $0x60c] sm:$0xff]
    %v3058 = vld [vmem:[#allocation15 + $0x614] sm:$0xff]
    %v3059 = vld [vmem:[#allocation15 + $0x61c] sm:$0xf]
    %v3060 = vld [vmem:[#allocation15 + $0x620] sm:$0xff]
    %v3061 = vld [vmem:[#allocation15 + $0x628] sm:$0xff]
    %v3062 = vld [vmem:[#allocation15 + $0x630] sm:$0xff]
    %v3063 = vld [vmem:[#allocation15 + $0x638] sm:$0xf]
    %v3064 = vld [vmem:[#allocation15 + $0x63c] sm:$0xff]
    %v3065 = vld [vmem:[#allocation15 + $0x644] sm:$0xff]
    %v3066 = vld [vmem:[#allocation15 + $0x64c] sm:$0xff]
    %v3067 = vld [vmem:[#allocation15 + $0x654] sm:$0xf]
    %v3068 = vld [vmem:[#allocation15 + $0x658] sm:$0xff]
    %v3069 = vld [vmem:[#allocation15 + $0x660] sm:$0xff]
    %v3070 = vld [vmem:[#allocation15 + $0x668] sm:$0xff]
    %v3071 = vld [vmem:[#allocation15 + $0x670] sm:$0xf]
    %v3072 = vld [vmem:[#allocation15 + $0x674] sm:$0xff]
    %v3073 = vld [vmem:[#allocation15 + $0x67c] sm:$0xff]
    %v3074 = vld [vmem:[#allocation15 + $0x684] sm:$0xff]
    %v3075 = vld [vmem:[#allocation15 + $0x68c] sm:$0xf]
    %v3076 = vld [vmem:[#allocation15 + $0x690] sm:$0xff]
    %v3077 = vld [vmem:[#allocation15 + $0x698] sm:$0xff]
    %v3078 = vld [vmem:[#allocation15 + $0x6a0] sm:$0xff]
    %v3079 = vld [vmem:[#allocation15 + $0x6a8] sm:$0xf]
    %v3080 = vld [vmem:[#allocation15 + $0x6ac] sm:$0xff]
    %v3081 = vld [vmem:[#allocation15 + $0x6b4] sm:$0xff]
    %v3082 = vld [vmem:[#allocation15 + $0x6bc] sm:$0xff]
    %v3083 = vld [vmem:[#allocation15 + $0x6c4] sm:$0xf]
    %v3084 = vld [vmem:[#allocation15 + $0x6c8] sm:$0xff]
    %v3085 = vld [vmem:[#allocation15 + $0x6d0] sm:$0xff]
    %v3086 = vld [vmem:[#allocation15 + $0x6d8] sm:$0xff]
    %v3087 = vld [vmem:[#allocation15 + $0x6e0] sm:$0xf]
    %v3088 = vld [vmem:[#allocation15 + $0x6e4] sm:$0xff]
    %v3089 = vld [vmem:[#allocation15 + $0x6ec] sm:$0xff]
    %v3090 = vld [vmem:[#allocation15 + $0x6f4] sm:$0xff]
    %v3091 = vld [vmem:[#allocation15 + $0x6fc] sm:$0xf]
    %v3092 = vld [vmem:[#allocation15 + $0x700] sm:$0xff]
    %v3093 = vld [vmem:[#allocation15 + $0x708] sm:$0xff]
    %v3094 = vld [vmem:[#allocation15 + $0x710] sm:$0xff]
    %v3095 = vld [vmem:[#allocation15 + $0x718] sm:$0xf]
    %v3096 = vld [vmem:[#allocation15 + $0x71c] sm:$0xff]
    %v3097 = vld [vmem:[#allocation15 + $0x724] sm:$0xff]
    %v3098 = vld [vmem:[#allocation15 + $0x72c] sm:$0xff]
    %v3099 = vld [vmem:[#allocation15 + $0x734] sm:$0xf]
    %v3100 = vld [vmem:[#allocation15 + $0x738] sm:$0xff]
    %v3101 = vld [vmem:[#allocation15 + $0x740] sm:$0xff]
    %v3102 = vld [vmem:[#allocation15 + $0x748] sm:$0xff]
    %v3103 = vld [vmem:[#allocation15 + $0x750] sm:$0xf]
    %v3104 = vld [vmem:[#allocation15 + $0x754] sm:$0xff]
    %v3105 = vld [vmem:[#allocation15 + $0x75c] sm:$0xff]
    %v3106 = vld [vmem:[#allocation15 + $0x764] sm:$0xff]
    %v3107 = vld [vmem:[#allocation15 + $0x76c] sm:$0xf]
    %v3108 = vld [vmem:[#allocation15 + $0x770] sm:$0xff]
    %v3109 = vld [vmem:[#allocation15 + $0x778] sm:$0xff]
    %v3110 = vld [vmem:[#allocation15 + $0x780] sm:$0xff]
    %v3111 = vld [vmem:[#allocation15 + $0x788] sm:$0xf]
    %v3112 = vld [vmem:[#allocation15 + $0x78c] sm:$0xff]
    %v3113 = vld [vmem:[#allocation15 + $0x794] sm:$0xff]
    %v3114 = vld [vmem:[#allocation15 + $0x79c] sm:$0xff]
    %v3115 = vld [vmem:[#allocation15 + $0x7a4] sm:$0xf]
    %v3116 = vld [vmem:[#allocation15 + $0x7a8] sm:$0xff]
    %v3117 = vld [vmem:[#allocation15 + $0x7b0] sm:$0xff]
    %v3118 = vld [vmem:[#allocation15 + $0x7b8] sm:$0xff]
    %v3119 = vld [vmem:[#allocation15 + $0x7c0] sm:$0xf]
    %v3120 = vld [vmem:[#allocation15 + $0x7c4] sm:$0xff]
    %v3121 = vld [vmem:[#allocation15 + $0x7cc] sm:$0xff]
    %v3122 = vld [vmem:[#allocation15 + $0x7d4] sm:$0xff]
    %v3123 = vld [vmem:[#allocation15 + $0x7dc] sm:$0xf]
    %v3124 = vld [vmem:[#allocation15 + $0x7e0] sm:$0xff]
    %v3125 = vld [vmem:[#allocation15 + $0x7e8] sm:$0xff]
    %v3126 = vld [vmem:[#allocation15 + $0x7f0] sm:$0xff]
    %v3127 = vld [vmem:[#allocation15 + $0x7f8] sm:$0xf]
    %v3128 = vld [vmem:[#allocation15 + $0x7fc] sm:$0xff]
    %v3129 = vld [vmem:[#allocation15 + $0x804] sm:$0xff]
    %v3130 = vld [vmem:[#allocation15 + $0x80c] sm:$0xff]
    %v3131 = vld [vmem:[#allocation15 + $0x814] sm:$0xf]
    %v3132 = vld [vmem:[#allocation15 + $0x818] sm:$0xff]
    %v3133 = vld [vmem:[#allocation15 + $0x820] sm:$0xff]
    %v3134 = vld [vmem:[#allocation15 + $0x828] sm:$0xff]
    %v3135 = vld [vmem:[#allocation15 + $0x830] sm:$0xf]
    %v3136 = vld [vmem:[#allocation15 + $0x834] sm:$0xff]
    %v3137 = vld [vmem:[#allocation15 + $0x83c] sm:$0xff]
    %v3138 = vld [vmem:[#allocation15 + $0x844] sm:$0xff]
    %v3139 = vld [vmem:[#allocation15 + $0x84c] sm:$0xf]
    %v3140 = vld [vmem:[#allocation15 + $0x850] sm:$0xff]
    %v3141 = vld [vmem:[#allocation15 + $0x858] sm:$0xff]
    %v3142 = vld [vmem:[#allocation15 + $0x860] sm:$0xff]
    %v3143 = vld [vmem:[#allocation15 + $0x868] sm:$0xf]
    %v3144 = vld [vmem:[#allocation15 + $0x86c] sm:$0xff]
    %v3145 = vld [vmem:[#allocation15 + $0x874] sm:$0xff]
    %v3146 = vld [vmem:[#allocation15 + $0x87c] sm:$0xff]
    %v3147 = vld [vmem:[#allocation15 + $0x884] sm:$0xf]
    %v3148 = vld [vmem:[#allocation15 + $0x888] sm:$0xff]
    %v3149 = vld [vmem:[#allocation15 + $0x890] sm:$0xff]
    %v3150 = vld [vmem:[#allocation15 + $0x898] sm:$0xff]
    %v3151 = vld [vmem:[#allocation15 + $0x8a0] sm:$0xf]
    %v3152 = vld [vmem:[#allocation15 + $0x8a4] sm:$0xff]
    %v3153 = vld [vmem:[#allocation15 + $0x8ac] sm:$0xff]
    %v3154 = vld [vmem:[#allocation15 + $0x8b4] sm:$0xff]
    %v3155 = vld [vmem:[#allocation15 + $0x8bc] sm:$0xf]
    %v3156 = vld [vmem:[#allocation15 + $0x8c0] sm:$0xff]
    %v3157 = vld [vmem:[#allocation15 + $0x8c8] sm:$0xff]
    %v3158 = vld [vmem:[#allocation15 + $0x8d0] sm:$0xff]
    %v3159 = vld [vmem:[#allocation15 + $0x8d8] sm:$0xf]
    %v3160 = vld [vmem:[#allocation15 + $0x8dc] sm:$0xff]
    %v3161 = vld [vmem:[#allocation15 + $0x8e4] sm:$0xff]
    %v3162 = vld [vmem:[#allocation15 + $0x8ec] sm:$0xff]
    %v3163 = vld [vmem:[#allocation15 + $0x8f4] sm:$0xf]
    %v3164 = vld [vmem:[#allocation15 + $0x8f8] sm:$0xff]
    %v3165 = vld [vmem:[#allocation15 + $0x900] sm:$0xff]
    %v3166 = vld [vmem:[#allocation15 + $0x908] sm:$0xff]
    %v3167 = vld [vmem:[#allocation15 + $0x910] sm:$0xf]
    %v3168 = vld [vmem:[#allocation15 + $0x914] sm:$0xff]
    %v3169 = vld [vmem:[#allocation15 + $0x91c] sm:$0xff]
    %v3170 = vld [vmem:[#allocation15 + $0x924] sm:$0xff]
    %v3171 = vld [vmem:[#allocation15 + $0x92c] sm:$0xf]
    %v3172 = vld [vmem:[#allocation15 + $0x930] sm:$0xff]
    %v3173 = vld [vmem:[#allocation15 + $0x938] sm:$0xff]
    %v3174 = vld [vmem:[#allocation15 + $0x940] sm:$0xff]
    %v3175 = vld [vmem:[#allocation15 + $0x948] sm:$0xf]
    %v3176 = vld [vmem:[#allocation15 + $0x94c] sm:$0xff]
    %v3177 = vld [vmem:[#allocation15 + $0x954] sm:$0xff]
    %v3178 = vld [vmem:[#allocation15 + $0x95c] sm:$0xff]
    %v3179 = vld [vmem:[#allocation15 + $0x964] sm:$0xf]
    %v3180 = vld [vmem:[#allocation15 + $0x968] sm:$0xff]
    %v3181 = vld [vmem:[#allocation15 + $0x970] sm:$0xff]
    %v3182 = vld [vmem:[#allocation15 + $0x978] sm:$0xff]
    %v3183 = vld [vmem:[#allocation15 + $0x980] sm:$0xf]
    %v3184 = vld [vmem:[#allocation15 + $0x984] sm:$0xff]
    %v3185 = vld [vmem:[#allocation15 + $0x98c] sm:$0xff]
    %v3186 = vld [vmem:[#allocation15 + $0x994] sm:$0xff]
    %v3187 = vld [vmem:[#allocation15 + $0x99c] sm:$0xf]
    %v3188 = vld [vmem:[#allocation15 + $0x9a0] sm:$0xff]
    %v3189 = vld [vmem:[#allocation15 + $0x9a8] sm:$0xff]
    %v3190 = vld [vmem:[#allocation15 + $0x9b0] sm:$0xff]
    %v3191 = vld [vmem:[#allocation15 + $0x9b8] sm:$0xf]
    %v3192 = vld [vmem:[#allocation15 + $0x9bc] sm:$0xff]
    %v3193 = vld [vmem:[#allocation15 + $0x9c4] sm:$0xff]
    %v3194 = vld [vmem:[#allocation15 + $0x9cc] sm:$0xff]
    %v3195 = vld [vmem:[#allocation15 + $0x9d4] sm:$0xf]
    %v3196 = vld [vmem:[#allocation15 + $0x9d8] sm:$0xff]
    %v3197 = vld [vmem:[#allocation15 + $0x9e0] sm:$0xff]
    %v3198 = vld [vmem:[#allocation15 + $0x9e8] sm:$0xff]
    %v3199 = vld [vmem:[#allocation15 + $0x9f0] sm:$0xf]
    %v3200 = vld [vmem:[#allocation15 + $0x9f4] sm:$0xff]
    %v3201 = vld [vmem:[#allocation15 + $0x9fc] sm:$0xff]
    %v3202 = vld [vmem:[#allocation15 + $0xa04] sm:$0xff]
    %v3203 = vld [vmem:[#allocation15 + $0xa0c] sm:$0xf]
    %v3204 = vld [vmem:[#allocation15 + $0xa10] sm:$0xff]
    %v3205 = vld [vmem:[#allocation15 + $0xa18] sm:$0xff]
    %v3206 = vld [vmem:[#allocation15 + $0xa20] sm:$0xff]
    %v3207 = vld [vmem:[#allocation15 + $0xa28] sm:$0xf]
    %v3208 = vld [vmem:[#allocation15 + $0xa2c] sm:$0xff]
    %v3209 = vld [vmem:[#allocation15 + $0xa34] sm:$0xff]
    %v3210 = vld [vmem:[#allocation15 + $0xa3c] sm:$0xff]
    %v3211 = vld [vmem:[#allocation15 + $0xa44] sm:$0xf]
    %v3212 = vld [vmem:[#allocation15 + $0xa48] sm:$0xff]
    %v3213 = vld [vmem:[#allocation15 + $0xa50] sm:$0xff]
    %v3214 = vld [vmem:[#allocation15 + $0xa58] sm:$0xff]
    %v3215 = vld [vmem:[#allocation15 + $0xa60] sm:$0xf]
    %v3216 = vld [vmem:[#allocation15 + $0xa64] sm:$0xff]
    %v3217 = vld [vmem:[#allocation15 + $0xa6c] sm:$0xff]
    %v3218 = vld [vmem:[#allocation15 + $0xa74] sm:$0xff]
    %v3219 = vld [vmem:[#allocation15 + $0xa7c] sm:$0xf]
    %v3220 = vld [vmem:[#allocation15 + $0xa80] sm:$0xff]
    %v3221 = vld [vmem:[#allocation15 + $0xa88] sm:$0xff]
    %v3222 = vld [vmem:[#allocation15 + $0xa90] sm:$0xff]
    %v3223 = vld [vmem:[#allocation15 + $0xa98] sm:$0xf]
    %v3224 = vld [vmem:[#allocation15 + $0xa9c] sm:$0xff]
    %v3225 = vld [vmem:[#allocation15 + $0xaa4] sm:$0xff]
    %v3226 = vld [vmem:[#allocation15 + $0xaac] sm:$0xff]
    %v3227 = vld [vmem:[#allocation15 + $0xab4] sm:$0xf]
    %v3228 = vld [vmem:[#allocation15 + $0xab8] sm:$0xff]
    %v3229 = vld [vmem:[#allocation15 + $0xac0] sm:$0xff]
    %v3230 = vld [vmem:[#allocation15 + $0xac8] sm:$0xff]
    %v3231 = vld [vmem:[#allocation15 + $0xad0] sm:$0xf]
    %v3232 = vld [vmem:[#allocation15 + $0xad4] sm:$0xff]
    %v3233 = vld [vmem:[#allocation15 + $0xadc] sm:$0xff]
    %v3234 = vld [vmem:[#allocation15 + $0xae4] sm:$0xff]
    %v3235 = vld [vmem:[#allocation15 + $0xaec] sm:$0xf]
    %v3236 = vld [vmem:[#allocation15 + $0xaf0] sm:$0xff]
    %v3237 = vld [vmem:[#allocation15 + $0xaf8] sm:$0xff]
    %v3238 = vld [vmem:[#allocation15 + $0xb00] sm:$0xff]
    %v3239 = vld [vmem:[#allocation15 + $0xb08] sm:$0xf]
    %v3240 = vld [vmem:[#allocation15 + $0xb0c] sm:$0xff]
    %v3241 = vld [vmem:[#allocation15 + $0xb14] sm:$0xff]
    %v3242 = vld [vmem:[#allocation15 + $0xb1c] sm:$0xff]
    %v3243 = vld [vmem:[#allocation15 + $0xb24] sm:$0xf]
    %v3244 = vld [vmem:[#allocation15 + $0xb28] sm:$0xff]
    %v3245 = vld [vmem:[#allocation15 + $0xb30] sm:$0xff]
    %v3246 = vld [vmem:[#allocation15 + $0xb38] sm:$0xff]
    %v3247 = vld [vmem:[#allocation15 + $0xb40] sm:$0xf]
    %v3248 = vld [vmem:[#allocation15 + $0xb44] sm:$0xff]
    %v3249 = vld [vmem:[#allocation15 + $0xb4c] sm:$0xff]
    %v3250 = vld [vmem:[#allocation15 + $0xb54] sm:$0xff]
    %v3251 = vld [vmem:[#allocation15 + $0xb5c] sm:$0xf]
    %v3252 = vld [vmem:[#allocation15 + $0xb60] sm:$0xff]
    %v3253 = vld [vmem:[#allocation15 + $0xb68] sm:$0xff]
    %v3254 = vld [vmem:[#allocation15 + $0xb70] sm:$0xff]
    %v3255 = vld [vmem:[#allocation15 + $0xb78] sm:$0xf]
    %v3256 = vld [vmem:[#allocation15 + $0xb7c] sm:$0xff]
    %v3257 = vld [vmem:[#allocation15 + $0xb84] sm:$0xff]
    %v3258 = vld [vmem:[#allocation15 + $0xb8c] sm:$0xff]
    %v3259 = vld [vmem:[#allocation15 + $0xb94] sm:$0xf]
    %v3260 = vld [vmem:[#allocation15 + $0xb98] sm:$0xff]
    %v3261 = vld [vmem:[#allocation15 + $0xba0] sm:$0xff]
    %v3262 = vld [vmem:[#allocation15 + $0xba8] sm:$0xff]
    %v3263 = vld [vmem:[#allocation15 + $0xbb0] sm:$0xf]
    %v3264 = vld [vmem:[#allocation15 + $0xbb4] sm:$0xff]
    %v3265 = vld [vmem:[#allocation15 + $0xbbc] sm:$0xff]
    %v3266 = vld [vmem:[#allocation15 + $0xbc4] sm:$0xff]
    %v3267 = vld [vmem:[#allocation15 + $0xbcc] sm:$0xf]
    %v3268 = vld [vmem:[#allocation15 + $0xbd0] sm:$0xff]
    %v3269 = vld [vmem:[#allocation15 + $0xbd8] sm:$0xff]
    %v3270 = vld [vmem:[#allocation15 + $0xbe0] sm:$0xff]
    %v3271 = vld [vmem:[#allocation15 + $0xbe8] sm:$0xf]
    %v3272 = vld [vmem:[#allocation15 + $0xbec] sm:$0xff]
    %v3273 = vld [vmem:[#allocation15 + $0xbf4] sm:$0xff]
    %v3274 = vld [vmem:[#allocation15 + $0xbfc] sm:$0xff]
    %v3275 = vld [vmem:[#allocation15 + $0xc04] sm:$0xf]
    %v3276 = vld [vmem:[#allocation15 + $0xc08] sm:$0xff]
    %v3277 = vld [vmem:[#allocation15 + $0xc10] sm:$0xff]
    %v3278 = vld [vmem:[#allocation15 + $0xc18] sm:$0xff]
    %v3279 = vld [vmem:[#allocation15 + $0xc20] sm:$0xf]
    %v3280 = vld [vmem:[#allocation15 + $0xc24] sm:$0xff]
    %v3281 = vld [vmem:[#allocation15 + $0xc2c] sm:$0xff]
    %v3282 = vld [vmem:[#allocation15 + $0xc34] sm:$0xff]
    %v3283 = vld [vmem:[#allocation15 + $0xc3c] sm:$0xf]
    %v3284 = vld [vmem:[#allocation15 + $0xc40] sm:$0xff]
    %v3285 = vld [vmem:[#allocation15 + $0xc48] sm:$0xff]
    %v3286 = vld [vmem:[#allocation15 + $0xc50] sm:$0xff]
    %v3287 = vld [vmem:[#allocation15 + $0xc58] sm:$0xf]
    %v3288 = vld [vmem:[#allocation15 + $0xc5c] sm:$0xff]
    %v3289 = vld [vmem:[#allocation15 + $0xc64] sm:$0xff]
    %v3290 = vld [vmem:[#allocation15 + $0xc6c] sm:$0xff]
    %v3291 = vld [vmem:[#allocation15 + $0xc74] sm:$0xf]
    %v3292 = vld [vmem:[#allocation15 + $0xc78] sm:$0xff]
    %v3293 = vld [vmem:[#allocation15 + $0xc80] sm:$0xff]
    %v3294 = vld [vmem:[#allocation15 + $0xc88] sm:$0xff]
    %v3295 = vld [vmem:[#allocation15 + $0xc90] sm:$0xf]
    %v3296 = vld [vmem:[#allocation15 + $0xc94] sm:$0xff]
    %v3297 = vld [vmem:[#allocation15 + $0xc9c] sm:$0xff]
    %v3298 = vld [vmem:[#allocation15 + $0xca4] sm:$0xff]
    %v3299 = vld [vmem:[#allocation15 + $0xcac] sm:$0xf]
    %v3300 = vld [vmem:[#allocation15 + $0xcb0] sm:$0xff]
    %v3301 = vld [vmem:[#allocation15 + $0xcb8] sm:$0xff]
    %v3302 = vld [vmem:[#allocation15 + $0xcc0] sm:$0xff]
    %v3303 = vld [vmem:[#allocation15 + $0xcc8] sm:$0xf]
    %v3304 = vld [vmem:[#allocation15 + $0xccc] sm:$0xff]
    %v3305 = vld [vmem:[#allocation15 + $0xcd4] sm:$0xff]
    %v3306 = vld [vmem:[#allocation15 + $0xcdc] sm:$0xff]
    %v3307 = vld [vmem:[#allocation15 + $0xce4] sm:$0xf]
    %v3308 = vld [vmem:[#allocation15 + $0xce8] sm:$0xff]
    %v3309 = vld [vmem:[#allocation15 + $0xcf0] sm:$0xff]
    %v3310 = vld [vmem:[#allocation15 + $0xcf8] sm:$0xff]
    %v3311 = vld [vmem:[#allocation15 + $0xd00] sm:$0xf]
    %v3312 = vld [vmem:[#allocation15 + $0xd04] sm:$0xff]
    %v3313 = vld [vmem:[#allocation15 + $0xd0c] sm:$0xff]
    %v3314 = vld [vmem:[#allocation15 + $0xd14] sm:$0xff]
    %v3315 = vld [vmem:[#allocation15 + $0xd1c] sm:$0xf]
    %v3316 = vld [vmem:[#allocation15 + $0xd20] sm:$0xff]
    %v3317 = vld [vmem:[#allocation15 + $0xd28] sm:$0xff]
    %v3318 = vld [vmem:[#allocation15 + $0xd30] sm:$0xff]
    %v3319 = vld [vmem:[#allocation15 + $0xd38] sm:$0xf]
    %v3320 = vld [vmem:[#allocation15 + $0xd3c] sm:$0xff]
    %v3321 = vld [vmem:[#allocation15 + $0xd44] sm:$0xff]
    %v3322 = vld [vmem:[#allocation15 + $0xd4c] sm:$0xff]
    %v3323 = vld [vmem:[#allocation15 + $0xd54] sm:$0xf]
    %v3324 = vld [vmem:[#allocation15 + $0xd58] sm:$0xff]
    %v3325 = vld [vmem:[#allocation15 + $0xd60] sm:$0xff]
    %v3326 = vld [vmem:[#allocation15 + $0xd68] sm:$0xff]
    %v3327 = vld [vmem:[#allocation15 + $0xd70] sm:$0xf]
    %v3328 = vld [vmem:[#allocation15 + $0xd74] sm:$0xff]
    %v3329 = vld [vmem:[#allocation15 + $0xd7c] sm:$0xff]
    %v3330 = vld [vmem:[#allocation15 + $0xd84] sm:$0xff]
    %v3331 = vld [vmem:[#allocation15 + $0xd8c] sm:$0xf]
    %v3332 = vld [vmem:[#allocation15 + $0xd90] sm:$0xff]
    %v3333 = vld [vmem:[#allocation15 + $0xd98] sm:$0xff]
    %v3334 = vld [vmem:[#allocation15 + $0xda0] sm:$0xff]
    %v3335 = vld [vmem:[#allocation15 + $0xda8] sm:$0xf]
    %v3336 = vld [vmem:[#allocation15 + $0xdac] sm:$0xff]
    %v3337 = vld [vmem:[#allocation15 + $0xdb4] sm:$0xff]
    %v3338 = vld [vmem:[#allocation15 + $0xdbc] sm:$0xff]
    %v3339 = vld [vmem:[#allocation15 + $0xdc4] sm:$0xf]
    %v3340 = vld [vmem:[#allocation15 + $0xdc8] sm:$0xff]
    %v3341 = vld [vmem:[#allocation15 + $0xdd0] sm:$0xff]
    %v3342 = vld [vmem:[#allocation15 + $0xdd8] sm:$0xff]
    %v3343 = vld [vmem:[#allocation15 + $0xde0] sm:$0xf]
    %v3344 = vld [vmem:[#allocation15 + $0xde4] sm:$0xff]
    %v3345 = vld [vmem:[#allocation15 + $0xdec] sm:$0xff]
    %v3346 = vld [vmem:[#allocation15 + $0xdf4] sm:$0xff]
    %v3347 = vld [vmem:[#allocation15 + $0xdfc] sm:$0xf]
    %v3348 = vld [vmem:[#allocation16] sm:$0xff]
    %v3350 = vlaneseq
    %v3351 = vshrl.u32 %v3350, 7
    %v3352 = vsub.s32 0, %v3351
    %v3353 = vrot.slane %v3348, %v3352
    %v3354 = vlaneseq
    %v3355 = vshrl.u32 %v3354, 7
    %v3356 = vsub.s32 1, %v3355
    %v3357 = vrot.slane %v3348, %v3356
    %v3358 = vlaneseq
    %v3359 = vshrl.u32 %v3358, 7
    %v3360 = vsub.s32 2, %v3359
    %v3361 = vrot.slane %v3348, %v3360
    %v3362 = vlaneseq
    %v3363 = vshrl.u32 %v3362, 7
    %v3364 = vsub.s32 3, %v3363
    %v3365 = vrot.slane %v3348, %v3364
    %v3366 = vlaneseq
    %v3367 = vshrl.u32 %v3366, 7
    %v3368 = vsub.s32 4, %v3367
    %v3369 = vrot.slane %v3348, %v3368
    %v3370 = vlaneseq
    %v3371 = vshrl.u32 %v3370, 7
    %v3372 = vsub.s32 5, %v3371
    %v3373 = vrot.slane %v3348, %v3372
    %v3374 = vlaneseq
    %v3375 = vshrl.u32 %v3374, 7
    %v3376 = vsub.s32 6, %v3375
    %v3377 = vrot.slane %v3348, %v3376
    %v3897 = vunpack.c.l.b16 %v2836
    %v3898 = vunpack.c.h.b16 %v2836
    %v3899 = vunpack.c.l.b16 %v2837
    %v3900 = vunpack.c.h.b16 %v2837
    %v3901 = vunpack.c.l.b16 %v2838
    %v3902 = vunpack.c.h.b16 %v2838
    %v3903 = vunpack.c.l.b16 %v2839
    %v3904 = vunpack.c.l.b16 %v2840
    %v3905 = vunpack.c.h.b16 %v2840
    %v3906 = vunpack.c.l.b16 %v2841
    %v3907 = vunpack.c.h.b16 %v2841
    %v3908 = vunpack.c.l.b16 %v2842
    %v3909 = vunpack.c.h.b16 %v2842
    %v3910 = vunpack.c.l.b16 %v2843
    %v3911 = vunpack.c.l.b16 %v2844
    %v3912 = vunpack.c.h.b16 %v2844
    %v3913 = vunpack.c.l.b16 %v2845
    %v3914 = vunpack.c.h.b16 %v2845
    %v3915 = vunpack.c.l.b16 %v2846
    %v3916 = vunpack.c.h.b16 %v2846
    %v3917 = vunpack.c.l.b16 %v2847
    %v3918 = vunpack.c.l.b16 %v2848
    %v3919 = vunpack.c.h.b16 %v2848
    %v3920 = vunpack.c.l.b16 %v2849
    %v3921 = vunpack.c.h.b16 %v2849
    %v3922 = vunpack.c.l.b16 %v2850
    %v3923 = vunpack.c.h.b16 %v2850
    %v3924 = vunpack.c.l.b16 %v2851
    %v3925 = vunpack.c.l.b16 %v2852
    %v3926 = vunpack.c.h.b16 %v2852
    %v3927 = vunpack.c.l.b16 %v2853
    %v3928 = vunpack.c.h.b16 %v2853
    %v3929 = vunpack.c.l.b16 %v2854
    %v3930 = vunpack.c.h.b16 %v2854
    %v3931 = vunpack.c.l.b16 %v2855
    %v3932 = vunpack.c.l.b16 %v2856
    %v3933 = vunpack.c.h.b16 %v2856
    %v3934 = vunpack.c.l.b16 %v2857
    %v3935 = vunpack.c.h.b16 %v2857
    %v3936 = vunpack.c.l.b16 %v2858
    %v3937 = vunpack.c.h.b16 %v2858
    %v3938 = vunpack.c.l.b16 %v2859
    %v3939 = vunpack.c.l.b16 %v2860
    %v3940 = vunpack.c.h.b16 %v2860
    %v3941 = vunpack.c.l.b16 %v2861
    %v3942 = vunpack.c.h.b16 %v2861
    %v3943 = vunpack.c.l.b16 %v2862
    %v3944 = vunpack.c.h.b16 %v2862
    %v3945 = vunpack.c.l.b16 %v2863
    %v3946 = vunpack.c.l.b16 %v2864
    %v3947 = vunpack.c.h.b16 %v2864
    %v3948 = vunpack.c.l.b16 %v2865
    %v3949 = vunpack.c.h.b16 %v2865
    %v3950 = vunpack.c.l.b16 %v2866
    %v3951 = vunpack.c.h.b16 %v2866
    %v3952 = vunpack.c.l.b16 %v2867
    %v3953 = vunpack.c.l.b16 %v2868
    %v3954 = vunpack.c.h.b16 %v2868
    %v3955 = vunpack.c.l.b16 %v2869
    %v3956 = vunpack.c.h.b16 %v2869
    %v3957 = vunpack.c.l.b16 %v2870
    %v3958 = vunpack.c.h.b16 %v2870
    %v3959 = vunpack.c.l.b16 %v2871
    %v3960 = vunpack.c.l.b16 %v2872
    %v3961 = vunpack.c.h.b16 %v2872
    %v3962 = vunpack.c.l.b16 %v2873
    %v3963 = vunpack.c.h.b16 %v2873
    %v3964 = vunpack.c.l.b16 %v2874
    %v3965 = vunpack.c.h.b16 %v2874
    %v3966 = vunpack.c.l.b16 %v2875
    %v3967 = vunpack.c.l.b16 %v2876
    %v3968 = vunpack.c.h.b16 %v2876
    %v3969 = vunpack.c.l.b16 %v2877
    %v3970 = vunpack.c.h.b16 %v2877
    %v3971 = vunpack.c.l.b16 %v2878
    %v3972 = vunpack.c.h.b16 %v2878
    %v3973 = vunpack.c.l.b16 %v2879
    %v3974 = vunpack.c.l.b16 %v2880
    %v3975 = vunpack.c.h.b16 %v2880
    %v3976 = vunpack.c.l.b16 %v2881
    %v3977 = vunpack.c.h.b16 %v2881
    %v3978 = vunpack.c.l.b16 %v2882
    %v3979 = vunpack.c.h.b16 %v2882
    %v3980 = vunpack.c.l.b16 %v2883
    %v3981 = vunpack.c.l.b16 %v2884
    %v3982 = vunpack.c.h.b16 %v2884
    %v3983 = vunpack.c.l.b16 %v2885
    %v3984 = vunpack.c.h.b16 %v2885
    %v3985 = vunpack.c.l.b16 %v2886
    %v3986 = vunpack.c.h.b16 %v2886
    %v3987 = vunpack.c.l.b16 %v2887
    %v3988 = vunpack.c.l.b16 %v2888
    %v3989 = vunpack.c.h.b16 %v2888
    %v3990 = vunpack.c.l.b16 %v2889
    %v3991 = vunpack.c.h.b16 %v2889
    %v3992 = vunpack.c.l.b16 %v2890
    %v3993 = vunpack.c.h.b16 %v2890
    %v3994 = vunpack.c.l.b16 %v2891
    %v3995 = vunpack.c.l.b16 %v2892
    %v3996 = vunpack.c.h.b16 %v2892
    %v3997 = vunpack.c.l.b16 %v2893
    %v3998 = vunpack.c.h.b16 %v2893
    %v3999 = vunpack.c.l.b16 %v2894
    %v4000 = vunpack.c.h.b16 %v2894
    %v4001 = vunpack.c.l.b16 %v2895
    %v4002 = vunpack.c.l.b16 %v2896
    %v4003 = vunpack.c.h.b16 %v2896
    %v4004 = vunpack.c.l.b16 %v2897
    %v4005 = vunpack.c.h.b16 %v2897
    %v4006 = vunpack.c.l.b16 %v2898
    %v4007 = vunpack.c.h.b16 %v2898
    %v4008 = vunpack.c.l.b16 %v2899
    %v4009 = vunpack.c.l.b16 %v2900
    %v4010 = vunpack.c.h.b16 %v2900
    %v4011 = vunpack.c.l.b16 %v2901
    %v4012 = vunpack.c.h.b16 %v2901
    %v4013 = vunpack.c.l.b16 %v2902
    %v4014 = vunpack.c.h.b16 %v2902
    %v4015 = vunpack.c.l.b16 %v2903
    %v4016 = vunpack.c.l.b16 %v2904
    %v4017 = vunpack.c.h.b16 %v2904
    %v4018 = vunpack.c.l.b16 %v2905
    %v4019 = vunpack.c.h.b16 %v2905
    %v4020 = vunpack.c.l.b16 %v2906
    %v4021 = vunpack.c.h.b16 %v2906
    %v4022 = vunpack.c.l.b16 %v2907
    %v4023 = vunpack.c.l.b16 %v2908
    %v4024 = vunpack.c.h.b16 %v2908
    %v4025 = vunpack.c.l.b16 %v2909
    %v4026 = vunpack.c.h.b16 %v2909
    %v4027 = vunpack.c.l.b16 %v2910
    %v4028 = vunpack.c.h.b16 %v2910
    %v4029 = vunpack.c.l.b16 %v2911
    %v4030 = vunpack.c.l.b16 %v2912
    %v4031 = vunpack.c.h.b16 %v2912
    %v4032 = vunpack.c.l.b16 %v2913
    %v4033 = vunpack.c.h.b16 %v2913
    %v4034 = vunpack.c.l.b16 %v2914
    %v4035 = vunpack.c.h.b16 %v2914
    %v4036 = vunpack.c.l.b16 %v2915
    %v4037 = vunpack.c.l.b16 %v2916
    %v4038 = vunpack.c.h.b16 %v2916
    %v4039 = vunpack.c.l.b16 %v2917
    %v4040 = vunpack.c.h.b16 %v2917
    %v4041 = vunpack.c.l.b16 %v2918
    %v4042 = vunpack.c.h.b16 %v2918
    %v4043 = vunpack.c.l.b16 %v2919
    %v4044 = vunpack.c.l.b16 %v2920
    %v4045 = vunpack.c.h.b16 %v2920
    %v4046 = vunpack.c.l.b16 %v2921
    %v4047 = vunpack.c.h.b16 %v2921
    %v4048 = vunpack.c.l.b16 %v2922
    %v4049 = vunpack.c.h.b16 %v2922
    %v4050 = vunpack.c.l.b16 %v2923
    %v4051 = vunpack.c.l.b16 %v2924
    %v4052 = vunpack.c.h.b16 %v2924
    %v4053 = vunpack.c.l.b16 %v2925
    %v4054 = vunpack.c.h.b16 %v2925
    %v4055 = vunpack.c.l.b16 %v2926
    %v4056 = vunpack.c.h.b16 %v2926
    %v4057 = vunpack.c.l.b16 %v2927
    %v4058 = vunpack.c.l.b16 %v2928
    %v4059 = vunpack.c.h.b16 %v2928
    %v4060 = vunpack.c.l.b16 %v2929
    %v4061 = vunpack.c.h.b16 %v2929
    %v4062 = vunpack.c.l.b16 %v2930
    %v4063 = vunpack.c.h.b16 %v2930
    %v4064 = vunpack.c.l.b16 %v2931
    %v4065 = vunpack.c.l.b16 %v2932
    %v4066 = vunpack.c.h.b16 %v2932
    %v4067 = vunpack.c.l.b16 %v2933
    %v4068 = vunpack.c.h.b16 %v2933
    %v4069 = vunpack.c.l.b16 %v2934
    %v4070 = vunpack.c.h.b16 %v2934
    %v4071 = vunpack.c.l.b16 %v2935
    %v4072 = vunpack.c.l.b16 %v2936
    %v4073 = vunpack.c.h.b16 %v2936
    %v4074 = vunpack.c.l.b16 %v2937
    %v4075 = vunpack.c.h.b16 %v2937
    %v4076 = vunpack.c.l.b16 %v2938
    %v4077 = vunpack.c.h.b16 %v2938
    %v4078 = vunpack.c.l.b16 %v2939
    %v4079 = vunpack.c.l.b16 %v2940
    %v4080 = vunpack.c.h.b16 %v2940
    %v4081 = vunpack.c.l.b16 %v2941
    %v4082 = vunpack.c.h.b16 %v2941
    %v4083 = vunpack.c.l.b16 %v2942
    %v4084 = vunpack.c.h.b16 %v2942
    %v4085 = vunpack.c.l.b16 %v2943
    %v4086 = vunpack.c.l.b16 %v2944
    %v4087 = vunpack.c.h.b16 %v2944
    %v4088 = vunpack.c.l.b16 %v2945
    %v4089 = vunpack.c.h.b16 %v2945
    %v4090 = vunpack.c.l.b16 %v2946
    %v4091 = vunpack.c.h.b16 %v2946
    %v4092 = vunpack.c.l.b16 %v2947
    %v4093 = vunpack.c.l.b16 %v2948
    %v4094 = vunpack.c.h.b16 %v2948
    %v4095 = vunpack.c.l.b16 %v2949
    %v4096 = vunpack.c.h.b16 %v2949
    %v4097 = vunpack.c.l.b16 %v2950
    %v4098 = vunpack.c.h.b16 %v2950
    %v4099 = vunpack.c.l.b16 %v2951
    %v4100 = vunpack.c.l.b16 %v2952
    %v4101 = vunpack.c.h.b16 %v2952
    %v4102 = vunpack.c.l.b16 %v2953
    %v4103 = vunpack.c.h.b16 %v2953
    %v4104 = vunpack.c.l.b16 %v2954
    %v4105 = vunpack.c.h.b16 %v2954
    %v4106 = vunpack.c.l.b16 %v2955
    %v4107 = vunpack.c.l.b16 %v2956
    %v4108 = vunpack.c.h.b16 %v2956
    %v4109 = vunpack.c.l.b16 %v2957
    %v4110 = vunpack.c.h.b16 %v2957
    %v4111 = vunpack.c.l.b16 %v2958
    %v4112 = vunpack.c.h.b16 %v2958
    %v4113 = vunpack.c.l.b16 %v2959
    %v4114 = vunpack.c.l.b16 %v2960
    %v4115 = vunpack.c.h.b16 %v2960
    %v4116 = vunpack.c.l.b16 %v2961
    %v4117 = vunpack.c.h.b16 %v2961
    %v4118 = vunpack.c.l.b16 %v2962
    %v4119 = vunpack.c.h.b16 %v2962
    %v4120 = vunpack.c.l.b16 %v2963
    %v4121 = vunpack.c.l.b16 %v2964
    %v4122 = vunpack.c.h.b16 %v2964
    %v4123 = vunpack.c.l.b16 %v2965
    %v4124 = vunpack.c.h.b16 %v2965
    %v4125 = vunpack.c.l.b16 %v2966
    %v4126 = vunpack.c.h.b16 %v2966
    %v4127 = vunpack.c.l.b16 %v2967
    %v4128 = vunpack.c.l.b16 %v2968
    %v4129 = vunpack.c.h.b16 %v2968
    %v4130 = vunpack.c.l.b16 %v2969
    %v4131 = vunpack.c.h.b16 %v2969
    %v4132 = vunpack.c.l.b16 %v2970
    %v4133 = vunpack.c.h.b16 %v2970
    %v4134 = vunpack.c.l.b16 %v2971
    %v4135 = vunpack.c.l.b16 %v2972
    %v4136 = vunpack.c.h.b16 %v2972
    %v4137 = vunpack.c.l.b16 %v2973
    %v4138 = vunpack.c.h.b16 %v2973
    %v4139 = vunpack.c.l.b16 %v2974
    %v4140 = vunpack.c.h.b16 %v2974
    %v4141 = vunpack.c.l.b16 %v2975
    %v4142 = vunpack.c.l.b16 %v2976
    %v4143 = vunpack.c.h.b16 %v2976
    %v4144 = vunpack.c.l.b16 %v2977
    %v4145 = vunpack.c.h.b16 %v2977
    %v4146 = vunpack.c.l.b16 %v2978
    %v4147 = vunpack.c.h.b16 %v2978
    %v4148 = vunpack.c.l.b16 %v2979
    %v4149 = vunpack.c.l.b16 %v2980
    %v4150 = vunpack.c.h.b16 %v2980
    %v4151 = vunpack.c.l.b16 %v2981
    %v4152 = vunpack.c.h.b16 %v2981
    %v4153 = vunpack.c.l.b16 %v2982
    %v4154 = vunpack.c.h.b16 %v2982
    %v4155 = vunpack.c.l.b16 %v2983
    %v4156 = vunpack.c.l.b16 %v2984
    %v4157 = vunpack.c.h.b16 %v2984
    %v4158 = vunpack.c.l.b16 %v2985
    %v4159 = vunpack.c.h.b16 %v2985
    %v4160 = vunpack.c.l.b16 %v2986
    %v4161 = vunpack.c.h.b16 %v2986
    %v4162 = vunpack.c.l.b16 %v2987
    %v4163 = vunpack.c.l.b16 %v2988
    %v4164 = vunpack.c.h.b16 %v2988
    %v4165 = vunpack.c.l.b16 %v2989
    %v4166 = vunpack.c.h.b16 %v2989
    %v4167 = vunpack.c.l.b16 %v2990
    %v4168 = vunpack.c.h.b16 %v2990
    %v4169 = vunpack.c.l.b16 %v2991
    %v4170 = vunpack.c.l.b16 %v2992
    %v4171 = vunpack.c.h.b16 %v2992
    %v4172 = vunpack.c.l.b16 %v2993
    %v4173 = vunpack.c.h.b16 %v2993
    %v4174 = vunpack.c.l.b16 %v2994
    %v4175 = vunpack.c.h.b16 %v2994
    %v4176 = vunpack.c.l.b16 %v2995
    %v4177 = vunpack.c.l.b16 %v2996
    %v4178 = vunpack.c.h.b16 %v2996
    %v4179 = vunpack.c.l.b16 %v2997
    %v4180 = vunpack.c.h.b16 %v2997
    %v4181 = vunpack.c.l.b16 %v2998
    %v4182 = vunpack.c.h.b16 %v2998
    %v4183 = vunpack.c.l.b16 %v2999
    %v4184 = vunpack.c.l.b16 %v3000
    %v4185 = vunpack.c.h.b16 %v3000
    %v4186 = vunpack.c.l.b16 %v3001
    %v4187 = vunpack.c.h.b16 %v3001
    %v4188 = vunpack.c.l.b16 %v3002
    %v4189 = vunpack.c.h.b16 %v3002
    %v4190 = vunpack.c.l.b16 %v3003
    %v4191 = vunpack.c.l.b16 %v3004
    %v4192 = vunpack.c.h.b16 %v3004
    %v4193 = vunpack.c.l.b16 %v3005
    %v4194 = vunpack.c.h.b16 %v3005
    %v4195 = vunpack.c.l.b16 %v3006
    %v4196 = vunpack.c.h.b16 %v3006
    %v4197 = vunpack.c.l.b16 %v3007
    %v4198 = vunpack.c.l.b16 %v3008
    %v4199 = vunpack.c.h.b16 %v3008
    %v4200 = vunpack.c.l.b16 %v3009
    %v4201 = vunpack.c.h.b16 %v3009
    %v4202 = vunpack.c.l.b16 %v3010
    %v4203 = vunpack.c.h.b16 %v3010
    %v4204 = vunpack.c.l.b16 %v3011
    %v4205 = vunpack.c.l.b16 %v3012
    %v4206 = vunpack.c.h.b16 %v3012
    %v4207 = vunpack.c.l.b16 %v3013
    %v4208 = vunpack.c.h.b16 %v3013
    %v4209 = vunpack.c.l.b16 %v3014
    %v4210 = vunpack.c.h.b16 %v3014
    %v4211 = vunpack.c.l.b16 %v3015
    %v4212 = vunpack.c.l.b16 %v3016
    %v4213 = vunpack.c.h.b16 %v3016
    %v4214 = vunpack.c.l.b16 %v3017
    %v4215 = vunpack.c.h.b16 %v3017
    %v4216 = vunpack.c.l.b16 %v3018
    %v4217 = vunpack.c.h.b16 %v3018
    %v4218 = vunpack.c.l.b16 %v3019
    %v4219 = vunpack.c.l.b16 %v3020
    %v4220 = vunpack.c.h.b16 %v3020
    %v4221 = vunpack.c.l.b16 %v3021
    %v4222 = vunpack.c.h.b16 %v3021
    %v4223 = vunpack.c.l.b16 %v3022
    %v4224 = vunpack.c.h.b16 %v3022
    %v4225 = vunpack.c.l.b16 %v3023
    %v4226 = vunpack.c.l.b16 %v3024
    %v4227 = vunpack.c.h.b16 %v3024
    %v4228 = vunpack.c.l.b16 %v3025
    %v4229 = vunpack.c.h.b16 %v3025
    %v4230 = vunpack.c.l.b16 %v3026
    %v4231 = vunpack.c.h.b16 %v3026
    %v4232 = vunpack.c.l.b16 %v3027
    %v4233 = vunpack.c.l.b16 %v3028
    %v4234 = vunpack.c.h.b16 %v3028
    %v4235 = vunpack.c.l.b16 %v3029
    %v4236 = vunpack.c.h.b16 %v3029
    %v4237 = vunpack.c.l.b16 %v3030
    %v4238 = vunpack.c.h.b16 %v3030
    %v4239 = vunpack.c.l.b16 %v3031
    %v4240 = vunpack.c.l.b16 %v3032
    %v4241 = vunpack.c.h.b16 %v3032
    %v4242 = vunpack.c.l.b16 %v3033
    %v4243 = vunpack.c.h.b16 %v3033
    %v4244 = vunpack.c.l.b16 %v3034
    %v4245 = vunpack.c.h.b16 %v3034
    %v4246 = vunpack.c.l.b16 %v3035
    %v4247 = vunpack.c.l.b16 %v3036
    %v4248 = vunpack.c.h.b16 %v3036
    %v4249 = vunpack.c.l.b16 %v3037
    %v4250 = vunpack.c.h.b16 %v3037
    %v4251 = vunpack.c.l.b16 %v3038
    %v4252 = vunpack.c.h.b16 %v3038
    %v4253 = vunpack.c.l.b16 %v3039
    %v4254 = vunpack.c.l.b16 %v3040
    %v4255 = vunpack.c.h.b16 %v3040
    %v4256 = vunpack.c.l.b16 %v3041
    %v4257 = vunpack.c.h.b16 %v3041
    %v4258 = vunpack.c.l.b16 %v3042
    %v4259 = vunpack.c.h.b16 %v3042
    %v4260 = vunpack.c.l.b16 %v3043
    %v4261 = vunpack.c.l.b16 %v3044
    %v4262 = vunpack.c.h.b16 %v3044
    %v4263 = vunpack.c.l.b16 %v3045
    %v4264 = vunpack.c.h.b16 %v3045
    %v4265 = vunpack.c.l.b16 %v3046
    %v4266 = vunpack.c.h.b16 %v3046
    %v4267 = vunpack.c.l.b16 %v3047
    %v4268 = vunpack.c.l.b16 %v3048
    %v4269 = vunpack.c.h.b16 %v3048
    %v4270 = vunpack.c.l.b16 %v3049
    %v4271 = vunpack.c.h.b16 %v3049
    %v4272 = vunpack.c.l.b16 %v3050
    %v4273 = vunpack.c.h.b16 %v3050
    %v4274 = vunpack.c.l.b16 %v3051
    %v4275 = vunpack.c.l.b16 %v3052
    %v4276 = vunpack.c.h.b16 %v3052
    %v4277 = vunpack.c.l.b16 %v3053
    %v4278 = vunpack.c.h.b16 %v3053
    %v4279 = vunpack.c.l.b16 %v3054
    %v4280 = vunpack.c.h.b16 %v3054
    %v4281 = vunpack.c.l.b16 %v3055
    %v4282 = vunpack.c.l.b16 %v3056
    %v4283 = vunpack.c.h.b16 %v3056
    %v4284 = vunpack.c.l.b16 %v3057
    %v4285 = vunpack.c.h.b16 %v3057
    %v4286 = vunpack.c.l.b16 %v3058
    %v4287 = vunpack.c.h.b16 %v3058
    %v4288 = vunpack.c.l.b16 %v3059
    %v4289 = vunpack.c.l.b16 %v3060
    %v4290 = vunpack.c.h.b16 %v3060
    %v4291 = vunpack.c.l.b16 %v3061
    %v4292 = vunpack.c.h.b16 %v3061
    %v4293 = vunpack.c.l.b16 %v3062
    %v4294 = vunpack.c.h.b16 %v3062
    %v4295 = vunpack.c.l.b16 %v3063
    %v4296 = vunpack.c.l.b16 %v3064
    %v4297 = vunpack.c.h.b16 %v3064
    %v4298 = vunpack.c.l.b16 %v3065
    %v4299 = vunpack.c.h.b16 %v3065
    %v4300 = vunpack.c.l.b16 %v3066
    %v4301 = vunpack.c.h.b16 %v3066
    %v4302 = vunpack.c.l.b16 %v3067
    %v4303 = vunpack.c.l.b16 %v3068
    %v4304 = vunpack.c.h.b16 %v3068
    %v4305 = vunpack.c.l.b16 %v3069
    %v4306 = vunpack.c.h.b16 %v3069
    %v4307 = vunpack.c.l.b16 %v3070
    %v4308 = vunpack.c.h.b16 %v3070
    %v4309 = vunpack.c.l.b16 %v3071
    %v4310 = vunpack.c.l.b16 %v3072
    %v4311 = vunpack.c.h.b16 %v3072
    %v4312 = vunpack.c.l.b16 %v3073
    %v4313 = vunpack.c.h.b16 %v3073
    %v4314 = vunpack.c.l.b16 %v3074
    %v4315 = vunpack.c.h.b16 %v3074
    %v4316 = vunpack.c.l.b16 %v3075
    %v4317 = vunpack.c.l.b16 %v3076
    %v4318 = vunpack.c.h.b16 %v3076
    %v4319 = vunpack.c.l.b16 %v3077
    %v4320 = vunpack.c.h.b16 %v3077
    %v4321 = vunpack.c.l.b16 %v3078
    %v4322 = vunpack.c.h.b16 %v3078
    %v4323 = vunpack.c.l.b16 %v3079
    %v4324 = vunpack.c.l.b16 %v3080
    %v4325 = vunpack.c.h.b16 %v3080
    %v4326 = vunpack.c.l.b16 %v3081
    %v4327 = vunpack.c.h.b16 %v3081
    %v4328 = vunpack.c.l.b16 %v3082
    %v4329 = vunpack.c.h.b16 %v3082
    %v4330 = vunpack.c.l.b16 %v3083
    %v4331 = vunpack.c.l.b16 %v3084
    %v4332 = vunpack.c.h.b16 %v3084
    %v4333 = vunpack.c.l.b16 %v3085
    %v4334 = vunpack.c.h.b16 %v3085
    %v4335 = vunpack.c.l.b16 %v3086
    %v4336 = vunpack.c.h.b16 %v3086
    %v4337 = vunpack.c.l.b16 %v3087
    %v4338 = vunpack.c.l.b16 %v3088
    %v4339 = vunpack.c.h.b16 %v3088
    %v4340 = vunpack.c.l.b16 %v3089
    %v4341 = vunpack.c.h.b16 %v3089
    %v4342 = vunpack.c.l.b16 %v3090
    %v4343 = vunpack.c.h.b16 %v3090
    %v4344 = vunpack.c.l.b16 %v3091
    %v4345 = vunpack.c.l.b16 %v3092
    %v4346 = vunpack.c.h.b16 %v3092
    %v4347 = vunpack.c.l.b16 %v3093
    %v4348 = vunpack.c.h.b16 %v3093
    %v4349 = vunpack.c.l.b16 %v3094
    %v4350 = vunpack.c.h.b16 %v3094
    %v4351 = vunpack.c.l.b16 %v3095
    %v4352 = vunpack.c.l.b16 %v3096
    %v4353 = vunpack.c.h.b16 %v3096
    %v4354 = vunpack.c.l.b16 %v3097
    %v4355 = vunpack.c.h.b16 %v3097
    %v4356 = vunpack.c.l.b16 %v3098
    %v4357 = vunpack.c.h.b16 %v3098
    %v4358 = vunpack.c.l.b16 %v3099
    %v4359 = vunpack.c.l.b16 %v3100
    %v4360 = vunpack.c.h.b16 %v3100
    %v4361 = vunpack.c.l.b16 %v3101
    %v4362 = vunpack.c.h.b16 %v3101
    %v4363 = vunpack.c.l.b16 %v3102
    %v4364 = vunpack.c.h.b16 %v3102
    %v4365 = vunpack.c.l.b16 %v3103
    %v4366 = vunpack.c.l.b16 %v3104
    %v4367 = vunpack.c.h.b16 %v3104
    %v4368 = vunpack.c.l.b16 %v3105
    %v4369 = vunpack.c.h.b16 %v3105
    %v4370 = vunpack.c.l.b16 %v3106
    %v4371 = vunpack.c.h.b16 %v3106
    %v4372 = vunpack.c.l.b16 %v3107
    %v4373 = vunpack.c.l.b16 %v3108
    %v4374 = vunpack.c.h.b16 %v3108
    %v4375 = vunpack.c.l.b16 %v3109
    %v4376 = vunpack.c.h.b16 %v3109
    %v4377 = vunpack.c.l.b16 %v3110
    %v4378 = vunpack.c.h.b16 %v3110
    %v4379 = vunpack.c.l.b16 %v3111
    %v4380 = vunpack.c.l.b16 %v3112
    %v4381 = vunpack.c.h.b16 %v3112
    %v4382 = vunpack.c.l.b16 %v3113
    %v4383 = vunpack.c.h.b16 %v3113
    %v4384 = vunpack.c.l.b16 %v3114
    %v4385 = vunpack.c.h.b16 %v3114
    %v4386 = vunpack.c.l.b16 %v3115
    %v4387 = vunpack.c.l.b16 %v3116
    %v4388 = vunpack.c.h.b16 %v3116
    %v4389 = vunpack.c.l.b16 %v3117
    %v4390 = vunpack.c.h.b16 %v3117
    %v4391 = vunpack.c.l.b16 %v3118
    %v4392 = vunpack.c.h.b16 %v3118
    %v4393 = vunpack.c.l.b16 %v3119
    %v4394 = vunpack.c.l.b16 %v3120
    %v4395 = vunpack.c.h.b16 %v3120
    %v4396 = vunpack.c.l.b16 %v3121
    %v4397 = vunpack.c.h.b16 %v3121
    %v4398 = vunpack.c.l.b16 %v3122
    %v4399 = vunpack.c.h.b16 %v3122
    %v4400 = vunpack.c.l.b16 %v3123
    %v4401 = vunpack.c.l.b16 %v3124
    %v4402 = vunpack.c.h.b16 %v3124
    %v4403 = vunpack.c.l.b16 %v3125
    %v4404 = vunpack.c.h.b16 %v3125
    %v4405 = vunpack.c.l.b16 %v3126
    %v4406 = vunpack.c.h.b16 %v3126
    %v4407 = vunpack.c.l.b16 %v3127
    %v4408 = vunpack.c.l.b16 %v3128
    %v4409 = vunpack.c.h.b16 %v3128
    %v4410 = vunpack.c.l.b16 %v3129
    %v4411 = vunpack.c.h.b16 %v3129
    %v4412 = vunpack.c.l.b16 %v3130
    %v4413 = vunpack.c.h.b16 %v3130
    %v4414 = vunpack.c.l.b16 %v3131
    %v4415 = vunpack.c.l.b16 %v3132
    %v4416 = vunpack.c.h.b16 %v3132
    %v4417 = vunpack.c.l.b16 %v3133
    %v4418 = vunpack.c.h.b16 %v3133
    %v4419 = vunpack.c.l.b16 %v3134
    %v4420 = vunpack.c.h.b16 %v3134
    %v4421 = vunpack.c.l.b16 %v3135
    %v4422 = vunpack.c.l.b16 %v3136
    %v4423 = vunpack.c.h.b16 %v3136
    %v4424 = vunpack.c.l.b16 %v3137
    %v4425 = vunpack.c.h.b16 %v3137
    %v4426 = vunpack.c.l.b16 %v3138
    %v4427 = vunpack.c.h.b16 %v3138
    %v4428 = vunpack.c.l.b16 %v3139
    %v4429 = vunpack.c.l.b16 %v3140
    %v4430 = vunpack.c.h.b16 %v3140
    %v4431 = vunpack.c.l.b16 %v3141
    %v4432 = vunpack.c.h.b16 %v3141
    %v4433 = vunpack.c.l.b16 %v3142
    %v4434 = vunpack.c.h.b16 %v3142
    %v4435 = vunpack.c.l.b16 %v3143
    %v4436 = vunpack.c.l.b16 %v3144
    %v4437 = vunpack.c.h.b16 %v3144
    %v4438 = vunpack.c.l.b16 %v3145
    %v4439 = vunpack.c.h.b16 %v3145
    %v4440 = vunpack.c.l.b16 %v3146
    %v4441 = vunpack.c.h.b16 %v3146
    %v4442 = vunpack.c.l.b16 %v3147
    %v4443 = vunpack.c.l.b16 %v3148
    %v4444 = vunpack.c.h.b16 %v3148
    %v4445 = vunpack.c.l.b16 %v3149
    %v4446 = vunpack.c.h.b16 %v3149
    %v4447 = vunpack.c.l.b16 %v3150
    %v4448 = vunpack.c.h.b16 %v3150
    %v4449 = vunpack.c.l.b16 %v3151
    %v4450 = vunpack.c.l.b16 %v3152
    %v4451 = vunpack.c.h.b16 %v3152
    %v4452 = vunpack.c.l.b16 %v3153
    %v4453 = vunpack.c.h.b16 %v3153
    %v4454 = vunpack.c.l.b16 %v3154
    %v4455 = vunpack.c.h.b16 %v3154
    %v4456 = vunpack.c.l.b16 %v3155
    %v4457 = vunpack.c.l.b16 %v3156
    %v4458 = vunpack.c.h.b16 %v3156
    %v4459 = vunpack.c.l.b16 %v3157
    %v4460 = vunpack.c.h.b16 %v3157
    %v4461 = vunpack.c.l.b16 %v3158
    %v4462 = vunpack.c.h.b16 %v3158
    %v4463 = vunpack.c.l.b16 %v3159
    %v4464 = vunpack.c.l.b16 %v3160
    %v4465 = vunpack.c.h.b16 %v3160
    %v4466 = vunpack.c.l.b16 %v3161
    %v4467 = vunpack.c.h.b16 %v3161
    %v4468 = vunpack.c.l.b16 %v3162
    %v4469 = vunpack.c.h.b16 %v3162
    %v4470 = vunpack.c.l.b16 %v3163
    %v4471 = vunpack.c.l.b16 %v3164
    %v4472 = vunpack.c.h.b16 %v3164
    %v4473 = vunpack.c.l.b16 %v3165
    %v4474 = vunpack.c.h.b16 %v3165
    %v4475 = vunpack.c.l.b16 %v3166
    %v4476 = vunpack.c.h.b16 %v3166
    %v4477 = vunpack.c.l.b16 %v3167
    %v4478 = vunpack.c.l.b16 %v3168
    %v4479 = vunpack.c.h.b16 %v3168
    %v4480 = vunpack.c.l.b16 %v3169
    %v4481 = vunpack.c.h.b16 %v3169
    %v4482 = vunpack.c.l.b16 %v3170
    %v4483 = vunpack.c.h.b16 %v3170
    %v4484 = vunpack.c.l.b16 %v3171
    %v4485 = vunpack.c.l.b16 %v3172
    %v4486 = vunpack.c.h.b16 %v3172
    %v4487 = vunpack.c.l.b16 %v3173
    %v4488 = vunpack.c.h.b16 %v3173
    %v4489 = vunpack.c.l.b16 %v3174
    %v4490 = vunpack.c.h.b16 %v3174
    %v4491 = vunpack.c.l.b16 %v3175
    %v4492 = vunpack.c.l.b16 %v3176
    %v4493 = vunpack.c.h.b16 %v3176
    %v4494 = vunpack.c.l.b16 %v3177
    %v4495 = vunpack.c.h.b16 %v3177
    %v4496 = vunpack.c.l.b16 %v3178
    %v4497 = vunpack.c.h.b16 %v3178
    %v4498 = vunpack.c.l.b16 %v3179
    %v4499 = vunpack.c.l.b16 %v3180
    %v4500 = vunpack.c.h.b16 %v3180
    %v4501 = vunpack.c.l.b16 %v3181
    %v4502 = vunpack.c.h.b16 %v3181
    %v4503 = vunpack.c.l.b16 %v3182
    %v4504 = vunpack.c.h.b16 %v3182
    %v4505 = vunpack.c.l.b16 %v3183
    %v4506 = vunpack.c.l.b16 %v3184
    %v4507 = vunpack.c.h.b16 %v3184
    %v4508 = vunpack.c.l.b16 %v3185
    %v4509 = vunpack.c.h.b16 %v3185
    %v4510 = vunpack.c.l.b16 %v3186
    %v4511 = vunpack.c.h.b16 %v3186
    %v4512 = vunpack.c.l.b16 %v3187
    %v4513 = vunpack.c.l.b16 %v3188
    %v4514 = vunpack.c.h.b16 %v3188
    %v4515 = vunpack.c.l.b16 %v3189
    %v4516 = vunpack.c.h.b16 %v3189
    %v4517 = vunpack.c.l.b16 %v3190
    %v4518 = vunpack.c.h.b16 %v3190
    %v4519 = vunpack.c.l.b16 %v3191
    %v4520 = vunpack.c.l.b16 %v3192
    %v4521 = vunpack.c.h.b16 %v3192
    %v4522 = vunpack.c.l.b16 %v3193
    %v4523 = vunpack.c.h.b16 %v3193
    %v4524 = vunpack.c.l.b16 %v3194
    %v4525 = vunpack.c.h.b16 %v3194
    %v4526 = vunpack.c.l.b16 %v3195
    %v4527 = vunpack.c.l.b16 %v3196
    %v4528 = vunpack.c.h.b16 %v3196
    %v4529 = vunpack.c.l.b16 %v3197
    %v4530 = vunpack.c.h.b16 %v3197
    %v4531 = vunpack.c.l.b16 %v3198
    %v4532 = vunpack.c.h.b16 %v3198
    %v4533 = vunpack.c.l.b16 %v3199
    %v4534 = vunpack.c.l.b16 %v3200
    %v4535 = vunpack.c.h.b16 %v3200
    %v4536 = vunpack.c.l.b16 %v3201
    %v4537 = vunpack.c.h.b16 %v3201
    %v4538 = vunpack.c.l.b16 %v3202
    %v4539 = vunpack.c.h.b16 %v3202
    %v4540 = vunpack.c.l.b16 %v3203
    %v4541 = vunpack.c.l.b16 %v3204
    %v4542 = vunpack.c.h.b16 %v3204
    %v4543 = vunpack.c.l.b16 %v3205
    %v4544 = vunpack.c.h.b16 %v3205
    %v4545 = vunpack.c.l.b16 %v3206
    %v4546 = vunpack.c.h.b16 %v3206
    %v4547 = vunpack.c.l.b16 %v3207
    %v4548 = vunpack.c.l.b16 %v3208
    %v4549 = vunpack.c.h.b16 %v3208
    %v4550 = vunpack.c.l.b16 %v3209
    %v4551 = vunpack.c.h.b16 %v3209
    %v4552 = vunpack.c.l.b16 %v3210
    %v4553 = vunpack.c.h.b16 %v3210
    %v4554 = vunpack.c.l.b16 %v3211
    %v4555 = vunpack.c.l.b16 %v3212
    %v4556 = vunpack.c.h.b16 %v3212
    %v4557 = vunpack.c.l.b16 %v3213
    %v4558 = vunpack.c.h.b16 %v3213
    %v4559 = vunpack.c.l.b16 %v3214
    %v4560 = vunpack.c.h.b16 %v3214
    %v4561 = vunpack.c.l.b16 %v3215
    %v4562 = vunpack.c.l.b16 %v3216
    %v4563 = vunpack.c.h.b16 %v3216
    %v4564 = vunpack.c.l.b16 %v3217
    %v4565 = vunpack.c.h.b16 %v3217
    %v4566 = vunpack.c.l.b16 %v3218
    %v4567 = vunpack.c.h.b16 %v3218
    %v4568 = vunpack.c.l.b16 %v3219
    %v4569 = vunpack.c.l.b16 %v3220
    %v4570 = vunpack.c.h.b16 %v3220
    %v4571 = vunpack.c.l.b16 %v3221
    %v4572 = vunpack.c.h.b16 %v3221
    %v4573 = vunpack.c.l.b16 %v3222
    %v4574 = vunpack.c.h.b16 %v3222
    %v4575 = vunpack.c.l.b16 %v3223
    %v4576 = vunpack.c.l.b16 %v3224
    %v4577 = vunpack.c.h.b16 %v3224
    %v4578 = vunpack.c.l.b16 %v3225
    %v4579 = vunpack.c.h.b16 %v3225
    %v4580 = vunpack.c.l.b16 %v3226
    %v4581 = vunpack.c.h.b16 %v3226
    %v4582 = vunpack.c.l.b16 %v3227
    %v4583 = vunpack.c.l.b16 %v3228
    %v4584 = vunpack.c.h.b16 %v3228
    %v4585 = vunpack.c.l.b16 %v3229
    %v4586 = vunpack.c.h.b16 %v3229
    %v4587 = vunpack.c.l.b16 %v3230
    %v4588 = vunpack.c.h.b16 %v3230
    %v4589 = vunpack.c.l.b16 %v3231
    %v4590 = vunpack.c.l.b16 %v3232
    %v4591 = vunpack.c.h.b16 %v3232
    %v4592 = vunpack.c.l.b16 %v3233
    %v4593 = vunpack.c.h.b16 %v3233
    %v4594 = vunpack.c.l.b16 %v3234
    %v4595 = vunpack.c.h.b16 %v3234
    %v4596 = vunpack.c.l.b16 %v3235
    %v4597 = vunpack.c.l.b16 %v3236
    %v4598 = vunpack.c.h.b16 %v3236
    %v4599 = vunpack.c.l.b16 %v3237
    %v4600 = vunpack.c.h.b16 %v3237
    %v4601 = vunpack.c.l.b16 %v3238
    %v4602 = vunpack.c.h.b16 %v3238
    %v4603 = vunpack.c.l.b16 %v3239
    %v4604 = vunpack.c.l.b16 %v3240
    %v4605 = vunpack.c.h.b16 %v3240
    %v4606 = vunpack.c.l.b16 %v3241
    %v4607 = vunpack.c.h.b16 %v3241
    %v4608 = vunpack.c.l.b16 %v3242
    %v4609 = vunpack.c.h.b16 %v3242
    %v4610 = vunpack.c.l.b16 %v3243
    %v4611 = vunpack.c.l.b16 %v3244
    %v4612 = vunpack.c.h.b16 %v3244
    %v4613 = vunpack.c.l.b16 %v3245
    %v4614 = vunpack.c.h.b16 %v3245
    %v4615 = vunpack.c.l.b16 %v3246
    %v4616 = vunpack.c.h.b16 %v3246
    %v4617 = vunpack.c.l.b16 %v3247
    %v4618 = vunpack.c.l.b16 %v3248
    %v4619 = vunpack.c.h.b16 %v3248
    %v4620 = vunpack.c.l.b16 %v3249
    %v4621 = vunpack.c.h.b16 %v3249
    %v4622 = vunpack.c.l.b16 %v3250
    %v4623 = vunpack.c.h.b16 %v3250
    %v4624 = vunpack.c.l.b16 %v3251
    %v4625 = vunpack.c.l.b16 %v3252
    %v4626 = vunpack.c.h.b16 %v3252
    %v4627 = vunpack.c.l.b16 %v3253
    %v4628 = vunpack.c.h.b16 %v3253
    %v4629 = vunpack.c.l.b16 %v3254
    %v4630 = vunpack.c.h.b16 %v3254
    %v4631 = vunpack.c.l.b16 %v3255
    %v4632 = vunpack.c.l.b16 %v3256
    %v4633 = vunpack.c.h.b16 %v3256
    %v4634 = vunpack.c.l.b16 %v3257
    %v4635 = vunpack.c.h.b16 %v3257
    %v4636 = vunpack.c.l.b16 %v3258
    %v4637 = vunpack.c.h.b16 %v3258
    %v4638 = vunpack.c.l.b16 %v3259
    %v4639 = vunpack.c.l.b16 %v3260
    %v4640 = vunpack.c.h.b16 %v3260
    %v4641 = vunpack.c.l.b16 %v3261
    %v4642 = vunpack.c.h.b16 %v3261
    %v4643 = vunpack.c.l.b16 %v3262
    %v4644 = vunpack.c.h.b16 %v3262
    %v4645 = vunpack.c.l.b16 %v3263
    %v4646 = vunpack.c.l.b16 %v3264
    %v4647 = vunpack.c.h.b16 %v3264
    %v4648 = vunpack.c.l.b16 %v3265
    %v4649 = vunpack.c.h.b16 %v3265
    %v4650 = vunpack.c.l.b16 %v3266
    %v4651 = vunpack.c.h.b16 %v3266
    %v4652 = vunpack.c.l.b16 %v3267
    %v4653 = vunpack.c.l.b16 %v3268
    %v4654 = vunpack.c.h.b16 %v3268
    %v4655 = vunpack.c.l.b16 %v3269
    %v4656 = vunpack.c.h.b16 %v3269
    %v4657 = vunpack.c.l.b16 %v3270
    %v4658 = vunpack.c.h.b16 %v3270
    %v4659 = vunpack.c.l.b16 %v3271
    %v4660 = vunpack.c.l.b16 %v3272
    %v4661 = vunpack.c.h.b16 %v3272
    %v4662 = vunpack.c.l.b16 %v3273
    %v4663 = vunpack.c.h.b16 %v3273
    %v4664 = vunpack.c.l.b16 %v3274
    %v4665 = vunpack.c.h.b16 %v3274
    %v4666 = vunpack.c.l.b16 %v3275
    %v4667 = vunpack.c.l.b16 %v3276
    %v4668 = vunpack.c.h.b16 %v3276
    %v4669 = vunpack.c.l.b16 %v3277
    %v4670 = vunpack.c.h.b16 %v3277
    %v4671 = vunpack.c.l.b16 %v3278
    %v4672 = vunpack.c.h.b16 %v3278
    %v4673 = vunpack.c.l.b16 %v3279
    %v4674 = vunpack.c.l.b16 %v3280
    %v4675 = vunpack.c.h.b16 %v3280
    %v4676 = vunpack.c.l.b16 %v3281
    %v4677 = vunpack.c.h.b16 %v3281
    %v4678 = vunpack.c.l.b16 %v3282
    %v4679 = vunpack.c.h.b16 %v3282
    %v4680 = vunpack.c.l.b16 %v3283
    %v4681 = vunpack.c.l.b16 %v3284
    %v4682 = vunpack.c.h.b16 %v3284
    %v4683 = vunpack.c.l.b16 %v3285
    %v4684 = vunpack.c.h.b16 %v3285
    %v4685 = vunpack.c.l.b16 %v3286
    %v4686 = vunpack.c.h.b16 %v3286
    %v4687 = vunpack.c.l.b16 %v3287
    %v4688 = vunpack.c.l.b16 %v3288
    %v4689 = vunpack.c.h.b16 %v3288
    %v4690 = vunpack.c.l.b16 %v3289
    %v4691 = vunpack.c.h.b16 %v3289
    %v4692 = vunpack.c.l.b16 %v3290
    %v4693 = vunpack.c.h.b16 %v3290
    %v4694 = vunpack.c.l.b16 %v3291
    %v4695 = vunpack.c.l.b16 %v3292
    %v4696 = vunpack.c.h.b16 %v3292
    %v4697 = vunpack.c.l.b16 %v3293
    %v4698 = vunpack.c.h.b16 %v3293
    %v4699 = vunpack.c.l.b16 %v3294
    %v4700 = vunpack.c.h.b16 %v3294
    %v4701 = vunpack.c.l.b16 %v3295
    %v4702 = vunpack.c.l.b16 %v3296
    %v4703 = vunpack.c.h.b16 %v3296
    %v4704 = vunpack.c.l.b16 %v3297
    %v4705 = vunpack.c.h.b16 %v3297
    %v4706 = vunpack.c.l.b16 %v3298
    %v4707 = vunpack.c.h.b16 %v3298
    %v4708 = vunpack.c.l.b16 %v3299
    %v4709 = vunpack.c.l.b16 %v3300
    %v4710 = vunpack.c.h.b16 %v3300
    %v4711 = vunpack.c.l.b16 %v3301
    %v4712 = vunpack.c.h.b16 %v3301
    %v4713 = vunpack.c.l.b16 %v3302
    %v4714 = vunpack.c.h.b16 %v3302
    %v4715 = vunpack.c.l.b16 %v3303
    %v4716 = vunpack.c.l.b16 %v3304
    %v4717 = vunpack.c.h.b16 %v3304
    %v4718 = vunpack.c.l.b16 %v3305
    %v4719 = vunpack.c.h.b16 %v3305
    %v4720 = vunpack.c.l.b16 %v3306
    %v4721 = vunpack.c.h.b16 %v3306
    %v4722 = vunpack.c.l.b16 %v3307
    %v4723 = vunpack.c.l.b16 %v3308
    %v4724 = vunpack.c.h.b16 %v3308
    %v4725 = vunpack.c.l.b16 %v3309
    %v4726 = vunpack.c.h.b16 %v3309
    %v4727 = vunpack.c.l.b16 %v3310
    %v4728 = vunpack.c.h.b16 %v3310
    %v4729 = vunpack.c.l.b16 %v3311
    %v4730 = vunpack.c.l.b16 %v3312
    %v4731 = vunpack.c.h.b16 %v3312
    %v4732 = vunpack.c.l.b16 %v3313
    %v4733 = vunpack.c.h.b16 %v3313
    %v4734 = vunpack.c.l.b16 %v3314
    %v4735 = vunpack.c.h.b16 %v3314
    %v4736 = vunpack.c.l.b16 %v3315
    %v4737 = vunpack.c.l.b16 %v3316
    %v4738 = vunpack.c.h.b16 %v3316
    %v4739 = vunpack.c.l.b16 %v3317
    %v4740 = vunpack.c.h.b16 %v3317
    %v4741 = vunpack.c.l.b16 %v3318
    %v4742 = vunpack.c.h.b16 %v3318
    %v4743 = vunpack.c.l.b16 %v3319
    %v4744 = vunpack.c.l.b16 %v3320
    %v4745 = vunpack.c.h.b16 %v3320
    %v4746 = vunpack.c.l.b16 %v3321
    %v4747 = vunpack.c.h.b16 %v3321
    %v4748 = vunpack.c.l.b16 %v3322
    %v4749 = vunpack.c.h.b16 %v3322
    %v4750 = vunpack.c.l.b16 %v3323
    %v4751 = vunpack.c.l.b16 %v3324
    %v4752 = vunpack.c.h.b16 %v3324
    %v4753 = vunpack.c.l.b16 %v3325
    %v4754 = vunpack.c.h.b16 %v3325
    %v4755 = vunpack.c.l.b16 %v3326
    %v4756 = vunpack.c.h.b16 %v3326
    %v4757 = vunpack.c.l.b16 %v3327
    %v4758 = vunpack.c.l.b16 %v3328
    %v4759 = vunpack.c.h.b16 %v3328
    %v4760 = vunpack.c.l.b16 %v3329
    %v4761 = vunpack.c.h.b16 %v3329
    %v4762 = vunpack.c.l.b16 %v3330
    %v4763 = vunpack.c.h.b16 %v3330
    %v4764 = vunpack.c.l.b16 %v3331
    %v4765 = vunpack.c.l.b16 %v3332
    %v4766 = vunpack.c.h.b16 %v3332
    %v4767 = vunpack.c.l.b16 %v3333
    %v4768 = vunpack.c.h.b16 %v3333
    %v4769 = vunpack.c.l.b16 %v3334
    %v4770 = vunpack.c.h.b16 %v3334
    %v4771 = vunpack.c.l.b16 %v3335
    %v4772 = vunpack.c.l.b16 %v3336
    %v4773 = vunpack.c.h.b16 %v3336
    %v4774 = vunpack.c.l.b16 %v3337
    %v4775 = vunpack.c.h.b16 %v3337
    %v4776 = vunpack.c.l.b16 %v3338
    %v4777 = vunpack.c.h.b16 %v3338
    %v4778 = vunpack.c.l.b16 %v3339
    %v4779 = vunpack.c.l.b16 %v3340
    %v4780 = vunpack.c.h.b16 %v3340
    %v4781 = vunpack.c.l.b16 %v3341
    %v4782 = vunpack.c.h.b16 %v3341
    %v4783 = vunpack.c.l.b16 %v3342
    %v4784 = vunpack.c.h.b16 %v3342
    %v4785 = vunpack.c.l.b16 %v3343
    %v4786 = vunpack.c.l.b16 %v3344
    %v4787 = vunpack.c.h.b16 %v3344
    %v4788 = vunpack.c.l.b16 %v3345
    %v4789 = vunpack.c.h.b16 %v3345
    %v4790 = vunpack.c.l.b16 %v3346
    %v4791 = vunpack.c.h.b16 %v3346
    %v4792 = vunpack.c.l.b16 %v3347
    %v4793 = vpack.c.b16 %v3904, %v3897
    %v4794 = vpack.c.b16 %v3905, %v3898
    %v4795 = vpack.c.b16 %v3906, %v3899
    %v4796 = vpack.c.b16 %v3907, %v3900
    %v4797 = vpack.c.b16 %v3908, %v3901
    %v4798 = vpack.c.b16 %v3909, %v3902
    %v4799 = vpack.c.b16 %v3910, %v3903
    %v4800 = vpack.c.b16 %v3918, %v3911
    %v4801 = vpack.c.b16 %v3919, %v3912
    %v4802 = vpack.c.b16 %v3920, %v3913
    %v4803 = vpack.c.b16 %v3921, %v3914
    %v4804 = vpack.c.b16 %v3922, %v3915
    %v4805 = vpack.c.b16 %v3923, %v3916
    %v4806 = vpack.c.b16 %v3924, %v3917
    %v4807 = vpack.c.b16 %v3932, %v3925
    %v4808 = vpack.c.b16 %v3933, %v3926
    %v4809 = vpack.c.b16 %v3934, %v3927
    %v4810 = vpack.c.b16 %v3935, %v3928
    %v4811 = vpack.c.b16 %v3936, %v3929
    %v4812 = vpack.c.b16 %v3937, %v3930
    %v4813 = vpack.c.b16 %v3938, %v3931
    %v4814 = vpack.c.b16 %v3946, %v3939
    %v4815 = vpack.c.b16 %v3947, %v3940
    %v4816 = vpack.c.b16 %v3948, %v3941
    %v4817 = vpack.c.b16 %v3949, %v3942
    %v4818 = vpack.c.b16 %v3950, %v3943
    %v4819 = vpack.c.b16 %v3951, %v3944
    %v4820 = vpack.c.b16 %v3952, %v3945
    %v4821 = vpack.c.b16 %v3960, %v3953
    %v4822 = vpack.c.b16 %v3961, %v3954
    %v4823 = vpack.c.b16 %v3962, %v3955
    %v4824 = vpack.c.b16 %v3963, %v3956
    %v4825 = vpack.c.b16 %v3964, %v3957
    %v4826 = vpack.c.b16 %v3965, %v3958
    %v4827 = vpack.c.b16 %v3966, %v3959
    %v4828 = vpack.c.b16 %v3974, %v3967
    %v4829 = vpack.c.b16 %v3975, %v3968
    %v4830 = vpack.c.b16 %v3976, %v3969
    %v4831 = vpack.c.b16 %v3977, %v3970
    %v4832 = vpack.c.b16 %v3978, %v3971
    %v4833 = vpack.c.b16 %v3979, %v3972
    %v4834 = vpack.c.b16 %v3980, %v3973
    %v4835 = vpack.c.b16 %v3988, %v3981
    %v4836 = vpack.c.b16 %v3989, %v3982
    %v4837 = vpack.c.b16 %v3990, %v3983
    %v4838 = vpack.c.b16 %v3991, %v3984
    %v4839 = vpack.c.b16 %v3992, %v3985
    %v4840 = vpack.c.b16 %v3993, %v3986
    %v4841 = vpack.c.b16 %v3994, %v3987
    %v4842 = vpack.c.b16 %v4002, %v3995
    %v4843 = vpack.c.b16 %v4003, %v3996
    %v4844 = vpack.c.b16 %v4004, %v3997
    %v4845 = vpack.c.b16 %v4005, %v3998
    %v4846 = vpack.c.b16 %v4006, %v3999
    %v4847 = vpack.c.b16 %v4007, %v4000
    %v4848 = vpack.c.b16 %v4008, %v4001
    %v4849 = vpack.c.b16 %v4016, %v4009
    %v4850 = vpack.c.b16 %v4017, %v4010
    %v4851 = vpack.c.b16 %v4018, %v4011
    %v4852 = vpack.c.b16 %v4019, %v4012
    %v4853 = vpack.c.b16 %v4020, %v4013
    %v4854 = vpack.c.b16 %v4021, %v4014
    %v4855 = vpack.c.b16 %v4022, %v4015
    %v4856 = vpack.c.b16 %v4030, %v4023
    %v4857 = vpack.c.b16 %v4031, %v4024
    %v4858 = vpack.c.b16 %v4032, %v4025
    %v4859 = vpack.c.b16 %v4033, %v4026
    %v4860 = vpack.c.b16 %v4034, %v4027
    %v4861 = vpack.c.b16 %v4035, %v4028
    %v4862 = vpack.c.b16 %v4036, %v4029
    %v4863 = vpack.c.b16 %v4044, %v4037
    %v4864 = vpack.c.b16 %v4045, %v4038
    %v4865 = vpack.c.b16 %v4046, %v4039
    %v4866 = vpack.c.b16 %v4047, %v4040
    %v4867 = vpack.c.b16 %v4048, %v4041
    %v4868 = vpack.c.b16 %v4049, %v4042
    %v4869 = vpack.c.b16 %v4050, %v4043
    %v4870 = vpack.c.b16 %v4058, %v4051
    %v4871 = vpack.c.b16 %v4059, %v4052
    %v4872 = vpack.c.b16 %v4060, %v4053
    %v4873 = vpack.c.b16 %v4061, %v4054
    %v4874 = vpack.c.b16 %v4062, %v4055
    %v4875 = vpack.c.b16 %v4063, %v4056
    %v4876 = vpack.c.b16 %v4064, %v4057
    %v4877 = vpack.c.b16 %v4072, %v4065
    %v4878 = vpack.c.b16 %v4073, %v4066
    %v4879 = vpack.c.b16 %v4074, %v4067
    %v4880 = vpack.c.b16 %v4075, %v4068
    %v4881 = vpack.c.b16 %v4076, %v4069
    %v4882 = vpack.c.b16 %v4077, %v4070
    %v4883 = vpack.c.b16 %v4078, %v4071
    %v4884 = vpack.c.b16 %v4086, %v4079
    %v4885 = vpack.c.b16 %v4087, %v4080
    %v4886 = vpack.c.b16 %v4088, %v4081
    %v4887 = vpack.c.b16 %v4089, %v4082
    %v4888 = vpack.c.b16 %v4090, %v4083
    %v4889 = vpack.c.b16 %v4091, %v4084
    %v4890 = vpack.c.b16 %v4092, %v4085
    %v4891 = vpack.c.b16 %v4100, %v4093
    %v4892 = vpack.c.b16 %v4101, %v4094
    %v4893 = vpack.c.b16 %v4102, %v4095
    %v4894 = vpack.c.b16 %v4103, %v4096
    %v4895 = vpack.c.b16 %v4104, %v4097
    %v4896 = vpack.c.b16 %v4105, %v4098
    %v4897 = vpack.c.b16 %v4106, %v4099
    %v4898 = vpack.c.b16 %v4114, %v4107
    %v4899 = vpack.c.b16 %v4115, %v4108
    %v4900 = vpack.c.b16 %v4116, %v4109
    %v4901 = vpack.c.b16 %v4117, %v4110
    %v4902 = vpack.c.b16 %v4118, %v4111
    %v4903 = vpack.c.b16 %v4119, %v4112
    %v4904 = vpack.c.b16 %v4120, %v4113
    %v4905 = vpack.c.b16 %v4128, %v4121
    %v4906 = vpack.c.b16 %v4129, %v4122
    %v4907 = vpack.c.b16 %v4130, %v4123
    %v4908 = vpack.c.b16 %v4131, %v4124
    %v4909 = vpack.c.b16 %v4132, %v4125
    %v4910 = vpack.c.b16 %v4133, %v4126
    %v4911 = vpack.c.b16 %v4134, %v4127
    %v4912 = vpack.c.b16 %v4142, %v4135
    %v4913 = vpack.c.b16 %v4143, %v4136
    %v4914 = vpack.c.b16 %v4144, %v4137
    %v4915 = vpack.c.b16 %v4145, %v4138
    %v4916 = vpack.c.b16 %v4146, %v4139
    %v4917 = vpack.c.b16 %v4147, %v4140
    %v4918 = vpack.c.b16 %v4148, %v4141
    %v4919 = vpack.c.b16 %v4156, %v4149
    %v4920 = vpack.c.b16 %v4157, %v4150
    %v4921 = vpack.c.b16 %v4158, %v4151
    %v4922 = vpack.c.b16 %v4159, %v4152
    %v4923 = vpack.c.b16 %v4160, %v4153
    %v4924 = vpack.c.b16 %v4161, %v4154
    %v4925 = vpack.c.b16 %v4162, %v4155
    %v4926 = vpack.c.b16 %v4170, %v4163
    %v4927 = vpack.c.b16 %v4171, %v4164
    %v4928 = vpack.c.b16 %v4172, %v4165
    %v4929 = vpack.c.b16 %v4173, %v4166
    %v4930 = vpack.c.b16 %v4174, %v4167
    %v4931 = vpack.c.b16 %v4175, %v4168
    %v4932 = vpack.c.b16 %v4176, %v4169
    %v4933 = vpack.c.b16 %v4184, %v4177
    %v4934 = vpack.c.b16 %v4185, %v4178
    %v4935 = vpack.c.b16 %v4186, %v4179
    %v4936 = vpack.c.b16 %v4187, %v4180
    %v4937 = vpack.c.b16 %v4188, %v4181
    %v4938 = vpack.c.b16 %v4189, %v4182
    %v4939 = vpack.c.b16 %v4190, %v4183
    %v4940 = vpack.c.b16 %v4198, %v4191
    %v4941 = vpack.c.b16 %v4199, %v4192
    %v4942 = vpack.c.b16 %v4200, %v4193
    %v4943 = vpack.c.b16 %v4201, %v4194
    %v4944 = vpack.c.b16 %v4202, %v4195
    %v4945 = vpack.c.b16 %v4203, %v4196
    %v4946 = vpack.c.b16 %v4204, %v4197
    %v4947 = vpack.c.b16 %v4212, %v4205
    %v4948 = vpack.c.b16 %v4213, %v4206
    %v4949 = vpack.c.b16 %v4214, %v4207
    %v4950 = vpack.c.b16 %v4215, %v4208
    %v4951 = vpack.c.b16 %v4216, %v4209
    %v4952 = vpack.c.b16 %v4217, %v4210
    %v4953 = vpack.c.b16 %v4218, %v4211
    %v4954 = vpack.c.b16 %v4226, %v4219
    %v4955 = vpack.c.b16 %v4227, %v4220
    %v4956 = vpack.c.b16 %v4228, %v4221
    %v4957 = vpack.c.b16 %v4229, %v4222
    %v4958 = vpack.c.b16 %v4230, %v4223
    %v4959 = vpack.c.b16 %v4231, %v4224
    %v4960 = vpack.c.b16 %v4232, %v4225
    %v4961 = vpack.c.b16 %v4240, %v4233
    %v4962 = vpack.c.b16 %v4241, %v4234
    %v4963 = vpack.c.b16 %v4242, %v4235
    %v4964 = vpack.c.b16 %v4243, %v4236
    %v4965 = vpack.c.b16 %v4244, %v4237
    %v4966 = vpack.c.b16 %v4245, %v4238
    %v4967 = vpack.c.b16 %v4246, %v4239
    %v4968 = vpack.c.b16 %v4254, %v4247
    %v4969 = vpack.c.b16 %v4255, %v4248
    %v4970 = vpack.c.b16 %v4256, %v4249
    %v4971 = vpack.c.b16 %v4257, %v4250
    %v4972 = vpack.c.b16 %v4258, %v4251
    %v4973 = vpack.c.b16 %v4259, %v4252
    %v4974 = vpack.c.b16 %v4260, %v4253
    %v4975 = vpack.c.b16 %v4268, %v4261
    %v4976 = vpack.c.b16 %v4269, %v4262
    %v4977 = vpack.c.b16 %v4270, %v4263
    %v4978 = vpack.c.b16 %v4271, %v4264
    %v4979 = vpack.c.b16 %v4272, %v4265
    %v4980 = vpack.c.b16 %v4273, %v4266
    %v4981 = vpack.c.b16 %v4274, %v4267
    %v4982 = vpack.c.b16 %v4282, %v4275
    %v4983 = vpack.c.b16 %v4283, %v4276
    %v4984 = vpack.c.b16 %v4284, %v4277
    %v4985 = vpack.c.b16 %v4285, %v4278
    %v4986 = vpack.c.b16 %v4286, %v4279
    %v4987 = vpack.c.b16 %v4287, %v4280
    %v4988 = vpack.c.b16 %v4288, %v4281
    %v4989 = vpack.c.b16 %v4296, %v4289
    %v4990 = vpack.c.b16 %v4297, %v4290
    %v4991 = vpack.c.b16 %v4298, %v4291
    %v4992 = vpack.c.b16 %v4299, %v4292
    %v4993 = vpack.c.b16 %v4300, %v4293
    %v4994 = vpack.c.b16 %v4301, %v4294
    %v4995 = vpack.c.b16 %v4302, %v4295
    %v4996 = vpack.c.b16 %v4310, %v4303
    %v4997 = vpack.c.b16 %v4311, %v4304
    %v4998 = vpack.c.b16 %v4312, %v4305
    %v4999 = vpack.c.b16 %v4313, %v4306
    %v5000 = vpack.c.b16 %v4314, %v4307
    %v5001 = vpack.c.b16 %v4315, %v4308
    %v5002 = vpack.c.b16 %v4316, %v4309
    %v5003 = vpack.c.b16 %v4324, %v4317
    %v5004 = vpack.c.b16 %v4325, %v4318
    %v5005 = vpack.c.b16 %v4326, %v4319
    %v5006 = vpack.c.b16 %v4327, %v4320
    %v5007 = vpack.c.b16 %v4328, %v4321
    %v5008 = vpack.c.b16 %v4329, %v4322
    %v5009 = vpack.c.b16 %v4330, %v4323
    %v5010 = vpack.c.b16 %v4338, %v4331
    %v5011 = vpack.c.b16 %v4339, %v4332
    %v5012 = vpack.c.b16 %v4340, %v4333
    %v5013 = vpack.c.b16 %v4341, %v4334
    %v5014 = vpack.c.b16 %v4342, %v4335
    %v5015 = vpack.c.b16 %v4343, %v4336
    %v5016 = vpack.c.b16 %v4344, %v4337
    %v5017 = vpack.c.b16 %v4352, %v4345
    %v5018 = vpack.c.b16 %v4353, %v4346
    %v5019 = vpack.c.b16 %v4354, %v4347
    %v5020 = vpack.c.b16 %v4355, %v4348
    %v5021 = vpack.c.b16 %v4356, %v4349
    %v5022 = vpack.c.b16 %v4357, %v4350
    %v5023 = vpack.c.b16 %v4358, %v4351
    %v5024 = vpack.c.b16 %v4366, %v4359
    %v5025 = vpack.c.b16 %v4367, %v4360
    %v5026 = vpack.c.b16 %v4368, %v4361
    %v5027 = vpack.c.b16 %v4369, %v4362
    %v5028 = vpack.c.b16 %v4370, %v4363
    %v5029 = vpack.c.b16 %v4371, %v4364
    %v5030 = vpack.c.b16 %v4372, %v4365
    %v5031 = vpack.c.b16 %v4380, %v4373
    %v5032 = vpack.c.b16 %v4381, %v4374
    %v5033 = vpack.c.b16 %v4382, %v4375
    %v5034 = vpack.c.b16 %v4383, %v4376
    %v5035 = vpack.c.b16 %v4384, %v4377
    %v5036 = vpack.c.b16 %v4385, %v4378
    %v5037 = vpack.c.b16 %v4386, %v4379
    %v5038 = vpack.c.b16 %v4394, %v4387
    %v5039 = vpack.c.b16 %v4395, %v4388
    %v5040 = vpack.c.b16 %v4396, %v4389
    %v5041 = vpack.c.b16 %v4397, %v4390
    %v5042 = vpack.c.b16 %v4398, %v4391
    %v5043 = vpack.c.b16 %v4399, %v4392
    %v5044 = vpack.c.b16 %v4400, %v4393
    %v5045 = vpack.c.b16 %v4408, %v4401
    %v5046 = vpack.c.b16 %v4409, %v4402
    %v5047 = vpack.c.b16 %v4410, %v4403
    %v5048 = vpack.c.b16 %v4411, %v4404
    %v5049 = vpack.c.b16 %v4412, %v4405
    %v5050 = vpack.c.b16 %v4413, %v4406
    %v5051 = vpack.c.b16 %v4414, %v4407
    %v5052 = vpack.c.b16 %v4422, %v4415
    %v5053 = vpack.c.b16 %v4423, %v4416
    %v5054 = vpack.c.b16 %v4424, %v4417
    %v5055 = vpack.c.b16 %v4425, %v4418
    %v5056 = vpack.c.b16 %v4426, %v4419
    %v5057 = vpack.c.b16 %v4427, %v4420
    %v5058 = vpack.c.b16 %v4428, %v4421
    %v5059 = vpack.c.b16 %v4436, %v4429
    %v5060 = vpack.c.b16 %v4437, %v4430
    %v5061 = vpack.c.b16 %v4438, %v4431
    %v5062 = vpack.c.b16 %v4439, %v4432
    %v5063 = vpack.c.b16 %v4440, %v4433
    %v5064 = vpack.c.b16 %v4441, %v4434
    %v5065 = vpack.c.b16 %v4442, %v4435
    %v5066 = vpack.c.b16 %v4450, %v4443
    %v5067 = vpack.c.b16 %v4451, %v4444
    %v5068 = vpack.c.b16 %v4452, %v4445
    %v5069 = vpack.c.b16 %v4453, %v4446
    %v5070 = vpack.c.b16 %v4454, %v4447
    %v5071 = vpack.c.b16 %v4455, %v4448
    %v5072 = vpack.c.b16 %v4456, %v4449
    %v5073 = vpack.c.b16 %v4464, %v4457
    %v5074 = vpack.c.b16 %v4465, %v4458
    %v5075 = vpack.c.b16 %v4466, %v4459
    %v5076 = vpack.c.b16 %v4467, %v4460
    %v5077 = vpack.c.b16 %v4468, %v4461
    %v5078 = vpack.c.b16 %v4469, %v4462
    %v5079 = vpack.c.b16 %v4470, %v4463
    %v5080 = vpack.c.b16 %v4478, %v4471
    %v5081 = vpack.c.b16 %v4479, %v4472
    %v5082 = vpack.c.b16 %v4480, %v4473
    %v5083 = vpack.c.b16 %v4481, %v4474
    %v5084 = vpack.c.b16 %v4482, %v4475
    %v5085 = vpack.c.b16 %v4483, %v4476
    %v5086 = vpack.c.b16 %v4484, %v4477
    %v5087 = vpack.c.b16 %v4492, %v4485
    %v5088 = vpack.c.b16 %v4493, %v4486
    %v5089 = vpack.c.b16 %v4494, %v4487
    %v5090 = vpack.c.b16 %v4495, %v4488
    %v5091 = vpack.c.b16 %v4496, %v4489
    %v5092 = vpack.c.b16 %v4497, %v4490
    %v5093 = vpack.c.b16 %v4498, %v4491
    %v5094 = vpack.c.b16 %v4506, %v4499
    %v5095 = vpack.c.b16 %v4507, %v4500
    %v5096 = vpack.c.b16 %v4508, %v4501
    %v5097 = vpack.c.b16 %v4509, %v4502
    %v5098 = vpack.c.b16 %v4510, %v4503
    %v5099 = vpack.c.b16 %v4511, %v4504
    %v5100 = vpack.c.b16 %v4512, %v4505
    %v5101 = vpack.c.b16 %v4520, %v4513
    %v5102 = vpack.c.b16 %v4521, %v4514
    %v5103 = vpack.c.b16 %v4522, %v4515
    %v5104 = vpack.c.b16 %v4523, %v4516
    %v5105 = vpack.c.b16 %v4524, %v4517
    %v5106 = vpack.c.b16 %v4525, %v4518
    %v5107 = vpack.c.b16 %v4526, %v4519
    %v5108 = vpack.c.b16 %v4534, %v4527
    %v5109 = vpack.c.b16 %v4535, %v4528
    %v5110 = vpack.c.b16 %v4536, %v4529
    %v5111 = vpack.c.b16 %v4537, %v4530
    %v5112 = vpack.c.b16 %v4538, %v4531
    %v5113 = vpack.c.b16 %v4539, %v4532
    %v5114 = vpack.c.b16 %v4540, %v4533
    %v5115 = vpack.c.b16 %v4548, %v4541
    %v5116 = vpack.c.b16 %v4549, %v4542
    %v5117 = vpack.c.b16 %v4550, %v4543
    %v5118 = vpack.c.b16 %v4551, %v4544
    %v5119 = vpack.c.b16 %v4552, %v4545
    %v5120 = vpack.c.b16 %v4553, %v4546
    %v5121 = vpack.c.b16 %v4554, %v4547
    %v5122 = vpack.c.b16 %v4562, %v4555
    %v5123 = vpack.c.b16 %v4563, %v4556
    %v5124 = vpack.c.b16 %v4564, %v4557
    %v5125 = vpack.c.b16 %v4565, %v4558
    %v5126 = vpack.c.b16 %v4566, %v4559
    %v5127 = vpack.c.b16 %v4567, %v4560
    %v5128 = vpack.c.b16 %v4568, %v4561
    %v5129 = vpack.c.b16 %v4576, %v4569
    %v5130 = vpack.c.b16 %v4577, %v4570
    %v5131 = vpack.c.b16 %v4578, %v4571
    %v5132 = vpack.c.b16 %v4579, %v4572
    %v5133 = vpack.c.b16 %v4580, %v4573
    %v5134 = vpack.c.b16 %v4581, %v4574
    %v5135 = vpack.c.b16 %v4582, %v4575
    %v5136 = vpack.c.b16 %v4590, %v4583
    %v5137 = vpack.c.b16 %v4591, %v4584
    %v5138 = vpack.c.b16 %v4592, %v4585
    %v5139 = vpack.c.b16 %v4593, %v4586
    %v5140 = vpack.c.b16 %v4594, %v4587
    %v5141 = vpack.c.b16 %v4595, %v4588
    %v5142 = vpack.c.b16 %v4596, %v4589
    %v5143 = vpack.c.b16 %v4604, %v4597
    %v5144 = vpack.c.b16 %v4605, %v4598
    %v5145 = vpack.c.b16 %v4606, %v4599
    %v5146 = vpack.c.b16 %v4607, %v4600
    %v5147 = vpack.c.b16 %v4608, %v4601
    %v5148 = vpack.c.b16 %v4609, %v4602
    %v5149 = vpack.c.b16 %v4610, %v4603
    %v5150 = vpack.c.b16 %v4618, %v4611
    %v5151 = vpack.c.b16 %v4619, %v4612
    %v5152 = vpack.c.b16 %v4620, %v4613
    %v5153 = vpack.c.b16 %v4621, %v4614
    %v5154 = vpack.c.b16 %v4622, %v4615
    %v5155 = vpack.c.b16 %v4623, %v4616
    %v5156 = vpack.c.b16 %v4624, %v4617
    %v5157 = vpack.c.b16 %v4632, %v4625
    %v5158 = vpack.c.b16 %v4633, %v4626
    %v5159 = vpack.c.b16 %v4634, %v4627
    %v5160 = vpack.c.b16 %v4635, %v4628
    %v5161 = vpack.c.b16 %v4636, %v4629
    %v5162 = vpack.c.b16 %v4637, %v4630
    %v5163 = vpack.c.b16 %v4638, %v4631
    %v5164 = vpack.c.b16 %v4646, %v4639
    %v5165 = vpack.c.b16 %v4647, %v4640
    %v5166 = vpack.c.b16 %v4648, %v4641
    %v5167 = vpack.c.b16 %v4649, %v4642
    %v5168 = vpack.c.b16 %v4650, %v4643
    %v5169 = vpack.c.b16 %v4651, %v4644
    %v5170 = vpack.c.b16 %v4652, %v4645
    %v5171 = vpack.c.b16 %v4660, %v4653
    %v5172 = vpack.c.b16 %v4661, %v4654
    %v5173 = vpack.c.b16 %v4662, %v4655
    %v5174 = vpack.c.b16 %v4663, %v4656
    %v5175 = vpack.c.b16 %v4664, %v4657
    %v5176 = vpack.c.b16 %v4665, %v4658
    %v5177 = vpack.c.b16 %v4666, %v4659
    %v5178 = vpack.c.b16 %v4674, %v4667
    %v5179 = vpack.c.b16 %v4675, %v4668
    %v5180 = vpack.c.b16 %v4676, %v4669
    %v5181 = vpack.c.b16 %v4677, %v4670
    %v5182 = vpack.c.b16 %v4678, %v4671
    %v5183 = vpack.c.b16 %v4679, %v4672
    %v5184 = vpack.c.b16 %v4680, %v4673
    %v5185 = vpack.c.b16 %v4688, %v4681
    %v5186 = vpack.c.b16 %v4689, %v4682
    %v5187 = vpack.c.b16 %v4690, %v4683
    %v5188 = vpack.c.b16 %v4691, %v4684
    %v5189 = vpack.c.b16 %v4692, %v4685
    %v5190 = vpack.c.b16 %v4693, %v4686
    %v5191 = vpack.c.b16 %v4694, %v4687
    %v5192 = vpack.c.b16 %v4702, %v4695
    %v5193 = vpack.c.b16 %v4703, %v4696
    %v5194 = vpack.c.b16 %v4704, %v4697
    %v5195 = vpack.c.b16 %v4705, %v4698
    %v5196 = vpack.c.b16 %v4706, %v4699
    %v5197 = vpack.c.b16 %v4707, %v4700
    %v5198 = vpack.c.b16 %v4708, %v4701
    %v5199 = vpack.c.b16 %v4716, %v4709
    %v5200 = vpack.c.b16 %v4717, %v4710
    %v5201 = vpack.c.b16 %v4718, %v4711
    %v5202 = vpack.c.b16 %v4719, %v4712
    %v5203 = vpack.c.b16 %v4720, %v4713
    %v5204 = vpack.c.b16 %v4721, %v4714
    %v5205 = vpack.c.b16 %v4722, %v4715
    %v5206 = vpack.c.b16 %v4730, %v4723
    %v5207 = vpack.c.b16 %v4731, %v4724
    %v5208 = vpack.c.b16 %v4732, %v4725
    %v5209 = vpack.c.b16 %v4733, %v4726
    %v5210 = vpack.c.b16 %v4734, %v4727
    %v5211 = vpack.c.b16 %v4735, %v4728
    %v5212 = vpack.c.b16 %v4736, %v4729
    %v5213 = vpack.c.b16 %v4744, %v4737
    %v5214 = vpack.c.b16 %v4745, %v4738
    %v5215 = vpack.c.b16 %v4746, %v4739
    %v5216 = vpack.c.b16 %v4747, %v4740
    %v5217 = vpack.c.b16 %v4748, %v4741
    %v5218 = vpack.c.b16 %v4749, %v4742
    %v5219 = vpack.c.b16 %v4750, %v4743
    %v5220 = vpack.c.b16 %v4758, %v4751
    %v5221 = vpack.c.b16 %v4759, %v4752
    %v5222 = vpack.c.b16 %v4760, %v4753
    %v5223 = vpack.c.b16 %v4761, %v4754
    %v5224 = vpack.c.b16 %v4762, %v4755
    %v5225 = vpack.c.b16 %v4763, %v4756
    %v5226 = vpack.c.b16 %v4764, %v4757
    %v5227 = vpack.c.b16 %v4772, %v4765
    %v5228 = vpack.c.b16 %v4773, %v4766
    %v5229 = vpack.c.b16 %v4774, %v4767
    %v5230 = vpack.c.b16 %v4775, %v4768
    %v5231 = vpack.c.b16 %v4776, %v4769
    %v5232 = vpack.c.b16 %v4777, %v4770
    %v5233 = vpack.c.b16 %v4778, %v4771
    %v5234 = vpack.c.b16 %v4786, %v4779
    %v5235 = vpack.c.b16 %v4787, %v4780
    %v5236 = vpack.c.b16 %v4788, %v4781
    %v5237 = vpack.c.b16 %v4789, %v4782
    %v5238 = vpack.c.b16 %v4790, %v4783
    %v5239 = vpack.c.b16 %v4791, %v4784
    %v5240 = vpack.c.b16 %v4792, %v4785
    %5689 = vmatprep.subr.bf16.mxu0 %v4843
    %5690 = vmatpush1.bf16.msra.mxu0 %v4842
    %5691 = vmatprep.subr.bf16.mxu0 %v4836
    %5692 = vmatpush1.bf16.msra.mxu0 %v4835
    %5693 = vmatprep.subr.bf16.mxu0 %v4829
    %5694 = vmatpush1.bf16.msra.mxu0 %v4828
    %5695 = vmatprep.subr.bf16.mxu0 %v4822
    %5696 = vmatpush1.bf16.msra.mxu0 %v4821
    %5697 = vmatprep.subr.bf16.mxu0 %v4815
    %5698 = vmatpush1.bf16.msra.mxu0 %v4814
    %5699 = vmatprep.subr.bf16.mxu0 %v4808
    %5700 = vmatpush1.bf16.msra.mxu0 %v4807
    %5701 = vmatprep.subr.bf16.mxu0 %v4801
    %5702 = vmatpush1.bf16.msra.mxu0 %v4800
    %5703 = vmatprep.subr.bf16.mxu0 %v4794
    %5704 = vmatpush1.bf16.msra.mxu0 %v4793
    %5705 = vmatprep.subr.bf16.mxu0 %v4899
    %5706 = vmatpush2.bf16.msra.mxu0 %v4898
    %5707 = vmatprep.subr.bf16.mxu0 %v4892
    %5708 = vmatpush2.bf16.msra.mxu0 %v4891
    %5709 = vmatprep.subr.bf16.mxu0 %v4885
    %5710 = vmatpush2.bf16.msra.mxu0 %v4884
    %5711 = vmatprep.subr.bf16.mxu0 %v4878
    %5712 = vmatpush2.bf16.msra.mxu0 %v4877
    %5713 = vmatprep.subr.bf16.mxu0 %v4871
    %5714 = vmatpush2.bf16.msra.mxu0 %v4870
    %5715 = vmatprep.subr.bf16.mxu0 %v4864
    %5716 = vmatpush2.bf16.msra.mxu0 %v4863
    %5717 = vmatprep.subr.bf16.mxu0 %v4857
    %5718 = vmatpush2.bf16.msra.mxu0 %v4856
    %5719 = vmatprep.subr.bf16.mxu0 %v4850
    %5720 = vmatpush2.bf16.msra.mxu0 %v4849
    %5721 = vmatprep.mubr.bf16.mxu0 %v2829
    %5722 = vmatmul.mubr.bf16.gmra.mxu0 %v2828
    %v5723 = vpop.f32.mrf.mxu0
    %v5724 = vadd.f32 %v3353, %v5723
    %v5725 = vpop.f32.mrf.mxu0
    %v5726 = vadd.f32 %v3357, %v5725
    %v5727 = vpop.f32.mrf.mxu0
    %v5728 = vpop.f32.mrf.mxu0
    %5729 = vdwg.mxu0
    %5730 = vmatprep.subr.bf16.mxu0 %v4955
    %5731 = vmatpush1.bf16.msra.mxu0 %v4954
    %5732 = vmatprep.subr.bf16.mxu0 %v4948
    %5733 = vmatpush1.bf16.msra.mxu0 %v4947
    %5734 = vmatprep.subr.bf16.mxu0 %v4941
    %5735 = vmatpush1.bf16.msra.mxu0 %v4940
    %5736 = vmatprep.subr.bf16.mxu0 %v4934
    %5737 = vmatpush1.bf16.msra.mxu0 %v4933
    %5738 = vmatprep.subr.bf16.mxu0 %v4927
    %5739 = vmatpush1.bf16.msra.mxu0 %v4926
    %5740 = vmatprep.subr.bf16.mxu0 %v4920
    %5741 = vmatpush1.bf16.msra.mxu0 %v4919
    %5742 = vmatprep.subr.bf16.mxu0 %v4913
    %5743 = vmatpush1.bf16.msra.mxu0 %v4912
    %5744 = vmatprep.subr.bf16.mxu0 %v4906
    %5745 = vmatpush1.bf16.msra.mxu0 %v4905
    %5746 = vmatprep.subr.bf16.mxu0 %v5011
    %5747 = vmatpush2.bf16.msra.mxu0 %v5010
    %5748 = vmatprep.subr.bf16.mxu0 %v5004
    %5749 = vmatpush2.bf16.msra.mxu0 %v5003
    %5750 = vmatprep.subr.bf16.mxu0 %v4997
    %5751 = vmatpush2.bf16.msra.mxu0 %v4996
    %5752 = vmatprep.subr.bf16.mxu0 %v4990
    %5753 = vmatpush2.bf16.msra.mxu0 %v4989
    %5754 = vmatprep.subr.bf16.mxu0 %v4983
    %5755 = vmatpush2.bf16.msra.mxu0 %v4982
    %5756 = vmatprep.subr.bf16.mxu0 %v4976
    %5757 = vmatpush2.bf16.msra.mxu0 %v4975
    %5758 = vmatprep.subr.bf16.mxu0 %v4969
    %5759 = vmatpush2.bf16.msra.mxu0 %v4968
    %5760 = vmatprep.subr.bf16.mxu0 %v4962
    %5761 = vmatpush2.bf16.msra.mxu0 %v4961
    %5762 = vmatprep.mubr.bf16.mxu0 %v2831
    %5763 = vmatmul.mubr.bf16.gmra.mxu0 %v2830
    %v5764 = vpop.f32.mrf.mxu0
    %v5765 = vadd.f32 %v5724, %v5764
    %v5766 = vpop.f32.mrf.mxu0
    %v5767 = vadd.f32 %v5726, %v5766
    %v5768 = vpop.f32.mrf.mxu0
    %v5769 = vpop.f32.mrf.mxu0
    %5770 = vdwg.mxu0
    %5771 = vmatprep.subr.bf16.mxu0 %v5067
    %5772 = vmatpush1.bf16.msra.mxu0 %v5066
    %5773 = vmatprep.subr.bf16.mxu0 %v5060
    %5774 = vmatpush1.bf16.msra.mxu0 %v5059
    %5775 = vmatprep.subr.bf16.mxu0 %v5053
    %5776 = vmatpush1.bf16.msra.mxu0 %v5052
    %5777 = vmatprep.subr.bf16.mxu0 %v5046
    %5778 = vmatpush1.bf16.msra.mxu0 %v5045
    %5779 = vmatprep.subr.bf16.mxu0 %v5039
    %5780 = vmatpush1.bf16.msra.mxu0 %v5038
    %5781 = vmatprep.subr.bf16.mxu0 %v5032
    %5782 = vmatpush1.bf16.msra.mxu0 %v5031
    %5783 = vmatprep.subr.bf16.mxu0 %v5025
    %5784 = vmatpush1.bf16.msra.mxu0 %v5024
    %5785 = vmatprep.subr.bf16.mxu0 %v5018
    %5786 = vmatpush1.bf16.msra.mxu0 %v5017
    %5787 = vmatprep.subr.bf16.mxu0 %v5123
    %5788 = vmatpush2.bf16.msra.mxu0 %v5122
    %5789 = vmatprep.subr.bf16.mxu0 %v5116
    %5790 = vmatpush2.bf16.msra.mxu0 %v5115
    %5791 = vmatprep.subr.bf16.mxu0 %v5109
    %5792 = vmatpush2.bf16.msra.mxu0 %v5108
    %5793 = vmatprep.subr.bf16.mxu0 %v5102
    %5794 = vmatpush2.bf16.msra.mxu0 %v5101
    %5795 = vmatprep.subr.bf16.mxu0 %v5095
    %5796 = vmatpush2.bf16.msra.mxu0 %v5094
    %5797 = vmatprep.subr.bf16.mxu0 %v5088
    %5798 = vmatpush2.bf16.msra.mxu0 %v5087
    %5799 = vmatprep.subr.bf16.mxu0 %v5081
    %5800 = vmatpush2.bf16.msra.mxu0 %v5080
    %5801 = vmatprep.subr.bf16.mxu0 %v5074
    %5802 = vmatpush2.bf16.msra.mxu0 %v5073
    %5803 = vmatprep.mubr.bf16.mxu0 %v2833
    %5804 = vmatmul.mubr.bf16.gmra.mxu0 %v2832
    %v5805 = vpop.f32.mrf.mxu0
    %v5806 = vadd.f32 %v5765, %v5805
    %v5807 = vpop.f32.mrf.mxu0
    %v5808 = vadd.f32 %v5767, %v5807
    %v5809 = vpop.f32.mrf.mxu0
    %v5810 = vpop.f32.mrf.mxu0
    %5811 = vdwg.mxu0
    %5812 = vmatprep.subr.bf16.mxu0 %v5179
    %5813 = vmatpush1.bf16.msra.mxu0 %v5178
    %5814 = vmatprep.subr.bf16.mxu0 %v5172
    %5815 = vmatpush1.bf16.msra.mxu0 %v5171
    %5816 = vmatprep.subr.bf16.mxu0 %v5165
    %5817 = vmatpush1.bf16.msra.mxu0 %v5164
    %5818 = vmatprep.subr.bf16.mxu0 %v5158
    %5819 = vmatpush1.bf16.msra.mxu0 %v5157
    %5820 = vmatprep.subr.bf16.mxu0 %v5151
    %5821 = vmatpush1.bf16.msra.mxu0 %v5150
    %5822 = vmatprep.subr.bf16.mxu0 %v5144
    %5823 = vmatpush1.bf16.msra.mxu0 %v5143
    %5824 = vmatprep.subr.bf16.mxu0 %v5137
    %5825 = vmatpush1.bf16.msra.mxu0 %v5136
    %5826 = vmatprep.subr.bf16.mxu0 %v5130
    %5827 = vmatpush1.bf16.msra.mxu0 %v5129
    %5828 = vmatprep.subr.bf16.mxu0 %v5235
    %5829 = vmatpush2.bf16.msra.mxu0 %v5234
    %5830 = vmatprep.subr.bf16.mxu0 %v5228
    %5831 = vmatpush2.bf16.msra.mxu0 %v5227
    %5832 = vmatprep.subr.bf16.mxu0 %v5221
    %5833 = vmatpush2.bf16.msra.mxu0 %v5220
    %5834 = vmatprep.subr.bf16.mxu0 %v5214
    %5835 = vmatpush2.bf16.msra.mxu0 %v5213
    %5836 = vmatprep.subr.bf16.mxu0 %v5207
    %5837 = vmatpush2.bf16.msra.mxu0 %v5206
    %5838 = vmatprep.subr.bf16.mxu0 %v5200
    %5839 = vmatpush2.bf16.msra.mxu0 %v5199
    %5840 = vmatprep.subr.bf16.mxu0 %v5193
    %5841 = vmatpush2.bf16.msra.mxu0 %v5192
    %5842 = vmatprep.subr.bf16.mxu0 %v5186
    %5843 = vmatpush2.bf16.msra.mxu0 %v5185
    %5844 = vmatprep.mubr.bf16.mxu0 %v2835
    %5845 = vmatmul.mubr.bf16.gmra.mxu0 %v2834
    %v5846 = vpop.f32.mrf.mxu0
    %v5847 = vadd.f32 %v5806, %v5846
    %v5848 = vpop.f32.mrf.mxu0
    %v5849 = vadd.f32 %v5808, %v5848
    %v5850 = vpop.f32.mrf.mxu0
    %v5851 = vpop.f32.mrf.mxu0
    %5852 = vdwg.mxu0
    %5853 = vmatprep.subr.bf16.mxu0 %v4845
    %5854 = vmatpush1.bf16.msra.mxu0 %v4844
    %5855 = vmatprep.subr.bf16.mxu0 %v4838
    %5856 = vmatpush1.bf16.msra.mxu0 %v4837
    %5857 = vmatprep.subr.bf16.mxu0 %v4831
    %5858 = vmatpush1.bf16.msra.mxu0 %v4830
    %5859 = vmatprep.subr.bf16.mxu0 %v4824
    %5860 = vmatpush1.bf16.msra.mxu0 %v4823
    %5861 = vmatprep.subr.bf16.mxu0 %v4817
    %5862 = vmatpush1.bf16.msra.mxu0 %v4816
    %5863 = vmatprep.subr.bf16.mxu0 %v4810
    %5864 = vmatpush1.bf16.msra.mxu0 %v4809
    %5865 = vmatprep.subr.bf16.mxu0 %v4803
    %5866 = vmatpush1.bf16.msra.mxu0 %v4802
    %5867 = vmatprep.subr.bf16.mxu0 %v4796
    %5868 = vmatpush1.bf16.msra.mxu0 %v4795
    %5869 = vmatprep.subr.bf16.mxu0 %v4901
    %5870 = vmatpush2.bf16.msra.mxu0 %v4900
    %5871 = vmatprep.subr.bf16.mxu0 %v4894
    %5872 = vmatpush2.bf16.msra.mxu0 %v4893
    %5873 = vmatprep.subr.bf16.mxu0 %v4887
    %5874 = vmatpush2.bf16.msra.mxu0 %v4886
    %5875 = vmatprep.subr.bf16.mxu0 %v4880
    %5876 = vmatpush2.bf16.msra.mxu0 %v4879
    %5877 = vmatprep.subr.bf16.mxu0 %v4873
    %5878 = vmatpush2.bf16.msra.mxu0 %v4872
    %5879 = vmatprep.subr.bf16.mxu0 %v4866
    %5880 = vmatpush2.bf16.msra.mxu0 %v4865
    %5881 = vmatprep.subr.bf16.mxu0 %v4859
    %5882 = vmatpush2.bf16.msra.mxu0 %v4858
    %5883 = vmatprep.subr.bf16.mxu0 %v4852
    %5884 = vmatpush2.bf16.msra.mxu0 %v4851
    %5885 = vmatprep.mubr.bf16.mxu0 %v2829
    %5886 = vmatmul.mubr.bf16.gmra.mxu0 %v2828
    %v5887 = vpop.f32.mrf.mxu0
    %v5888 = vadd.f32 %v3361, %v5887
    %v5889 = vpop.f32.mrf.mxu0
    %v5890 = vadd.f32 %v3365, %v5889
    %v5891 = vpop.f32.mrf.mxu0
    %v5892 = vpop.f32.mrf.mxu0
    %5893 = vdwg.mxu0
    %5894 = vmatprep.subr.bf16.mxu0 %v4957
    %5895 = vmatpush1.bf16.msra.mxu0 %v4956
    %5896 = vmatprep.subr.bf16.mxu0 %v4950
    %5897 = vmatpush1.bf16.msra.mxu0 %v4949
    %5898 = vmatprep.subr.bf16.mxu0 %v4943
    %5899 = vmatpush1.bf16.msra.mxu0 %v4942
    %5900 = vmatprep.subr.bf16.mxu0 %v4936
    %5901 = vmatpush1.bf16.msra.mxu0 %v4935
    %5902 = vmatprep.subr.bf16.mxu0 %v4929
    %5903 = vmatpush1.bf16.msra.mxu0 %v4928
    %5904 = vmatprep.subr.bf16.mxu0 %v4922
    %5905 = vmatpush1.bf16.msra.mxu0 %v4921
    %5906 = vmatprep.subr.bf16.mxu0 %v4915
    %5907 = vmatpush1.bf16.msra.mxu0 %v4914
    %5908 = vmatprep.subr.bf16.mxu0 %v4908
    %5909 = vmatpush1.bf16.msra.mxu0 %v4907
    %5910 = vmatprep.subr.bf16.mxu0 %v5013
    %5911 = vmatpush2.bf16.msra.mxu0 %v5012
    %5912 = vmatprep.subr.bf16.mxu0 %v5006
    %5913 = vmatpush2.bf16.msra.mxu0 %v5005
    %5914 = vmatprep.subr.bf16.mxu0 %v4999
    %5915 = vmatpush2.bf16.msra.mxu0 %v4998
    %5916 = vmatprep.subr.bf16.mxu0 %v4992
    %5917 = vmatpush2.bf16.msra.mxu0 %v4991
    %5918 = vmatprep.subr.bf16.mxu0 %v4985
    %5919 = vmatpush2.bf16.msra.mxu0 %v4984
    %5920 = vmatprep.subr.bf16.mxu0 %v4978
    %5921 = vmatpush2.bf16.msra.mxu0 %v4977
    %5922 = vmatprep.subr.bf16.mxu0 %v4971
    %5923 = vmatpush2.bf16.msra.mxu0 %v4970
    %5924 = vmatprep.subr.bf16.mxu0 %v4964
    %5925 = vmatpush2.bf16.msra.mxu0 %v4963
    %5926 = vmatprep.mubr.bf16.mxu0 %v2831
    %5927 = vmatmul.mubr.bf16.gmra.mxu0 %v2830
    %v5928 = vpop.f32.mrf.mxu0
    %v5929 = vadd.f32 %v5888, %v5928
    %v5930 = vpop.f32.mrf.mxu0
    %v5931 = vadd.f32 %v5890, %v5930
    %v5932 = vpop.f32.mrf.mxu0
    %v5933 = vpop.f32.mrf.mxu0
    %5934 = vdwg.mxu0
    %5935 = vmatprep.subr.bf16.mxu0 %v5069
    %5936 = vmatpush1.bf16.msra.mxu0 %v5068
    %5937 = vmatprep.subr.bf16.mxu0 %v5062
    %5938 = vmatpush1.bf16.msra.mxu0 %v5061
    %5939 = vmatprep.subr.bf16.mxu0 %v5055
    %5940 = vmatpush1.bf16.msra.mxu0 %v5054
    %5941 = vmatprep.subr.bf16.mxu0 %v5048
    %5942 = vmatpush1.bf16.msra.mxu0 %v5047
    %5943 = vmatprep.subr.bf16.mxu0 %v5041
    %5944 = vmatpush1.bf16.msra.mxu0 %v5040
    %5945 = vmatprep.subr.bf16.mxu0 %v5034
    %5946 = vmatpush1.bf16.msra.mxu0 %v5033
    %5947 = vmatprep.subr.bf16.mxu0 %v5027
    %5948 = vmatpush1.bf16.msra.mxu0 %v5026
    %5949 = vmatprep.subr.bf16.mxu0 %v5020
    %5950 = vmatpush1.bf16.msra.mxu0 %v5019
    %5951 = vmatprep.subr.bf16.mxu0 %v5125
    %5952 = vmatpush2.bf16.msra.mxu0 %v5124
    %5953 = vmatprep.subr.bf16.mxu0 %v5118
    %5954 = vmatpush2.bf16.msra.mxu0 %v5117
    %5955 = vmatprep.subr.bf16.mxu0 %v5111
    %5956 = vmatpush2.bf16.msra.mxu0 %v5110
    %5957 = vmatprep.subr.bf16.mxu0 %v5104
    %5958 = vmatpush2.bf16.msra.mxu0 %v5103
    %5959 = vmatprep.subr.bf16.mxu0 %v5097
    %5960 = vmatpush2.bf16.msra.mxu0 %v5096
    %5961 = vmatprep.subr.bf16.mxu0 %v5090
    %5962 = vmatpush2.bf16.msra.mxu0 %v5089
    %5963 = vmatprep.subr.bf16.mxu0 %v5083
    %5964 = vmatpush2.bf16.msra.mxu0 %v5082
    %5965 = vmatprep.subr.bf16.mxu0 %v5076
    %5966 = vmatpush2.bf16.msra.mxu0 %v5075
    %5967 = vmatprep.mubr.bf16.mxu0 %v2833
    %5968 = vmatmul.mubr.bf16.gmra.mxu0 %v2832
    %v5969 = vpop.f32.mrf.mxu0
    %v5970 = vadd.f32 %v5929, %v5969
    %v5971 = vpop.f32.mrf.mxu0
    %v5972 = vadd.f32 %v5931, %v5971
    %v5973 = vpop.f32.mrf.mxu0
    %v5974 = vpop.f32.mrf.mxu0
    %5975 = vdwg.mxu0
    %5976 = vmatprep.subr.bf16.mxu0 %v5181
    %5977 = vmatpush1.bf16.msra.mxu0 %v5180
    %5978 = vmatprep.subr.bf16.mxu0 %v5174
    %5979 = vmatpush1.bf16.msra.mxu0 %v5173
    %5980 = vmatprep.subr.bf16.mxu0 %v5167
    %5981 = vmatpush1.bf16.msra.mxu0 %v5166
    %5982 = vmatprep.subr.bf16.mxu0 %v5160
    %5983 = vmatpush1.bf16.msra.mxu0 %v5159
    %5984 = vmatprep.subr.bf16.mxu0 %v5153
    %5985 = vmatpush1.bf16.msra.mxu0 %v5152
    %5986 = vmatprep.subr.bf16.mxu0 %v5146
    %5987 = vmatpush1.bf16.msra.mxu0 %v5145
    %5988 = vmatprep.subr.bf16.mxu0 %v5139
    %5989 = vmatpush1.bf16.msra.mxu0 %v5138
    %5990 = vmatprep.subr.bf16.mxu0 %v5132
    %5991 = vmatpush1.bf16.msra.mxu0 %v5131
    %5992 = vmatprep.subr.bf16.mxu0 %v5237
    %5993 = vmatpush2.bf16.msra.mxu0 %v5236
    %5994 = vmatprep.subr.bf16.mxu0 %v5230
    %5995 = vmatpush2.bf16.msra.mxu0 %v5229
    %5996 = vmatprep.subr.bf16.mxu0 %v5223
    %5997 = vmatpush2.bf16.msra.mxu0 %v5222
    %5998 = vmatprep.subr.bf16.mxu0 %v5216
    %5999 = vmatpush2.bf16.msra.mxu0 %v5215
    %6000 = vmatprep.subr.bf16.mxu0 %v5209
    %6001 = vmatpush2.bf16.msra.mxu0 %v5208
    %6002 = vmatprep.subr.bf16.mxu0 %v5202
    %6003 = vmatpush2.bf16.msra.mxu0 %v5201
    %6004 = vmatprep.subr.bf16.mxu0 %v5195
    %6005 = vmatpush2.bf16.msra.mxu0 %v5194
    %6006 = vmatprep.subr.bf16.mxu0 %v5188
    %6007 = vmatpush2.bf16.msra.mxu0 %v5187
    %6008 = vmatprep.mubr.bf16.mxu0 %v2835
    %6009 = vmatmul.mubr.bf16.gmra.mxu0 %v2834
    %v6010 = vpop.f32.mrf.mxu0
    %v6011 = vadd.f32 %v5970, %v6010
    %v6012 = vpop.f32.mrf.mxu0
    %v6013 = vadd.f32 %v5972, %v6012
    %v6014 = vpop.f32.mrf.mxu0
    %v6015 = vpop.f32.mrf.mxu0
    %6016 = vdwg.mxu0
    %6017 = vmatprep.subr.bf16.mxu0 %v4847
    %6018 = vmatpush1.bf16.msra.mxu0 %v4846
    %6019 = vmatprep.subr.bf16.mxu0 %v4840
    %6020 = vmatpush1.bf16.msra.mxu0 %v4839
    %6021 = vmatprep.subr.bf16.mxu0 %v4833
    %6022 = vmatpush1.bf16.msra.mxu0 %v4832
    %6023 = vmatprep.subr.bf16.mxu0 %v4826
    %6024 = vmatpush1.bf16.msra.mxu0 %v4825
    %6025 = vmatprep.subr.bf16.mxu0 %v4819
    %6026 = vmatpush1.bf16.msra.mxu0 %v4818
    %6027 = vmatprep.subr.bf16.mxu0 %v4812
    %6028 = vmatpush1.bf16.msra.mxu0 %v4811
    %6029 = vmatprep.subr.bf16.mxu0 %v4805
    %6030 = vmatpush1.bf16.msra.mxu0 %v4804
    %6031 = vmatprep.subr.bf16.mxu0 %v4798
    %6032 = vmatpush1.bf16.msra.mxu0 %v4797
    %6033 = vmatprep.subr.bf16.mxu0 %v4903
    %6034 = vmatpush2.bf16.msra.mxu0 %v4902
    %6035 = vmatprep.subr.bf16.mxu0 %v4896
    %6036 = vmatpush2.bf16.msra.mxu0 %v4895
    %6037 = vmatprep.subr.bf16.mxu0 %v4889
    %6038 = vmatpush2.bf16.msra.mxu0 %v4888
    %6039 = vmatprep.subr.bf16.mxu0 %v4882
    %6040 = vmatpush2.bf16.msra.mxu0 %v4881
    %6041 = vmatprep.subr.bf16.mxu0 %v4875
    %6042 = vmatpush2.bf16.msra.mxu0 %v4874
    %6043 = vmatprep.subr.bf16.mxu0 %v4868
    %6044 = vmatpush2.bf16.msra.mxu0 %v4867
    %6045 = vmatprep.subr.bf16.mxu0 %v4861
    %6046 = vmatpush2.bf16.msra.mxu0 %v4860
    %6047 = vmatprep.subr.bf16.mxu0 %v4854
    %6048 = vmatpush2.bf16.msra.mxu0 %v4853
    %6049 = vmatprep.mubr.bf16.mxu0 %v2829
    %6050 = vmatmul.mubr.bf16.gmra.mxu0 %v2828
    %v6051 = vpop.f32.mrf.mxu0
    %v6052 = vadd.f32 %v3369, %v6051
    %v6053 = vpop.f32.mrf.mxu0
    %v6054 = vadd.f32 %v3373, %v6053
    %v6055 = vpop.f32.mrf.mxu0
    %v6056 = vpop.f32.mrf.mxu0
    %6057 = vdwg.mxu0
    %6058 = vmatprep.subr.bf16.mxu0 %v4959
    %6059 = vmatpush1.bf16.msra.mxu0 %v4958
    %6060 = vmatprep.subr.bf16.mxu0 %v4952
    %6061 = vmatpush1.bf16.msra.mxu0 %v4951
    %6062 = vmatprep.subr.bf16.mxu0 %v4945
    %6063 = vmatpush1.bf16.msra.mxu0 %v4944
    %6064 = vmatprep.subr.bf16.mxu0 %v4938
    %6065 = vmatpush1.bf16.msra.mxu0 %v4937
    %6066 = vmatprep.subr.bf16.mxu0 %v4931
    %6067 = vmatpush1.bf16.msra.mxu0 %v4930
    %6068 = vmatprep.subr.bf16.mxu0 %v4924
    %6069 = vmatpush1.bf16.msra.mxu0 %v4923
    %6070 = vmatprep.subr.bf16.mxu0 %v4917
    %6071 = vmatpush1.bf16.msra.mxu0 %v4916
    %6072 = vmatprep.subr.bf16.mxu0 %v4910
    %6073 = vmatpush1.bf16.msra.mxu0 %v4909
    %6074 = vmatprep.subr.bf16.mxu0 %v5015
    %6075 = vmatpush2.bf16.msra.mxu0 %v5014
    %6076 = vmatprep.subr.bf16.mxu0 %v5008
    %6077 = vmatpush2.bf16.msra.mxu0 %v5007
    %6078 = vmatprep.subr.bf16.mxu0 %v5001
    %6079 = vmatpush2.bf16.msra.mxu0 %v5000
    %6080 = vmatprep.subr.bf16.mxu0 %v4994
    %6081 = vmatpush2.bf16.msra.mxu0 %v4993
    %6082 = vmatprep.subr.bf16.mxu0 %v4987
    %6083 = vmatpush2.bf16.msra.mxu0 %v4986
    %6084 = vmatprep.subr.bf16.mxu0 %v4980
    %6085 = vmatpush2.bf16.msra.mxu0 %v4979
    %6086 = vmatprep.subr.bf16.mxu0 %v4973
    %6087 = vmatpush2.bf16.msra.mxu0 %v4972
    %6088 = vmatprep.subr.bf16.mxu0 %v4966
    %6089 = vmatpush2.bf16.msra.mxu0 %v4965
    %6090 = vmatprep.mubr.bf16.mxu0 %v2831
    %6091 = vmatmul.mubr.bf16.gmra.mxu0 %v2830
    %v6092 = vpop.f32.mrf.mxu0
    %v6093 = vadd.f32 %v6052, %v6092
    %v6094 = vpop.f32.mrf.mxu0
    %v6095 = vadd.f32 %v6054, %v6094
    %v6096 = vpop.f32.mrf.mxu0
    %v6097 = vpop.f32.mrf.mxu0
    %6098 = vdwg.mxu0
    %6099 = vmatprep.subr.bf16.mxu0 %v5071
    %6100 = vmatpush1.bf16.msra.mxu0 %v5070
    %6101 = vmatprep.subr.bf16.mxu0 %v5064
    %6102 = vmatpush1.bf16.msra.mxu0 %v5063
    %6103 = vmatprep.subr.bf16.mxu0 %v5057
    %6104 = vmatpush1.bf16.msra.mxu0 %v5056
    %6105 = vmatprep.subr.bf16.mxu0 %v5050
    %6106 = vmatpush1.bf16.msra.mxu0 %v5049
    %6107 = vmatprep.subr.bf16.mxu0 %v5043
    %6108 = vmatpush1.bf16.msra.mxu0 %v5042
    %6109 = vmatprep.subr.bf16.mxu0 %v5036
    %6110 = vmatpush1.bf16.msra.mxu0 %v5035
    %6111 = vmatprep.subr.bf16.mxu0 %v5029
    %6112 = vmatpush1.bf16.msra.mxu0 %v5028
    %6113 = vmatprep.subr.bf16.mxu0 %v5022
    %6114 = vmatpush1.bf16.msra.mxu0 %v5021
    %6115 = vmatprep.subr.bf16.mxu0 %v5127
    %6116 = vmatpush2.bf16.msra.mxu0 %v5126
    %6117 = vmatprep.subr.bf16.mxu0 %v5120
    %6118 = vmatpush2.bf16.msra.mxu0 %v5119
    %6119 = vmatprep.subr.bf16.mxu0 %v5113
    %6120 = vmatpush2.bf16.msra.mxu0 %v5112
    %6121 = vmatprep.subr.bf16.mxu0 %v5106
    %6122 = vmatpush2.bf16.msra.mxu0 %v5105
    %6123 = vmatprep.subr.bf16.mxu0 %v5099
    %6124 = vmatpush2.bf16.msra.mxu0 %v5098
    %6125 = vmatprep.subr.bf16.mxu0 %v5092
    %6126 = vmatpush2.bf16.msra.mxu0 %v5091
    %6127 = vmatprep.subr.bf16.mxu0 %v5085
    %6128 = vmatpush2.bf16.msra.mxu0 %v5084
    %6129 = vmatprep.subr.bf16.mxu0 %v5078
    %6130 = vmatpush2.bf16.msra.mxu0 %v5077
    %6131 = vmatprep.mubr.bf16.mxu0 %v2833
    %6132 = vmatmul.mubr.bf16.gmra.mxu0 %v2832
    %v6133 = vpop.f32.mrf.mxu0
    %v6134 = vadd.f32 %v6093, %v6133
    %v6135 = vpop.f32.mrf.mxu0
    %v6136 = vadd.f32 %v6095, %v6135
    %v6137 = vpop.f32.mrf.mxu0
    %v6138 = vpop.f32.mrf.mxu0
    %6139 = vdwg.mxu0
    %6140 = vmatprep.subr.bf16.mxu0 %v5183
    %6141 = vmatpush1.bf16.msra.mxu0 %v5182
    %6142 = vmatprep.subr.bf16.mxu0 %v5176
    %6143 = vmatpush1.bf16.msra.mxu0 %v5175
    %6144 = vmatprep.subr.bf16.mxu0 %v5169
    %6145 = vmatpush1.bf16.msra.mxu0 %v5168
    %6146 = vmatprep.subr.bf16.mxu0 %v5162
    %6147 = vmatpush1.bf16.msra.mxu0 %v5161
    %6148 = vmatprep.subr.bf16.mxu0 %v5155
    %6149 = vmatpush1.bf16.msra.mxu0 %v5154
    %6150 = vmatprep.subr.bf16.mxu0 %v5148
    %6151 = vmatpush1.bf16.msra.mxu0 %v5147
    %6152 = vmatprep.subr.bf16.mxu0 %v5141
    %6153 = vmatpush1.bf16.msra.mxu0 %v5140
    %6154 = vmatprep.subr.bf16.mxu0 %v5134
    %6155 = vmatpush1.bf16.msra.mxu0 %v5133
    %6156 = vmatprep.subr.bf16.mxu0 %v5239
    %6157 = vmatpush2.bf16.msra.mxu0 %v5238
    %6158 = vmatprep.subr.bf16.mxu0 %v5232
    %6159 = vmatpush2.bf16.msra.mxu0 %v5231
    %6160 = vmatprep.subr.bf16.mxu0 %v5225
    %6161 = vmatpush2.bf16.msra.mxu0 %v5224
    %6162 = vmatprep.subr.bf16.mxu0 %v5218
    %6163 = vmatpush2.bf16.msra.mxu0 %v5217
    %6164 = vmatprep.subr.bf16.mxu0 %v5211
    %6165 = vmatpush2.bf16.msra.mxu0 %v5210
    %6166 = vmatprep.subr.bf16.mxu0 %v5204
    %6167 = vmatpush2.bf16.msra.mxu0 %v5203
    %6168 = vmatprep.subr.bf16.mxu0 %v5197
    %6169 = vmatpush2.bf16.msra.mxu0 %v5196
    %6170 = vmatprep.subr.bf16.mxu0 %v5190
    %6171 = vmatpush2.bf16.msra.mxu0 %v5189
    %6172 = vmatprep.mubr.bf16.mxu0 %v2835
    %6173 = vmatmul.mubr.bf16.gmra.mxu0 %v2834
    %v6174 = vpop.f32.mrf.mxu0
    %v6175 = vadd.f32 %v6134, %v6174
    %v6176 = vpop.f32.mrf.mxu0
    %v6177 = vadd.f32 %v6136, %v6176
    %v6178 = vpop.f32.mrf.mxu0
    %v6179 = vpop.f32.mrf.mxu0
    %6180 = vdwg.mxu0
    %6181 = vmatprep.subr.bf16.mxu0 0
    %6182 = vmatpush1.bf16.msra.mxu0 %v4848
    %6183 = vmatprep.subr.bf16.mxu0 0
    %6184 = vmatpush1.bf16.msra.mxu0 %v4841
    %6185 = vmatprep.subr.bf16.mxu0 0
    %6186 = vmatpush1.bf16.msra.mxu0 %v4834
    %6187 = vmatprep.subr.bf16.mxu0 0
    %6188 = vmatpush1.bf16.msra.mxu0 %v4827
    %6189 = vmatprep.subr.bf16.mxu0 0
    %6190 = vmatpush1.bf16.msra.mxu0 %v4820
    %6191 = vmatprep.subr.bf16.mxu0 0
    %6192 = vmatpush1.bf16.msra.mxu0 %v4813
    %6193 = vmatprep.subr.bf16.mxu0 0
    %6194 = vmatpush1.bf16.msra.mxu0 %v4806
    %6195 = vmatprep.subr.bf16.mxu0 0
    %6196 = vmatpush1.bf16.msra.mxu0 %v4799
    %6197 = vmatprep.subr.bf16.mxu0 0
    %6198 = vmatpush2.bf16.msra.mxu0 %v4904
    %6199 = vmatprep.subr.bf16.mxu0 0
    %6200 = vmatpush2.bf16.msra.mxu0 %v4897
    %6201 = vmatprep.subr.bf16.mxu0 0
    %6202 = vmatpush2.bf16.msra.mxu0 %v4890
    %6203 = vmatprep.subr.bf16.mxu0 0
    %6204 = vmatpush2.bf16.msra.mxu0 %v4883
    %6205 = vmatprep.subr.bf16.mxu0 0
    %6206 = vmatpush2.bf16.msra.mxu0 %v4876
    %6207 = vmatprep.subr.bf16.mxu0 0
    %6208 = vmatpush2.bf16.msra.mxu0 %v4869
    %6209 = vmatprep.subr.bf16.mxu0 0
    %6210 = vmatpush2.bf16.msra.mxu0 %v4862
    %6211 = vmatprep.subr.bf16.mxu0 0
    %6212 = vmatpush2.bf16.msra.mxu0 %v4855
    %6213 = vmatprep.mubr.bf16.mxu0 %v2829
    %6214 = vmatmul.mubr.bf16.gmra.mxu0 %v2828
    %v6215 = vpop.f32.mrf.mxu0
    %v6216 = vadd.f32 %v3377, %v6215
    %v6217 = vpop.f32.mrf.mxu0
    %v6218 = vpop.f32.mrf.mxu0
    %v6219 = vpop.f32.mrf.mxu0
    %6220 = vdwg.mxu0
    %6221 = vmatprep.subr.bf16.mxu0 0
    %6222 = vmatpush1.bf16.msra.mxu0 %v4960
    %6223 = vmatprep.subr.bf16.mxu0 0
    %6224 = vmatpush1.bf16.msra.mxu0 %v4953
    %6225 = vmatprep.subr.bf16.mxu0 0
    %6226 = vmatpush1.bf16.msra.mxu0 %v4946
    %6227 = vmatprep.subr.bf16.mxu0 0
    %6228 = vmatpush1.bf16.msra.mxu0 %v4939
    %6229 = vmatprep.subr.bf16.mxu0 0
    %6230 = vmatpush1.bf16.msra.mxu0 %v4932
    %6231 = vmatprep.subr.bf16.mxu0 0
    %6232 = vmatpush1.bf16.msra.mxu0 %v4925
    %6233 = vmatprep.subr.bf16.mxu0 0
    %6234 = vmatpush1.bf16.msra.mxu0 %v4918
    %6235 = vmatprep.subr.bf16.mxu0 0
    %6236 = vmatpush1.bf16.msra.mxu0 %v4911
    %6237 = vmatprep.subr.bf16.mxu0 0
    %6238 = vmatpush2.bf16.msra.mxu0 %v5016
    %6239 = vmatprep.subr.bf16.mxu0 0
    %6240 = vmatpush2.bf16.msra.mxu0 %v5009
    %6241 = vmatprep.subr.bf16.mxu0 0
    %6242 = vmatpush2.bf16.msra.mxu0 %v5002
    %6243 = vmatprep.subr.bf16.mxu0 0
    %6244 = vmatpush2.bf16.msra.mxu0 %v4995
    %6245 = vmatprep.subr.bf16.mxu0 0
    %6246 = vmatpush2.bf16.msra.mxu0 %v4988
    %6247 = vmatprep.subr.bf16.mxu0 0
    %6248 = vmatpush2.bf16.msra.mxu0 %v4981
    %6249 = vmatprep.subr.bf16.mxu0 0
    %6250 = vmatpush2.bf16.msra.mxu0 %v4974
    %6251 = vmatprep.subr.bf16.mxu0 0
    %6252 = vmatpush2.bf16.msra.mxu0 %v4967
    %6253 = vmatprep.mubr.bf16.mxu0 %v2831
    %6254 = vmatmul.mubr.bf16.gmra.mxu0 %v2830
    %v6255 = vpop.f32.mrf.mxu0
    %v6256 = vadd.f32 %v6216, %v6255
    %v6257 = vpop.f32.mrf.mxu0
    %v6258 = vpop.f32.mrf.mxu0
    %v6259 = vpop.f32.mrf.mxu0
    %6260 = vdwg.mxu0
    %6261 = vmatprep.subr.bf16.mxu0 0
    %6262 = vmatpush1.bf16.msra.mxu0 %v5072
    %6263 = vmatprep.subr.bf16.mxu0 0
    %6264 = vmatpush1.bf16.msra.mxu0 %v5065
    %6265 = vmatprep.subr.bf16.mxu0 0
    %6266 = vmatpush1.bf16.msra.mxu0 %v5058
    %6267 = vmatprep.subr.bf16.mxu0 0
    %6268 = vmatpush1.bf16.msra.mxu0 %v5051
    %6269 = vmatprep.subr.bf16.mxu0 0
    %6270 = vmatpush1.bf16.msra.mxu0 %v5044
    %6271 = vmatprep.subr.bf16.mxu0 0
    %6272 = vmatpush1.bf16.msra.mxu0 %v5037
    %6273 = vmatprep.subr.bf16.mxu0 0
    %6274 = vmatpush1.bf16.msra.mxu0 %v5030
    %6275 = vmatprep.subr.bf16.mxu0 0
    %6276 = vmatpush1.bf16.msra.mxu0 %v5023
    %6277 = vmatprep.subr.bf16.mxu0 0
    %6278 = vmatpush2.bf16.msra.mxu0 %v5128
    %6279 = vmatprep.subr.bf16.mxu0 0
    %6280 = vmatpush2.bf16.msra.mxu0 %v5121
    %6281 = vmatprep.subr.bf16.mxu0 0
    %6282 = vmatpush2.bf16.msra.mxu0 %v5114
    %6283 = vmatprep.subr.bf16.mxu0 0
    %6284 = vmatpush2.bf16.msra.mxu0 %v5107
    %6285 = vmatprep.subr.bf16.mxu0 0
    %6286 = vmatpush2.bf16.msra.mxu0 %v5100
    %6287 = vmatprep.subr.bf16.mxu0 0
    %6288 = vmatpush2.bf16.msra.mxu0 %v5093
    %6289 = vmatprep.subr.bf16.mxu0 0
    %6290 = vmatpush2.bf16.msra.mxu0 %v5086
    %6291 = vmatprep.subr.bf16.mxu0 0
    %6292 = vmatpush2.bf16.msra.mxu0 %v5079
    %6293 = vmatprep.mubr.bf16.mxu0 %v2833
    %6294 = vmatmul.mubr.bf16.gmra.mxu0 %v2832
    %v6295 = vpop.f32.mrf.mxu0
    %v6296 = vadd.f32 %v6256, %v6295
    %v6297 = vpop.f32.mrf.mxu0
    %v6298 = vpop.f32.mrf.mxu0
    %v6299 = vpop.f32.mrf.mxu0
    %6300 = vdwg.mxu0
    %6301 = vmatprep.subr.bf16.mxu0 0
    %6302 = vmatpush1.bf16.msra.mxu0 %v5184
    %6303 = vmatprep.subr.bf16.mxu0 0
    %6304 = vmatpush1.bf16.msra.mxu0 %v5177
    %6305 = vmatprep.subr.bf16.mxu0 0
    %6306 = vmatpush1.bf16.msra.mxu0 %v5170
    %6307 = vmatprep.subr.bf16.mxu0 0
    %6308 = vmatpush1.bf16.msra.mxu0 %v5163
    %6309 = vmatprep.subr.bf16.mxu0 0
    %6310 = vmatpush1.bf16.msra.mxu0 %v5156
    %6311 = vmatprep.subr.bf16.mxu0 0
    %6312 = vmatpush1.bf16.msra.mxu0 %v5149
    %6313 = vmatprep.subr.bf16.mxu0 0
    %6314 = vmatpush1.bf16.msra.mxu0 %v5142
    %6315 = vmatprep.subr.bf16.mxu0 0
    %6316 = vmatpush1.bf16.msra.mxu0 %v5135
    %6317 = vmatprep.subr.bf16.mxu0 0
    %6318 = vmatpush2.bf16.msra.mxu0 %v5240
    %6319 = vmatprep.subr.bf16.mxu0 0
    %6320 = vmatpush2.bf16.msra.mxu0 %v5233
    %6321 = vmatprep.subr.bf16.mxu0 0
    %6322 = vmatpush2.bf16.msra.mxu0 %v5226
    %6323 = vmatprep.subr.bf16.mxu0 0
    %6324 = vmatpush2.bf16.msra.mxu0 %v5219
    %6325 = vmatprep.subr.bf16.mxu0 0
    %6326 = vmatpush2.bf16.msra.mxu0 %v5212
    %6327 = vmatprep.subr.bf16.mxu0 0
    %6328 = vmatpush2.bf16.msra.mxu0 %v5205
    %6329 = vmatprep.subr.bf16.mxu0 0
    %6330 = vmatpush2.bf16.msra.mxu0 %v5198
    %6331 = vmatprep.subr.bf16.mxu0 0
    %6332 = vmatpush2.bf16.msra.mxu0 %v5191
    %6333 = vmatprep.mubr.bf16.mxu0 %v2835
    %6334 = vmatmul.mubr.bf16.gmra.mxu0 %v2834
    %v6335 = vpop.f32.mrf.mxu0
    %v6336 = vadd.f32 %v6296, %v6335
    %v6337 = vpop.f32.mrf.mxu0
    %v6338 = vpop.f32.mrf.mxu0
    %v6339 = vpop.f32.mrf.mxu0
    %6340 = vdwg.mxu0
    %v6341 = vtanh.pop %v5847
    %v6342 = vtanh.pop %v5849
    %v6343 = vtanh.pop %v6011
    %v6344 = vtanh.pop %v6013
    %v6345 = vtanh.pop %v6175
    %v6346 = vtanh.pop %v6177
    %v6347 = vtanh.pop %v6336
    %v6348 = vpack.c.bf16 %v6341, %v6341
    %v6349 = vpack.c.bf16 %v6342, %v6342
    %v6350 = vpack.c.bf16 %v6343, %v6343
    %v6351 = vpack.c.bf16 %v6344, %v6344
    %v6352 = vpack.c.bf16 %v6345, %v6345
    %v6353 = vpack.c.bf16 %v6346, %v6346
    %v6354 = vpack.c.bf16 %v6347, %v6347
    %v6362 = vunpack.c.l.b16 %v6348
    %v6363 = vunpack.c.l.b16 %v6349
    %v6364 = vunpack.c.l.b16 %v6350
    %v6365 = vunpack.c.l.b16 %v6351
    %v6366 = vunpack.c.l.b16 %v6352
    %v6367 = vunpack.c.l.b16 %v6353
    %v6368 = vunpack.c.l.b16 %v6354
    %v6369 = vpack.c.b16 %v6363, %v6362
    %v6370 = vpack.c.b16 %v6365, %v6364
    %v6371 = vpack.c.b16 %v6367, %v6366
    %v6372 = vpack.c.b16 %v6368, %v6368
    %6377 = vst [vmem:[%s11] sm:$0xff] %v6369
    %6378 = vst [vmem:[%s11 + $0x8] sm:$0xff] %v6370
    %6379 = vst [vmem:[%s11 + $0x10] sm:$0xff] %v6371
    %6380 = vst [vmem:[%s11 + $0x18] sm:$0xf] %v6372
    // Predicated region
    $region86: #{generator_mlp_forward.1} parent=1 // pred_check
      _
    $region87: #{generator_mlp_forward.1} parent=1 // pred_check_branch
      %6382 = sbr.rel (0) target = $region89
    $region88: #{generator_mlp_forward.1} parent=1 // pred_region
      _
    $region89: #{generator_mlp_forward.1} parent=1 // pred_fallthru
      _
    // Predicated region
    $region90: #{generator_mlp_forward.1} parent=1 // pred_check
      _
    $region91: #{generator_mlp_forward.1} parent=1 // pred_check_branch
      %6384 = sbr.rel (0) target = $region93
    $region92: #{generator_mlp_forward.1} parent=1 // pred_region
      _
    $region93: #{generator_mlp_forward.1} parent=1 // pred_fallthru
      _
    %6385 = vsyncpa [#allocation3], 1
    %6386 = vsyncpa [#allocation5], 1
    %6387 = vsyncpa [#allocation8], 1
    %6388 = vsyncpa [#allocation11], 1
    %6389 = vsyncpa [#allocation14], 1
    %6390 = vsyncpa [#allocation17], 1

</llo_original>
